<compile_context>
chip_gen: v7x
topology: tpu7x:2x2x1
jax: 0.10.0
libtpu: 0.0.40
codegen_flags: <defaults>
</compile_context>

<pallas_src>
import functools

import jax
import jax.numpy as jnp
from jax.experimental import pallas as pl
from jax.experimental.pallas import tpu as pltpu


# -----------------------------------------------------------------------------
# Shared GRU cell (PyTorch GRUCell semantics, gate order r | z | n).
# gx_* already contain the input projection plus the input-side biases (and the
# hidden-side biases for r/z, which commute with the sigmoid argument sum).
# -----------------------------------------------------------------------------
def _gru_cell(gx_r, gx_z, gx_n, h, whr, whz, whn, bhn):
    gh_r = jnp.dot(h, whr, preferred_element_type=jnp.float32)
    gh_z = jnp.dot(h, whz, preferred_element_type=jnp.float32)
    gh_n = jnp.dot(h, whn, preferred_element_type=jnp.float32) + bhn
    r = jax.nn.sigmoid(gx_r + gh_r)
    z = jax.nn.sigmoid(gx_z + gh_z)
    n = jnp.tanh(gx_n + r * gh_n)
    return (1.0 - z) * n + z * h


# -----------------------------------------------------------------------------
# Kernel 1: bidirectional GRU encoder + mean-pool + prior GaussLayer + h_e_p,
# all fused in a single invocation (no grid).  Only the pooled statistics and
# the backward final hidden (s_0[1]) leave VMEM.
# -----------------------------------------------------------------------------
def enc_prior_kernel(
        x_ref,
        # forward-direction encoder GRU (per-gate, pre-transposed)
        f_wir, f_wiz, f_win, f_whr, f_whz, f_whn, f_br, f_bz, f_bin, f_bhn,
        # backward-direction encoder GRU
        b_wir, b_wiz, b_win, b_whr, b_whz, b_whn, b_br, b_bz, b_bin, b_bhn,
        # prior GaussLayer (first layer split into fwd/bwd halves -> no concat)
        w1f, w1b, b1, wmu, bmu, wsig, bsig,
        # h_e_p
        whep, bhep,
        # outputs
        zmean_ref, zsig_ref, sem_ref, dech0_ref,
        # scratch: per-gate input projections for all time steps, both directions
        gfr, gfz, gfn, gbr, gbz, gbn,
        *, B, S, H):
    x = x_ref[...]                                    # (S*B, D), time-major rows

    # Batched input projection for ALL time steps: one matmul per gate/direction,
    # with the input-side biases folded in.  Results stay resident in VMEM.
    gfr[...] = jnp.dot(x, f_wir[...], preferred_element_type=jnp.float32) + f_br[...]
    gfz[...] = jnp.dot(x, f_wiz[...], preferred_element_type=jnp.float32) + f_bz[...]
    gfn[...] = jnp.dot(x, f_win[...], preferred_element_type=jnp.float32) + f_bin[...]
    gbr[...] = jnp.dot(x, b_wir[...], preferred_element_type=jnp.float32) + b_br[...]
    gbz[...] = jnp.dot(x, b_wiz[...], preferred_element_type=jnp.float32) + b_bz[...]
    gbn[...] = jnp.dot(x, b_win[...], preferred_element_type=jnp.float32) + b_bin[...]

    # Hoist the recurrent weights into vregs once (loop-invariant).
    fwhr = f_whr[...]; fwhz = f_whz[...]; fwhn = f_whn[...]; fbhn = f_bhn[...]
    bwhr = b_whr[...]; bwhz = b_whz[...]; bwhn = b_whn[...]; bbhn = b_bhn[...]

    zeros = jnp.zeros((B, H), jnp.float32)

    def step(t, carry):
        hf, hb, acc_f, acc_b = carry
        rf = pl.multiple_of(t * B, B)                 # fwd reads time t
        rb = pl.multiple_of((S - 1 - t) * B, B)       # bwd reads time S-1-t (no reversed copy)
        hf = _gru_cell(gfr[pl.ds(rf, B), :], gfz[pl.ds(rf, B), :], gfn[pl.ds(rf, B), :],
                       hf, fwhr, fwhz, fwhn, fbhn)
        hb = _gru_cell(gbr[pl.ds(rb, B), :], gbz[pl.ds(rb, B), :], gbn[pl.ds(rb, B), :],
                       hb, bwhr, bwhz, bwhn, bbhn)
        return hf, hb, acc_f + hf, acc_b + hb

    hf, hb, acc_f, acc_b = jax.lax.fori_loop(0, S, step, (zeros, zeros, zeros, zeros))

    # mean-pool over time (full-length sequences): sum(X, dim=1) / len
    inv_s = 1.0 / S
    pool_f = acc_f * inv_s
    pool_b = acc_b * inv_s

    # prior GaussLayer: tanh hidden, linear mu, softplus sigma (structure assumed).
    hg = jnp.tanh(jnp.dot(pool_f, w1f[...], preferred_element_type=jnp.float32)
                  + jnp.dot(pool_b, w1b[...], preferred_element_type=jnp.float32)
                  + b1[...])
    mu = jnp.dot(hg, wmu[...], preferred_element_type=jnp.float32) + bmu[...]
    sig = jax.nn.softplus(jnp.dot(hg, wsig[...], preferred_element_type=jnp.float32) + bsig[...])

    # semantics = relu(h_e_p(z)) with z := mu (deterministic mean of the sample).
    sem = jax.nn.relu(jnp.dot(mu, whep[...], preferred_element_type=jnp.float32) + bhep[...])

    zmean_ref[...] = mu
    zsig_ref[...] = sig
    sem_ref[...] = sem
    dech0_ref[...] = hb                               # s_0[1]: backward final hidden


def encoder_prior(x2d, params, *, B, S, H, Z, C):
    ef = params["enc_fwd"]
    eb = params["enc_bwd"]
    kernel = functools.partial(enc_prior_kernel, B=B, S=S, H=H)
    return pl.pallas_call(
        kernel,
        out_shape=(jax.ShapeDtypeStruct((B, Z), jnp.float32),
                   jax.ShapeDtypeStruct((B, Z), jnp.float32),
                   jax.ShapeDtypeStruct((B, C), jnp.float32),
                   jax.ShapeDtypeStruct((B, H), jnp.float32)),
        scratch_shapes=[pltpu.VMEM((S * B, H), jnp.float32) for _ in range(6)],
    )(x2d,
      ef["wir"], ef["wiz"], ef["win"], ef["whr"], ef["whz"], ef["whn"],
      ef["br"], ef["bz"], ef["bin"], ef["bhn"],
      eb["wir"], eb["wiz"], eb["win"], eb["whr"], eb["whz"], eb["whn"],
      eb["br"], eb["bz"], eb["bin"], eb["bhn"],
      params["prior_w1f"], params["prior_w1b"], params["prior_b1"],
      params["prior_wmu"], params["prior_bmu"],
      params["prior_wsig"], params["prior_bsig"],
      params["hep_w"], params["hep_b"])


# -----------------------------------------------------------------------------
# Kernel 2: teacher-forced GRU decoder + batched emitter + softmax, fused.
# The semantics (context) contribution to the input gates is time-invariant and
# computed once; the decoder states never round-trip through HBM.
# -----------------------------------------------------------------------------
def dec_emit_kernel(
        y_ref, sem_ref, h0_ref,
        # decoder GRU input-side weights, per-gate, split into (y | semantics) blocks
        wir_y, wiz_y, win_y, wir_c, wiz_c, win_c,
        whr, whz, whn, br, bz, bin_, bhn,
        # emitter
        wemit, bemit,
        # output
        probs_ref,
        # scratch
        gr, gz, gn, seq_scr, h_scr,
        *, B, T, H):
    ry = jax.nn.relu(y_ref[...])                      # relu(y_embed) as in model()
    sem = sem_ref[...]                                # (B, C)

    # Per-gate input projections for all T steps (one matmul each).
    gr[...] = jnp.dot(ry, wir_y[...], preferred_element_type=jnp.float32)
    gz[...] = jnp.dot(ry, wiz_y[...], preferred_element_type=jnp.float32)
    gn[...] = jnp.dot(ry, win_y[...], preferred_element_type=jnp.float32)

    # Time-invariant semantics contribution + input-side biases, hoisted out of
    # the recurrence (replaces the (T,B,C) broadcast + concat of the old code).
    cr = jnp.dot(sem, wir_c[...], preferred_element_type=jnp.float32) + br[...]
    cz = jnp.dot(sem, wiz_c[...], preferred_element_type=jnp.float32) + bz[...]
    cn = jnp.dot(sem, win_c[...], preferred_element_type=jnp.float32) + bin_[...]

    whr_v = whr[...]; whz_v = whz[...]; whn_v = whn[...]; bhn_v = bhn[...]

    h_scr[...] = h0_ref[...]                          # s_t init = s_0[1]

    @pl.loop(0, T)
    def _(t):
        r0 = pl.multiple_of(t * B, B)
        h = _gru_cell(gr[pl.ds(r0, B), :] + cr,
                      gz[pl.ds(r0, B), :] + cz,
                      gn[pl.ds(r0, B), :] + cn,
                      h_scr[...], whr_v, whz_v, whn_v, bhn_v)
        h_scr[...] = h
        seq_scr[pl.ds(r0, B), :] = h

    # Batched emitter over all T*B decoder states (single matmul) + row softmax.
    logits = jnp.dot(seq_scr[...], wemit[...], preferred_element_type=jnp.float32) + bemit[...]
    m = jnp.max(logits, axis=-1, keepdims=True)
    e = jnp.exp(logits - m)
    probs_ref[...] = e / jnp.sum(e, axis=-1, keepdims=True)


def decoder_emitter(y2d, sem, h0, params, *, B, T, H, V):
    dp = params["dec"]
    kernel = functools.partial(dec_emit_kernel, B=B, T=T, H=H)
    return pl.pallas_call(
        kernel,
        out_shape=jax.ShapeDtypeStruct((T * B, V), jnp.float32),
        scratch_shapes=[pltpu.VMEM((T * B, H), jnp.float32) for _ in range(4)]
                       + [pltpu.VMEM((B, H), jnp.float32)],
    )(y2d, sem, h0,
      dp["wir_y"], dp["wiz_y"], dp["win_y"], dp["wir_c"], dp["wiz_c"], dp["win_c"],
      dp["whr"], dp["whz"], dp["whn"], dp["br"], dp["bz"], dp["bin"], dp["bhn"],
      params["emit_wT"], params["emit_b"])


# -----------------------------------------------------------------------------
# Parameter construction (deterministic, synthetic — no checkpoint load).
# Weights are stored pre-transposed (in_features, out_features) and per-gate
# [r | z | n]; input/hidden biases are pre-combined for r/z.
# -----------------------------------------------------------------------------
def make_params(key, *, D, H, G, Z, C, Vx, Vy):
    keys = iter(jax.random.split(key, 64))

    def n(shape, s=0.1):
        return (s * jax.random.normal(next(keys), shape)).astype(jnp.float32)

    def gru_weights(in_dim, hid):
        return dict(
            wir=n((in_dim, hid)), wiz=n((in_dim, hid)), win=n((in_dim, hid)),
            whr=n((hid, hid)), whz=n((hid, hid)), whn=n((hid, hid)),
            br=n((1, hid)), bz=n((1, hid)), bin=n((1, hid)), bhn=n((1, hid)),
        )

    def dec_gru_weights(d_dim, c_dim, hid):
        p = gru_weights(d_dim, hid)
        return dict(
            wir_y=p["wir"], wiz_y=p["wiz"], win_y=p["win"],
            wir_c=n((c_dim, hid)), wiz_c=n((c_dim, hid)), win_c=n((c_dim, hid)),
            whr=p["whr"], whz=p["whz"], whn=p["whn"],
            br=p["br"], bz=p["bz"], bin=p["bin"], bhn=p["bhn"],
        )

    return dict(
        x_embed=n((Vx, D), 0.5),
        y_embed=n((Vy, D), 0.5),
        enc_fwd=gru_weights(D, H),            # bidirectional encoder: fwd + bwd cells
        enc_bwd=gru_weights(D, H),
        dec=dec_gru_weights(D, C, H),         # decoder input = [relu(y_emb) | semantics]
        prior_w1f=n((H, G)), prior_w1b=n((H, G)), prior_b1=n((1, G)),
        prior_wmu=n((G, Z)), prior_bmu=n((1, Z)),
        prior_wsig=n((G, Z)), prior_bsig=n((1, Z)),
        hep_w=n((Z, C)), hep_b=n((1, C)),
        emit_wT=n((H, Vy)), emit_b=n((1, Vy)),
        # bridge / posterior exist in __init__ but are unused on the model() path.
    )


# -----------------------------------------------------------------------------
# Full VNMT.model() forward pass (deterministic, full-length sequences).
# -----------------------------------------------------------------------------
@jax.jit
def vnmt_model_forward(params, x_ids, y_ids):
    B, S = x_ids.shape
    _, T = y_ids.shape
    H = params["enc_fwd"]["whr"].shape[0]
    Z = params["prior_wmu"].shape[1]
    C = params["hep_w"].shape[1]
    V = params["emit_wT"].shape[1]

    # Pad batch to a sublane multiple so all per-step row slices inside the
    # kernels are 8-aligned (free at these sizes: padded rows share the vreg).
    Bp = max(8, ((B + 7) // 8) * 8)
    x_ids_p = jnp.pad(x_ids, ((0, Bp - B), (0, 0)))
    y_ids_p = jnp.pad(y_ids, ((0, Bp - B), (0, 0)))

    # Time-major flattened embeddings directly from the gather (no transpose pass).
    x2d = jnp.take(params["x_embed"], x_ids_p.T.reshape(S * Bp), axis=0)   # (S*Bp, D)
    y2d = jnp.take(params["y_embed"], y_ids_p.T.reshape(T * Bp), axis=0)   # (T*Bp, D)

    # Encoder + pooling + prior + h_e_p (one fused Pallas kernel).
    z_mean, z_sig, semantics, dec_h0 = encoder_prior(
        x2d, params, B=Bp, S=S, H=H, Z=Z, C=C)

    # Decoder + emitter + softmax (one fused Pallas kernel).
    probs2d = decoder_emitter(y2d, semantics, dec_h0, params, B=Bp, T=T, H=H, V=V)

    probs = probs2d.reshape(T, Bp, V)[:, :B, :]       # (T, B, Vy)
    return probs, z_mean[:B], z_sig[:B]


# -----------------------------------------------------------------------------
# Pure-JAX reference (same math, same assumed GaussLayer), for a sanity check.
# -----------------------------------------------------------------------------
def _reference_forward(params, x_ids, y_ids):
    B, S = x_ids.shape
    _, T = y_ids.shape
    H = params["enc_fwd"]["whr"].shape[0]

    def gru_step(p, gx_r, gx_z, gx_n, h):
        r = jax.nn.sigmoid(gx_r + h @ p["whr"])
        z = jax.nn.sigmoid(gx_z + h @ p["whz"])
        n = jnp.tanh(gx_n + r * (h @ p["whn"] + p["bhn"]))
        return (1.0 - z) * n + z * h

    def run_gru(p, xs, h):                            # xs: (T, B, D)
        hs = []
        for t in range(xs.shape[0]):
            x_t = xs[t]
            h = gru_step(p,
                         x_t @ p["wir"] + p["br"],
                         x_t @ p["wiz"] + p["bz"],
                         x_t @ p["win"] + p["bin"], h)
            hs.append(h)
        return jnp.stack(hs), h

    x_emb = jnp.take(params["x_embed"], x_ids, axis=0)            # (B, S, D)
    xs = jnp.transpose(x_emb, (1, 0, 2))
    h0 = jnp.zeros((B, H), jnp.float32)
    fwd_seq, _ = run_gru(params["enc_fwd"], xs, h0)
    bwd_seq_rev, hb_T = run_gru(params["enc_bwd"], xs[::-1], h0)
    pool_f = jnp.sum(fwd_seq, axis=0) / S
    pool_b = jnp.sum(bwd_seq_rev, axis=0) / S
    hg = jnp.tanh(pool_f @ params["prior_w1f"] + pool_b @ params["prior_w1b"]
                  + params["prior_b1"])
    mu = hg @ params["prior_wmu"] + params["prior_bmu"]
    sig = jax.nn.softplus(hg @ params["prior_wsig"] + params["prior_bsig"])
    sem = jax.nn.relu(mu @ params["hep_w"] + params["hep_b"])

    dp = params["dec"]
    y_emb = jax.nn.relu(jnp.take(params["y_embed"], y_ids, axis=0))   # (B, T, D)
    ys = jnp.transpose(y_emb, (1, 0, 2))
    h = hb_T
    probs = []
    for t in range(T):
        y_t = ys[t]
        gx_r = y_t @ dp["wir_y"] + sem @ dp["wir_c"] + dp["br"]
        gx_z = y_t @ dp["wiz_y"] + sem @ dp["wiz_c"] + dp["bz"]
        gx_n = y_t @ dp["win_y"] + sem @ dp["win_c"] + dp["bin"]
        h = gru_step(dp, gx_r, gx_z, gx_n, h)
        logits = h @ params["emit_wT"] + params["emit_b"]
        probs.append(jax.nn.softmax(logits, axis=-1))
    return jnp.stack(probs), mu, sig


if __name__ == "__main__":
    # small, forward-consistent shapes
    B, S, T = 2, 8, 8
    D, H, G, Z, C = 32, 32, 32, 16, 32
    Vx, Vy = 20, 24

    key = jax.random.PRNGKey(0)
    kp, kx, ky = jax.random.split(key, 3)
    params = make_params(kp, D=D, H=H, G=G, Z=Z, C=C, Vx=Vx, Vy=Vy)
    x_ids = jax.random.randint(kx, (B, S), 0, Vx, dtype=jnp.int32)
    y_ids = jax.random.randint(ky, (B, T), 0, Vy, dtype=jnp.int32)

    probs, z_mean, z_sig = vnmt_model_forward(params, x_ids, y_ids)
    jax.block_until_ready((probs, z_mean, z_sig))

    assert probs.shape == (T, B, Vy)
    assert z_mean.shape == (B, Z) and z_sig.shape == (B, Z)
    assert bool(jnp.all(jnp.isfinite(probs)))

    # sanity check against a pure-JAX reference of the same math
    with jax.default_matmul_precision("highest"):
        ref_probs, ref_mu, ref_sig = _reference_forward(params, x_ids, y_ids)
    assert float(jnp.max(jnp.abs(probs - ref_probs))) < 5e-3
    assert float(jnp.max(jnp.abs(z_mean - ref_mu))) < 5e-3
    assert float(jnp.max(jnp.abs(z_sig - ref_sig))) < 5e-3

    print("KERNEL_OK")
</pallas_src>

<mosaic_0001>
module attributes {stable_mosaic.version = 11 : i64} {
  func.func @enc_prior_kernel(%arg0: memref<64x32xf32, #tpu.memory_space<vmem>>, %arg1: memref<32x32xf32, #tpu.memory_space<vmem>>, %arg2: memref<32x32xf32, #tpu.memory_space<vmem>>, %arg3: memref<32x32xf32, #tpu.memory_space<vmem>>, %arg4: memref<32x32xf32, #tpu.memory_space<vmem>>, %arg5: memref<32x32xf32, #tpu.memory_space<vmem>>, %arg6: memref<32x32xf32, #tpu.memory_space<vmem>>, %arg7: memref<1x32xf32, #tpu.memory_space<vmem>>, %arg8: memref<1x32xf32, #tpu.memory_space<vmem>>, %arg9: memref<1x32xf32, #tpu.memory_space<vmem>>, %arg10: memref<1x32xf32, #tpu.memory_space<vmem>>, %arg11: memref<32x32xf32, #tpu.memory_space<vmem>>, %arg12: memref<32x32xf32, #tpu.memory_space<vmem>>, %arg13: memref<32x32xf32, #tpu.memory_space<vmem>>, %arg14: memref<32x32xf32, #tpu.memory_space<vmem>>, %arg15: memref<32x32xf32, #tpu.memory_space<vmem>>, %arg16: memref<32x32xf32, #tpu.memory_space<vmem>>, %arg17: memref<1x32xf32, #tpu.memory_space<vmem>>, %arg18: memref<1x32xf32, #tpu.memory_space<vmem>>, %arg19: memref<1x32xf32, #tpu.memory_space<vmem>>, %arg20: memref<1x32xf32, #tpu.memory_space<vmem>>, %arg21: memref<32x32xf32, #tpu.memory_space<vmem>>, %arg22: memref<32x32xf32, #tpu.memory_space<vmem>>, %arg23: memref<1x32xf32, #tpu.memory_space<vmem>>, %arg24: memref<32x16xf32, #tpu.memory_space<vmem>>, %arg25: memref<1x16xf32, #tpu.memory_space<vmem>>, %arg26: memref<32x16xf32, #tpu.memory_space<vmem>>, %arg27: memref<1x16xf32, #tpu.memory_space<vmem>>, %arg28: memref<16x32xf32, #tpu.memory_space<vmem>>, %arg29: memref<1x32xf32, #tpu.memory_space<vmem>>, %arg30: memref<8x16xf32, #tpu.memory_space<vmem>>, %arg31: memref<8x16xf32, #tpu.memory_space<vmem>>, %arg32: memref<8x32xf32, #tpu.memory_space<vmem>>, %arg33: memref<8x32xf32, #tpu.memory_space<vmem>>, %arg34: memref<64x32xf32, #tpu.memory_space<vmem>>, %arg35: memref<64x32xf32, #tpu.memory_space<vmem>>, %arg36: memref<64x32xf32, #tpu.memory_space<vmem>>, %arg37: memref<64x32xf32, #tpu.memory_space<vmem>>, %arg38: memref<64x32xf32, #tpu.memory_space<vmem>>, %arg39: memref<64x32xf32, #tpu.memory_space<vmem>>) attributes {dimension_semantics = [], scalar_prefetch = 0 : i64, scratch_operands = 6 : i64, tpu.core_type = #tpu.core_type<tc>} {
    %c0 = arith.constant 0 : index
    %c0_0 = arith.constant 0 : index
    %0 = vector.load %arg0[%c0, %c0_0] : memref<64x32xf32, #tpu.memory_space<vmem>>, vector<64x32xf32>
    %c0_1 = arith.constant 0 : index
    %c0_2 = arith.constant 0 : index
    %1 = vector.load %arg1[%c0_1, %c0_2] : memref<32x32xf32, #tpu.memory_space<vmem>>, vector<32x32xf32>
    %cst = arith.constant dense<0.000000e+00> : vector<64x32xf32>
    %2 = tpu.matmul %0, %1, %cst {dimension_numbers = #tpu.dot_dimension_numbers<[1], [0], [0], [1], [0, 0, 1, 1], [], []>} : vector<64x32xf32>, vector<32x32xf32>, vector<64x32xf32> -> vector<64x32xf32>
    %c0_3 = arith.constant 0 : index
    %c0_4 = arith.constant 0 : index
    %3 = vector.load %arg7[%c0_3, %c0_4] : memref<1x32xf32, #tpu.memory_space<vmem>>, vector<1x32xf32>
    %4 = vector.broadcast %3 : vector<1x32xf32> to vector<64x32xf32>
    %5 = arith.addf %2, %4 : vector<64x32xf32>
    %c0_5 = arith.constant 0 : index
    %c0_6 = arith.constant 0 : index
    %6 = vector.load %arg34[%c0_5, %c0_6] : memref<64x32xf32, #tpu.memory_space<vmem>>, vector<64x32xf32>
    tpu.vector_store %arg34[%c0_5, %c0_6], %5 {strides = array<i32>} : memref<64x32xf32, #tpu.memory_space<vmem>>, vector<64x32xf32>,
    %c0_7 = arith.constant 0 : index
    %c0_8 = arith.constant 0 : index
    %7 = vector.load %arg2[%c0_7, %c0_8] : memref<32x32xf32, #tpu.memory_space<vmem>>, vector<32x32xf32>
    %cst_9 = arith.constant dense<0.000000e+00> : vector<64x32xf32>
    %8 = tpu.matmul %0, %7, %cst_9 {dimension_numbers = #tpu.dot_dimension_numbers<[1], [0], [0], [1], [0, 0, 1, 1], [], []>} : vector<64x32xf32>, vector<32x32xf32>, vector<64x32xf32> -> vector<64x32xf32>
    %c0_10 = arith.constant 0 : index
    %c0_11 = arith.constant 0 : index
    %9 = vector.load %arg8[%c0_10, %c0_11] : memref<1x32xf32, #tpu.memory_space<vmem>>, vector<1x32xf32>
    %10 = vector.broadcast %9 : vector<1x32xf32> to vector<64x32xf32>
    %11 = arith.addf %8, %10 : vector<64x32xf32>
    %c0_12 = arith.constant 0 : index
    %c0_13 = arith.constant 0 : index
    %12 = vector.load %arg35[%c0_12, %c0_13] : memref<64x32xf32, #tpu.memory_space<vmem>>, vector<64x32xf32>
    tpu.vector_store %arg35[%c0_12, %c0_13], %11 {strides = array<i32>} : memref<64x32xf32, #tpu.memory_space<vmem>>, vector<64x32xf32>,
    %c0_14 = arith.constant 0 : index
    %c0_15 = arith.constant 0 : index
    %13 = vector.load %arg3[%c0_14, %c0_15] : memref<32x32xf32, #tpu.memory_space<vmem>>, vector<32x32xf32>
    %cst_16 = arith.constant dense<0.000000e+00> : vector<64x32xf32>
    %14 = tpu.matmul %0, %13, %cst_16 {dimension_numbers = #tpu.dot_dimension_numbers<[1], [0], [0], [1], [0, 0, 1, 1], [], []>} : vector<64x32xf32>, vector<32x32xf32>, vector<64x32xf32> -> vector<64x32xf32>
    %c0_17 = arith.constant 0 : index
    %c0_18 = arith.constant 0 : index
    %15 = vector.load %arg9[%c0_17, %c0_18] : memref<1x32xf32, #tpu.memory_space<vmem>>, vector<1x32xf32>
    %16 = vector.broadcast %15 : vector<1x32xf32> to vector<64x32xf32>
    %17 = arith.addf %14, %16 : vector<64x32xf32>
    %c0_19 = arith.constant 0 : index
    %c0_20 = arith.constant 0 : index
    %18 = vector.load %arg36[%c0_19, %c0_20] : memref<64x32xf32, #tpu.memory_space<vmem>>, vector<64x32xf32>
    tpu.vector_store %arg36[%c0_19, %c0_20], %17 {strides = array<i32>} : memref<64x32xf32, #tpu.memory_space<vmem>>, vector<64x32xf32>,
    %c0_21 = arith.constant 0 : index
    %c0_22 = arith.constant 0 : index
    %19 = vector.load %arg11[%c0_21, %c0_22] : memref<32x32xf32, #tpu.memory_space<vmem>>, vector<32x32xf32>
    %cst_23 = arith.constant dense<0.000000e+00> : vector<64x32xf32>
    %20 = tpu.matmul %0, %19, %cst_23 {dimension_numbers = #tpu.dot_dimension_numbers<[1], [0], [0], [1], [0, 0, 1, 1], [], []>} : vector<64x32xf32>, vector<32x32xf32>, vector<64x32xf32> -> vector<64x32xf32>
    %c0_24 = arith.constant 0 : index
    %c0_25 = arith.constant 0 : index
    %21 = vector.load %arg17[%c0_24, %c0_25] : memref<1x32xf32, #tpu.memory_space<vmem>>, vector<1x32xf32>
    %22 = vector.broadcast %21 : vector<1x32xf32> to vector<64x32xf32>
    %23 = arith.addf %20, %22 : vector<64x32xf32>
    %c0_26 = arith.constant 0 : index
    %c0_27 = arith.constant 0 : index
    %24 = vector.load %arg37[%c0_26, %c0_27] : memref<64x32xf32, #tpu.memory_space<vmem>>, vector<64x32xf32>
    tpu.vector_store %arg37[%c0_26, %c0_27], %23 {strides = array<i32>} : memref<64x32xf32, #tpu.memory_space<vmem>>, vector<64x32xf32>,
    %c0_28 = arith.constant 0 : index
    %c0_29 = arith.constant 0 : index
    %25 = vector.load %arg12[%c0_28, %c0_29] : memref<32x32xf32, #tpu.memory_space<vmem>>, vector<32x32xf32>
    %cst_30 = arith.constant dense<0.000000e+00> : vector<64x32xf32>
    %26 = tpu.matmul %0, %25, %cst_30 {dimension_numbers = #tpu.dot_dimension_numbers<[1], [0], [0], [1], [0, 0, 1, 1], [], []>} : vector<64x32xf32>, vector<32x32xf32>, vector<64x32xf32> -> vector<64x32xf32>
    %c0_31 = arith.constant 0 : index
    %c0_32 = arith.constant 0 : index
    %27 = vector.load %arg18[%c0_31, %c0_32] : memref<1x32xf32, #tpu.memory_space<vmem>>, vector<1x32xf32>
    %28 = vector.broadcast %27 : vector<1x32xf32> to vector<64x32xf32>
    %29 = arith.addf %26, %28 : vector<64x32xf32>
    %c0_33 = arith.constant 0 : index
    %c0_34 = arith.constant 0 : index
    %30 = vector.load %arg38[%c0_33, %c0_34] : memref<64x32xf32, #tpu.memory_space<vmem>>, vector<64x32xf32>
    tpu.vector_store %arg38[%c0_33, %c0_34], %29 {strides = array<i32>} : memref<64x32xf32, #tpu.memory_space<vmem>>, vector<64x32xf32>,
    %c0_35 = arith.constant 0 : index
    %c0_36 = arith.constant 0 : index
    %31 = vector.load %arg13[%c0_35, %c0_36] : memref<32x32xf32, #tpu.memory_space<vmem>>, vector<32x32xf32>
    %cst_37 = arith.constant dense<0.000000e+00> : vector<64x32xf32>
    %32 = tpu.matmul %0, %31, %cst_37 {dimension_numbers = #tpu.dot_dimension_numbers<[1], [0], [0], [1], [0, 0, 1, 1], [], []>} : vector<64x32xf32>, vector<32x32xf32>, vector<64x32xf32> -> vector<64x32xf32>
    %c0_38 = arith.constant 0 : index
    %c0_39 = arith.constant 0 : index
    %33 = vector.load %arg19[%c0_38, %c0_39] : memref<1x32xf32, #tpu.memory_space<vmem>>, vector<1x32xf32>
    %34 = vector.broadcast %33 : vector<1x32xf32> to vector<64x32xf32>
    %35 = arith.addf %32, %34 : vector<64x32xf32>
    %c0_40 = arith.constant 0 : index
    %c0_41 = arith.constant 0 : index
    %36 = vector.load %arg39[%c0_40, %c0_41] : memref<64x32xf32, #tpu.memory_space<vmem>>, vector<64x32xf32>
    tpu.vector_store %arg39[%c0_40, %c0_41], %35 {strides = array<i32>} : memref<64x32xf32, #tpu.memory_space<vmem>>, vector<64x32xf32>,
    %c0_42 = arith.constant 0 : index
    %c0_43 = arith.constant 0 : index
    %37 = vector.load %arg4[%c0_42, %c0_43] : memref<32x32xf32, #tpu.memory_space<vmem>>, vector<32x32xf32>
    %c0_44 = arith.constant 0 : index
    %c0_45 = arith.constant 0 : index
    %38 = vector.load %arg5[%c0_44, %c0_45] : memref<32x32xf32, #tpu.memory_space<vmem>>, vector<32x32xf32>
    %c0_46 = arith.constant 0 : index
    %c0_47 = arith.constant 0 : index
    %39 = vector.load %arg6[%c0_46, %c0_47] : memref<32x32xf32, #tpu.memory_space<vmem>>, vector<32x32xf32>
    %c0_48 = arith.constant 0 : index
    %c0_49 = arith.constant 0 : index
    %40 = vector.load %arg10[%c0_48, %c0_49] : memref<1x32xf32, #tpu.memory_space<vmem>>, vector<1x32xf32>
    %c0_50 = arith.constant 0 : index
    %c0_51 = arith.constant 0 : index
    %41 = vector.load %arg14[%c0_50, %c0_51] : memref<32x32xf32, #tpu.memory_space<vmem>>, vector<32x32xf32>
    %c0_52 = arith.constant 0 : index
    %c0_53 = arith.constant 0 : index
    %42 = vector.load %arg15[%c0_52, %c0_53] : memref<32x32xf32, #tpu.memory_space<vmem>>, vector<32x32xf32>
    %c0_54 = arith.constant 0 : index
    %c0_55 = arith.constant 0 : index
    %43 = vector.load %arg16[%c0_54, %c0_55] : memref<32x32xf32, #tpu.memory_space<vmem>>, vector<32x32xf32>
    %c0_56 = arith.constant 0 : index
    %c0_57 = arith.constant 0 : index
    %44 = vector.load %arg20[%c0_56, %c0_57] : memref<1x32xf32, #tpu.memory_space<vmem>>, vector<1x32xf32>
    %cst_58 = arith.constant 0.000000e+00 : f32
    %45 = vector.broadcast %cst_58 : f32 to vector<8x32xf32>
    %c0_i32 = arith.constant 0 : i32
    %c8_i32 = arith.constant 8 : i32
    %46 = arith.addi %c0_i32, %c8_i32 : i32
    %c1_i32 = arith.constant 1 : i32
    %47:4 = scf.for %arg40 = %c0_i32 to %46 step %c1_i32 iter_args(%arg41 = %45, %arg42 = %45, %arg43 = %45, %arg44 = %45) -> (vector<8x32xf32>, vector<8x32xf32>, vector<8x32xf32>, vector<8x32xf32>)  : i32 {
      %c8_i32_96 = arith.constant 8 : i32
      %96 = arith.muli %arg40, %c8_i32_96 : i32
      %97 = tpu.assume_multiple %96, 8 : i32
      %c7_i32 = arith.constant 7 : i32
      %98 = arith.subi %c7_i32, %arg40 : i32
      %c8_i32_97 = arith.constant 8 : i32
      %99 = arith.muli %98, %c8_i32_97 : i32
      %100 = tpu.assume_multiple %99, 8 : i32
      %101 = arith.index_cast %97 : i32 to index
      %c0_98 = arith.constant 0 : index
      %102 = vector.load %arg34[%101, %c0_98] : memref<64x32xf32, #tpu.memory_space<vmem>>, vector<8x32xf32>
      %103 = arith.index_cast %97 : i32 to index
      %c0_99 = arith.constant 0 : index
      %104 = vector.load %arg35[%103, %c0_99] : memref<64x32xf32, #tpu.memory_space<vmem>>, vector<8x32xf32>
      %105 = arith.index_cast %97 : i32 to index
      %c0_100 = arith.constant 0 : index
      %106 = vector.load %arg36[%105, %c0_100] : memref<64x32xf32, #tpu.memory_space<vmem>>, vector<8x32xf32>
      %cst_101 = arith.constant dense<0.000000e+00> : vector<8x32xf32>
      %107 = tpu.matmul %arg41, %37, %cst_101 {dimension_numbers = #tpu.dot_dimension_numbers<[1], [0], [0], [1], [0, 0, 1, 1], [], []>} : vector<8x32xf32>, vector<32x32xf32>, vector<8x32xf32> -> vector<8x32xf32>
      %cst_102 = arith.constant dense<0.000000e+00> : vector<8x32xf32>
      %108 = tpu.matmul %arg41, %38, %cst_102 {dimension_numbers = #tpu.dot_dimension_numbers<[1], [0], [0], [1], [0, 0, 1, 1], [], []>} : vector<8x32xf32>, vector<32x32xf32>, vector<8x32xf32> -> vector<8x32xf32>
      %cst_103 = arith.constant dense<0.000000e+00> : vector<8x32xf32>
      %109 = tpu.matmul %arg41, %39, %cst_103 {dimension_numbers = #tpu.dot_dimension_numbers<[1], [0], [0], [1], [0, 0, 1, 1], [], []>} : vector<8x32xf32>, vector<32x32xf32>, vector<8x32xf32> -> vector<8x32xf32>
      %110 = vector.broadcast %40 : vector<1x32xf32> to vector<8x32xf32>
      %111 = arith.addf %109, %110 : vector<8x32xf32>
      %112 = arith.addf %102, %107 : vector<8x32xf32>
      %113 = arith.negf %112 : vector<8x32xf32>
      %114 = math.exp %113 : vector<8x32xf32>
      %cst_104 = arith.constant 1.000000e+00 : f32
      %115 = vector.broadcast %cst_104 : f32 to vector<8x32xf32>
      %116 = arith.addf %115, %114 : vector<8x32xf32>
      %117 = arith.divf %115, %116 : vector<8x32xf32>
      %118 = arith.addf %104, %108 : vector<8x32xf32>
      %119 = arith.negf %118 : vector<8x32xf32>
      %120 = math.exp %119 : vector<8x32xf32>
      %cst_105 = arith.constant 1.000000e+00 : f32
      %121 = vector.broadcast %cst_105 : f32 to vector<8x32xf32>
      %122 = arith.addf %121, %120 : vector<8x32xf32>
      %123 = arith.divf %121, %122 : vector<8x32xf32>
      %124 = arith.mulf %117, %111 : vector<8x32xf32>
      %125 = arith.addf %106, %124 : vector<8x32xf32>
      %126 = math.tanh %125 : vector<8x32xf32>
      %cst_106 = arith.constant 1.000000e+00 : f32
      %127 = vector.broadcast %cst_106 : f32 to vector<8x32xf32>
      %128 = arith.subf %127, %123 : vector<8x32xf32>
      %129 = arith.mulf %128, %126 : vector<8x32xf32>
      %130 = arith.mulf %123, %arg41 : vector<8x32xf32>
      %131 = arith.addf %129, %130 : vector<8x32xf32>
      %132 = arith.index_cast %100 : i32 to index
      %c0_107 = arith.constant 0 : index
      %133 = vector.load %arg37[%132, %c0_107] : memref<64x32xf32, #tpu.memory_space<vmem>>, vector<8x32xf32>
      %134 = arith.index_cast %100 : i32 to index
      %c0_108 = arith.constant 0 : index
      %135 = vector.load %arg38[%134, %c0_108] : memref<64x32xf32, #tpu.memory_space<vmem>>, vector<8x32xf32>
      %136 = arith.index_cast %100 : i32 to index
      %c0_109 = arith.constant 0 : index
      %137 = vector.load %arg39[%136, %c0_109] : memref<64x32xf32, #tpu.memory_space<vmem>>, vector<8x32xf32>
      %cst_110 = arith.constant dense<0.000000e+00> : vector<8x32xf32>
      %138 = tpu.matmul %arg42, %41, %cst_110 {dimension_numbers = #tpu.dot_dimension_numbers<[1], [0], [0], [1], [0, 0, 1, 1], [], []>} : vector<8x32xf32>, vector<32x32xf32>, vector<8x32xf32> -> vector<8x32xf32>
      %cst_111 = arith.constant dense<0.000000e+00> : vector<8x32xf32>
      %139 = tpu.matmul %arg42, %42, %cst_111 {dimension_numbers = #tpu.dot_dimension_numbers<[1], [0], [0], [1], [0, 0, 1, 1], [], []>} : vector<8x32xf32>, vector<32x32xf32>, vector<8x32xf32> -> vector<8x32xf32>
      %cst_112 = arith.constant dense<0.000000e+00> : vector<8x32xf32>
      %140 = tpu.matmul %arg42, %43, %cst_112 {dimension_numbers = #tpu.dot_dimension_numbers<[1], [0], [0], [1], [0, 0, 1, 1], [], []>} : vector<8x32xf32>, vector<32x32xf32>, vector<8x32xf32> -> vector<8x32xf32>
      %141 = vector.broadcast %44 : vector<1x32xf32> to vector<8x32xf32>
      %142 = arith.addf %140, %141 : vector<8x32xf32>
      %143 = arith.addf %133, %138 : vector<8x32xf32>
      %144 = arith.negf %143 : vector<8x32xf32>
      %145 = math.exp %144 : vector<8x32xf32>
      %cst_113 = arith.constant 1.000000e+00 : f32
      %146 = vector.broadcast %cst_113 : f32 to vector<8x32xf32>
      %147 = arith.addf %146, %145 : vector<8x32xf32>
      %148 = arith.divf %146, %147 : vector<8x32xf32>
      %149 = arith.addf %135, %139 : vector<8x32xf32>
      %150 = arith.negf %149 : vector<8x32xf32>
      %151 = math.exp %150 : vector<8x32xf32>
      %cst_114 = arith.constant 1.000000e+00 : f32
      %152 = vector.broadcast %cst_114 : f32 to vector<8x32xf32>
      %153 = arith.addf %152, %151 : vector<8x32xf32>
      %154 = arith.divf %152, %153 : vector<8x32xf32>
      %155 = arith.mulf %148, %142 : vector<8x32xf32>
      %156 = arith.addf %137, %155 : vector<8x32xf32>
      %157 = math.tanh %156 : vector<8x32xf32>
      %cst_115 = arith.constant 1.000000e+00 : f32
      %158 = vector.broadcast %cst_115 : f32 to vector<8x32xf32>
      %159 = arith.subf %158, %154 : vector<8x32xf32>
      %160 = arith.mulf %159, %157 : vector<8x32xf32>
      %161 = arith.mulf %154, %arg42 : vector<8x32xf32>
      %162 = arith.addf %160, %161 : vector<8x32xf32>
      %163 = arith.addf %arg43, %131 : vector<8x32xf32>
      %164 = arith.addf %arg44, %162 : vector<8x32xf32>
      scf.yield %131, %162, %163, %164 : vector<8x32xf32>, vector<8x32xf32>, vector<8x32xf32>, vector<8x32xf32>
    }
    %c8_i32_59 = arith.constant 8 : i32
    %cst_60 = arith.constant 1.250000e-01 : f32
    %48 = vector.broadcast %cst_60 : f32 to vector<8x32xf32>
    %49 = arith.mulf %47#2, %48 : vector<8x32xf32>
    %cst_61 = arith.constant 1.250000e-01 : f32
    %50 = vector.broadcast %cst_61 : f32 to vector<8x32xf32>
    %51 = arith.mulf %47#3, %50 : vector<8x32xf32>
    %c0_62 = arith.constant 0 : index
    %c0_63 = arith.constant 0 : index
    %52 = vector.load %arg21[%c0_62, %c0_63] : memref<32x32xf32, #tpu.memory_space<vmem>>, vector<32x32xf32>
    %cst_64 = arith.constant dense<0.000000e+00> : vector<8x32xf32>
    %53 = tpu.matmul %49, %52, %cst_64 {dimension_numbers = #tpu.dot_dimension_numbers<[1], [0], [0], [1], [0, 0, 1, 1], [], []>} : vector<8x32xf32>, vector<32x32xf32>, vector<8x32xf32> -> vector<8x32xf32>
    %c0_65 = arith.constant 0 : index
    %c0_66 = arith.constant 0 : index
    %54 = vector.load %arg22[%c0_65, %c0_66] : memref<32x32xf32, #tpu.memory_space<vmem>>, vector<32x32xf32>
    %cst_67 = arith.constant dense<0.000000e+00> : vector<8x32xf32>
    %55 = tpu.matmul %51, %54, %cst_67 {dimension_numbers = #tpu.dot_dimension_numbers<[1], [0], [0], [1], [0, 0, 1, 1], [], []>} : vector<8x32xf32>, vector<32x32xf32>, vector<8x32xf32> -> vector<8x32xf32>
    %56 = arith.addf %53, %55 : vector<8x32xf32>
    %c0_68 = arith.constant 0 : index
    %c0_69 = arith.constant 0 : index
    %57 = vector.load %arg23[%c0_68, %c0_69] : memref<1x32xf32, #tpu.memory_space<vmem>>, vector<1x32xf32>
    %58 = vector.broadcast %57 : vector<1x32xf32> to vector<8x32xf32>
    %59 = arith.addf %56, %58 : vector<8x32xf32>
    %60 = math.tanh %59 : vector<8x32xf32>
    %c0_70 = arith.constant 0 : index
    %c0_71 = arith.constant 0 : index
    %61 = vector.load %arg24[%c0_70, %c0_71] : memref<32x16xf32, #tpu.memory_space<vmem>>, vector<32x16xf32>
    %cst_72 = arith.constant dense<0.000000e+00> : vector<8x16xf32>
    %62 = tpu.matmul %60, %61, %cst_72 {dimension_numbers = #tpu.dot_dimension_numbers<[1], [0], [0], [1], [0, 0, 1, 1], [], []>} : vector<8x32xf32>, vector<32x16xf32>, vector<8x16xf32> -> vector<8x16xf32>
    %c0_73 = arith.constant 0 : index
    %c0_74 = arith.constant 0 : index
    %63 = vector.load %arg25[%c0_73, %c0_74] : memref<1x16xf32, #tpu.memory_space<vmem>>, vector<1x16xf32>
    %64 = vector.broadcast %63 : vector<1x16xf32> to vector<8x16xf32>
    %65 = arith.addf %62, %64 : vector<8x16xf32>
    %c0_75 = arith.constant 0 : index
    %c0_76 = arith.constant 0 : index
    %66 = vector.load %arg26[%c0_75, %c0_76] : memref<32x16xf32, #tpu.memory_space<vmem>>, vector<32x16xf32>
    %cst_77 = arith.constant dense<0.000000e+00> : vector<8x16xf32>
    %67 = tpu.matmul %60, %66, %cst_77 {dimension_numbers = #tpu.dot_dimension_numbers<[1], [0], [0], [1], [0, 0, 1, 1], [], []>} : vector<8x32xf32>, vector<32x16xf32>, vector<8x16xf32> -> vector<8x16xf32>
    %c0_78 = arith.constant 0 : index
    %c0_79 = arith.constant 0 : index
    %68 = vector.load %arg27[%c0_78, %c0_79] : memref<1x16xf32, #tpu.memory_space<vmem>>, vector<1x16xf32>
    %69 = vector.broadcast %68 : vector<1x16xf32> to vector<8x16xf32>
    %70 = arith.addf %67, %69 : vector<8x16xf32>
    %cst_80 = arith.constant 0.000000e+00 : f32
    %71 = vector.broadcast %cst_80 : f32 to vector<8x16xf32>
    %72 = arith.maximumf %70, %71 : vector<8x16xf32>
    %73 = vector.broadcast %cst_80 : f32 to vector<8x16xf32>
    %74 = arith.subf %70, %73 : vector<8x16xf32>
    %75 = arith.cmpf one, %74, %74 : vector<8x16xf32>
    %76 = vector.broadcast %cst_80 : f32 to vector<8x16xf32>
    %77 = arith.addf %70, %76 : vector<8x16xf32>
    %78 = math.absf %74 : vector<8x16xf32>
    %cst_81 = arith.constant 0.000000e+00 : f32
    %79 = vector.broadcast %cst_81 : f32 to vector<8x16xf32>
    %80 = arith.subf %79, %78 : vector<8x16xf32>
    %81 = math.exp %80 : vector<8x16xf32>
    %82 = math.log1p %81 : vector<8x16xf32>
    %83 = arith.addf %72, %82 : vector<8x16xf32>
    %84 = arith.select %75, %77, %83 : vector<8x16xi1>, vector<8x16xf32>
    %c0_82 = arith.constant 0 : index
    %c0_83 = arith.constant 0 : index
    %85 = vector.load %arg28[%c0_82, %c0_83] : memref<16x32xf32, #tpu.memory_space<vmem>>, vector<16x32xf32>
    %cst_84 = arith.constant dense<0.000000e+00> : vector<8x32xf32>
    %86 = tpu.matmul %65, %85, %cst_84 {dimension_numbers = #tpu.dot_dimension_numbers<[1], [0], [0], [1], [0, 0, 1, 1], [], []>} : vector<8x16xf32>, vector<16x32xf32>, vector<8x32xf32> -> vector<8x32xf32>
    %c0_85 = arith.constant 0 : index
    %c0_86 = arith.constant 0 : index
    %87 = vector.load %arg29[%c0_85, %c0_86] : memref<1x32xf32, #tpu.memory_space<vmem>>, vector<1x32xf32>
    %88 = vector.broadcast %87 : vector<1x32xf32> to vector<8x32xf32>
    %89 = arith.addf %86, %88 : vector<8x32xf32>
    %cst_87 = arith.constant 0.000000e+00 : f32
    %90 = vector.broadcast %cst_87 : f32 to vector<8x32xf32>
    %91 = arith.maximumf %89, %90 : vector<8x32xf32>
    %c0_88 = arith.constant 0 : index
    %c0_89 = arith.constant 0 : index
    %92 = vector.load %arg30[%c0_88, %c0_89] : memref<8x16xf32, #tpu.memory_space<vmem>>, vector<8x16xf32>
    tpu.vector_store %arg30[%c0_88, %c0_89], %65 {strides = array<i32>} : memref<8x16xf32, #tpu.memory_space<vmem>>, vector<8x16xf32>,
    %c0_90 = arith.constant 0 : index
    %c0_91 = arith.constant 0 : index
    %93 = vector.load %arg31[%c0_90, %c0_91] : memref<8x16xf32, #tpu.memory_space<vmem>>, vector<8x16xf32>
    tpu.vector_store %arg31[%c0_90, %c0_91], %84 {strides = array<i32>} : memref<8x16xf32, #tpu.memory_space<vmem>>, vector<8x16xf32>,
    %c0_92 = arith.constant 0 : index
    %c0_93 = arith.constant 0 : index
    %94 = vector.load %arg32[%c0_92, %c0_93] : memref<8x32xf32, #tpu.memory_space<vmem>>, vector<8x32xf32>
    tpu.vector_store %arg32[%c0_92, %c0_93], %91 {strides = array<i32>} : memref<8x32xf32, #tpu.memory_space<vmem>>, vector<8x32xf32>,
    %c0_94 = arith.constant 0 : index
    %c0_95 = arith.constant 0 : index
    %95 = vector.load %arg33[%c0_94, %c0_95] : memref<8x32xf32, #tpu.memory_space<vmem>>, vector<8x32xf32>
    tpu.vector_store %arg33[%c0_94, %c0_95], %47#1 {strides = array<i32>} : memref<8x32xf32, #tpu.memory_space<vmem>>, vector<8x32xf32>,
    return
  }
}

module attributes {stable_mosaic.version = 11 : i64} {
  func.func @dec_emit_kernel(%arg0: memref<64x32xf32, #tpu.memory_space<vmem>>, %arg1: memref<8x32xf32, #tpu.memory_space<vmem>>, %arg2: memref<8x32xf32, #tpu.memory_space<vmem>>, %arg3: memref<32x32xf32, #tpu.memory_space<vmem>>, %arg4: memref<32x32xf32, #tpu.memory_space<vmem>>, %arg5: memref<32x32xf32, #tpu.memory_space<vmem>>, %arg6: memref<32x32xf32, #tpu.memory_space<vmem>>, %arg7: memref<32x32xf32, #tpu.memory_space<vmem>>, %arg8: memref<32x32xf32, #tpu.memory_space<vmem>>, %arg9: memref<32x32xf32, #tpu.memory_space<vmem>>, %arg10: memref<32x32xf32, #tpu.memory_space<vmem>>, %arg11: memref<32x32xf32, #tpu.memory_space<vmem>>, %arg12: memref<1x32xf32, #tpu.memory_space<vmem>>, %arg13: memref<1x32xf32, #tpu.memory_space<vmem>>, %arg14: memref<1x32xf32, #tpu.memory_space<vmem>>, %arg15: memref<1x32xf32, #tpu.memory_space<vmem>>, %arg16: memref<32x24xf32, #tpu.memory_space<vmem>>, %arg17: memref<1x24xf32, #tpu.memory_space<vmem>>, %arg18: memref<64x24xf32, #tpu.memory_space<vmem>>, %arg19: memref<64x32xf32, #tpu.memory_space<vmem>>, %arg20: memref<64x32xf32, #tpu.memory_space<vmem>>, %arg21: memref<64x32xf32, #tpu.memory_space<vmem>>, %arg22: memref<64x32xf32, #tpu.memory_space<vmem>>, %arg23: memref<8x32xf32, #tpu.memory_space<vmem>>) attributes {dimension_semantics = [], scalar_prefetch = 0 : i64, scratch_operands = 5 : i64, tpu.core_type = #tpu.core_type<tc>} {
    %c0 = arith.constant 0 : index
    %c0_0 = arith.constant 0 : index
    %0 = vector.load %arg0[%c0, %c0_0] : memref<64x32xf32, #tpu.memory_space<vmem>>, vector<64x32xf32>
    %cst = arith.constant 0.000000e+00 : f32
    %1 = vector.broadcast %cst : f32 to vector<64x32xf32>
    %2 = arith.maximumf %0, %1 : vector<64x32xf32>
    %c0_1 = arith.constant 0 : index
    %c0_2 = arith.constant 0 : index
    %3 = vector.load %arg1[%c0_1, %c0_2] : memref<8x32xf32, #tpu.memory_space<vmem>>, vector<8x32xf32>
    %c0_3 = arith.constant 0 : index
    %c0_4 = arith.constant 0 : index
    %4 = vector.load %arg3[%c0_3, %c0_4] : memref<32x32xf32, #tpu.memory_space<vmem>>, vector<32x32xf32>
    %cst_5 = arith.constant dense<0.000000e+00> : vector<64x32xf32>
    %5 = tpu.matmul %2, %4, %cst_5 {dimension_numbers = #tpu.dot_dimension_numbers<[1], [0], [0], [1], [0, 0, 1, 1], [], []>} : vector<64x32xf32>, vector<32x32xf32>, vector<64x32xf32> -> vector<64x32xf32>
    %c0_6 = arith.constant 0 : index
    %c0_7 = arith.constant 0 : index
    %6 = vector.load %arg19[%c0_6, %c0_7] : memref<64x32xf32, #tpu.memory_space<vmem>>, vector<64x32xf32>
    tpu.vector_store %arg19[%c0_6, %c0_7], %5 {strides = array<i32>} : memref<64x32xf32, #tpu.memory_space<vmem>>, vector<64x32xf32>,
    %c0_8 = arith.constant 0 : index
    %c0_9 = arith.constant 0 : index
    %7 = vector.load %arg4[%c0_8, %c0_9] : memref<32x32xf32, #tpu.memory_space<vmem>>, vector<32x32xf32>
    %cst_10 = arith.constant dense<0.000000e+00> : vector<64x32xf32>
    %8 = tpu.matmul %2, %7, %cst_10 {dimension_numbers = #tpu.dot_dimension_numbers<[1], [0], [0], [1], [0, 0, 1, 1], [], []>} : vector<64x32xf32>, vector<32x32xf32>, vector<64x32xf32> -> vector<64x32xf32>
    %c0_11 = arith.constant 0 : index
    %c0_12 = arith.constant 0 : index
    %9 = vector.load %arg20[%c0_11, %c0_12] : memref<64x32xf32, #tpu.memory_space<vmem>>, vector<64x32xf32>
    tpu.vector_store %arg20[%c0_11, %c0_12], %8 {strides = array<i32>} : memref<64x32xf32, #tpu.memory_space<vmem>>, vector<64x32xf32>,
    %c0_13 = arith.constant 0 : index
    %c0_14 = arith.constant 0 : index
    %10 = vector.load %arg5[%c0_13, %c0_14] : memref<32x32xf32, #tpu.memory_space<vmem>>, vector<32x32xf32>
    %cst_15 = arith.constant dense<0.000000e+00> : vector<64x32xf32>
    %11 = tpu.matmul %2, %10, %cst_15 {dimension_numbers = #tpu.dot_dimension_numbers<[1], [0], [0], [1], [0, 0, 1, 1], [], []>} : vector<64x32xf32>, vector<32x32xf32>, vector<64x32xf32> -> vector<64x32xf32>
    %c0_16 = arith.constant 0 : index
    %c0_17 = arith.constant 0 : index
    %12 = vector.load %arg21[%c0_16, %c0_17] : memref<64x32xf32, #tpu.memory_space<vmem>>, vector<64x32xf32>
    tpu.vector_store %arg21[%c0_16, %c0_17], %11 {strides = array<i32>} : memref<64x32xf32, #tpu.memory_space<vmem>>, vector<64x32xf32>,
    %c0_18 = arith.constant 0 : index
    %c0_19 = arith.constant 0 : index
    %13 = vector.load %arg6[%c0_18, %c0_19] : memref<32x32xf32, #tpu.memory_space<vmem>>, vector<32x32xf32>
    %cst_20 = arith.constant dense<0.000000e+00> : vector<8x32xf32>
    %14 = tpu.matmul %3, %13, %cst_20 {dimension_numbers = #tpu.dot_dimension_numbers<[1], [0], [0], [1], [0, 0, 1, 1], [], []>} : vector<8x32xf32>, vector<32x32xf32>, vector<8x32xf32> -> vector<8x32xf32>
    %c0_21 = arith.constant 0 : index
    %c0_22 = arith.constant 0 : index
    %15 = vector.load %arg12[%c0_21, %c0_22] : memref<1x32xf32, #tpu.memory_space<vmem>>, vector<1x32xf32>
    %16 = vector.broadcast %15 : vector<1x32xf32> to vector<8x32xf32>
    %17 = arith.addf %14, %16 : vector<8x32xf32>
    %c0_23 = arith.constant 0 : index
    %c0_24 = arith.constant 0 : index
    %18 = vector.load %arg7[%c0_23, %c0_24] : memref<32x32xf32, #tpu.memory_space<vmem>>, vector<32x32xf32>
    %cst_25 = arith.constant dense<0.000000e+00> : vector<8x32xf32>
    %19 = tpu.matmul %3, %18, %cst_25 {dimension_numbers = #tpu.dot_dimension_numbers<[1], [0], [0], [1], [0, 0, 1, 1], [], []>} : vector<8x32xf32>, vector<32x32xf32>, vector<8x32xf32> -> vector<8x32xf32>
    %c0_26 = arith.constant 0 : index
    %c0_27 = arith.constant 0 : index
    %20 = vector.load %arg13[%c0_26, %c0_27] : memref<1x32xf32, #tpu.memory_space<vmem>>, vector<1x32xf32>
    %21 = vector.broadcast %20 : vector<1x32xf32> to vector<8x32xf32>
    %22 = arith.addf %19, %21 : vector<8x32xf32>
    %c0_28 = arith.constant 0 : index
    %c0_29 = arith.constant 0 : index
    %23 = vector.load %arg8[%c0_28, %c0_29] : memref<32x32xf32, #tpu.memory_space<vmem>>, vector<32x32xf32>
    %cst_30 = arith.constant dense<0.000000e+00> : vector<8x32xf32>
    %24 = tpu.matmul %3, %23, %cst_30 {dimension_numbers = #tpu.dot_dimension_numbers<[1], [0], [0], [1], [0, 0, 1, 1], [], []>} : vector<8x32xf32>, vector<32x32xf32>, vector<8x32xf32> -> vector<8x32xf32>
    %c0_31 = arith.constant 0 : index
    %c0_32 = arith.constant 0 : index
    %25 = vector.load %arg14[%c0_31, %c0_32] : memref<1x32xf32, #tpu.memory_space<vmem>>, vector<1x32xf32>
    %26 = vector.broadcast %25 : vector<1x32xf32> to vector<8x32xf32>
    %27 = arith.addf %24, %26 : vector<8x32xf32>
    %c0_33 = arith.constant 0 : index
    %c0_34 = arith.constant 0 : index
    %28 = vector.load %arg9[%c0_33, %c0_34] : memref<32x32xf32, #tpu.memory_space<vmem>>, vector<32x32xf32>
    %c0_35 = arith.constant 0 : index
    %c0_36 = arith.constant 0 : index
    %29 = vector.load %arg10[%c0_35, %c0_36] : memref<32x32xf32, #tpu.memory_space<vmem>>, vector<32x32xf32>
    %c0_37 = arith.constant 0 : index
    %c0_38 = arith.constant 0 : index
    %30 = vector.load %arg11[%c0_37, %c0_38] : memref<32x32xf32, #tpu.memory_space<vmem>>, vector<32x32xf32>
    %c0_39 = arith.constant 0 : index
    %c0_40 = arith.constant 0 : index
    %31 = vector.load %arg15[%c0_39, %c0_40] : memref<1x32xf32, #tpu.memory_space<vmem>>, vector<1x32xf32>
    %c0_41 = arith.constant 0 : index
    %c0_42 = arith.constant 0 : index
    %32 = vector.load %arg2[%c0_41, %c0_42] : memref<8x32xf32, #tpu.memory_space<vmem>>, vector<8x32xf32>
    %c0_43 = arith.constant 0 : index
    %c0_44 = arith.constant 0 : index
    %33 = vector.load %arg23[%c0_43, %c0_44] : memref<8x32xf32, #tpu.memory_space<vmem>>, vector<8x32xf32>
    tpu.vector_store %arg23[%c0_43, %c0_44], %32 {strides = array<i32>} : memref<8x32xf32, #tpu.memory_space<vmem>>, vector<8x32xf32>,
    %c0_i32 = arith.constant 0 : i32
    %c8_i32 = arith.constant 8 : i32
    %34 = arith.addi %c0_i32, %c8_i32 : i32
    %c1_i32 = arith.constant 1 : i32
    scf.for %arg24 = %c0_i32 to %34 step %c1_i32  : i32 {
      %c1_i32_57 = arith.constant 1 : i32
      %51 = arith.muli %arg24, %c1_i32_57 : i32
      %c0_i32_58 = arith.constant 0 : i32
      %52 = arith.addi %c0_i32_58, %51 : i32
      %c8_i32_59 = arith.constant 8 : i32
      %53 = arith.muli %52, %c8_i32_59 : i32
      %54 = tpu.assume_multiple %53, 8 : i32
      %55 = arith.index_cast %54 : i32 to index
      %c0_60 = arith.constant 0 : index
      %56 = vector.load %arg19[%55, %c0_60] : memref<64x32xf32, #tpu.memory_space<vmem>>, vector<8x32xf32>
      %57 = arith.addf %56, %17 : vector<8x32xf32>
      %58 = arith.index_cast %54 : i32 to index
      %c0_61 = arith.constant 0 : index
      %59 = vector.load %arg20[%58, %c0_61] : memref<64x32xf32, #tpu.memory_space<vmem>>, vector<8x32xf32>
      %60 = arith.addf %59, %22 : vector<8x32xf32>
      %61 = arith.index_cast %54 : i32 to index
      %c0_62 = arith.constant 0 : index
      %62 = vector.load %arg21[%61, %c0_62] : memref<64x32xf32, #tpu.memory_space<vmem>>, vector<8x32xf32>
      %63 = arith.addf %62, %27 : vector<8x32xf32>
      %c0_63 = arith.constant 0 : index
      %c0_64 = arith.constant 0 : index
      %64 = vector.load %arg23[%c0_63, %c0_64] : memref<8x32xf32, #tpu.memory_space<vmem>>, vector<8x32xf32>
      %cst_65 = arith.constant dense<0.000000e+00> : vector<8x32xf32>
      %65 = tpu.matmul %64, %28, %cst_65 {dimension_numbers = #tpu.dot_dimension_numbers<[1], [0], [0], [1], [0, 0, 1, 1], [], []>} : vector<8x32xf32>, vector<32x32xf32>, vector<8x32xf32> -> vector<8x32xf32>
      %cst_66 = arith.constant dense<0.000000e+00> : vector<8x32xf32>
      %66 = tpu.matmul %64, %29, %cst_66 {dimension_numbers = #tpu.dot_dimension_numbers<[1], [0], [0], [1], [0, 0, 1, 1], [], []>} : vector<8x32xf32>, vector<32x32xf32>, vector<8x32xf32> -> vector<8x32xf32>
      %cst_67 = arith.constant dense<0.000000e+00> : vector<8x32xf32>
      %67 = tpu.matmul %64, %30, %cst_67 {dimension_numbers = #tpu.dot_dimension_numbers<[1], [0], [0], [1], [0, 0, 1, 1], [], []>} : vector<8x32xf32>, vector<32x32xf32>, vector<8x32xf32> -> vector<8x32xf32>
      %68 = vector.broadcast %31 : vector<1x32xf32> to vector<8x32xf32>
      %69 = arith.addf %67, %68 : vector<8x32xf32>
      %70 = arith.addf %57, %65 : vector<8x32xf32>
      %71 = arith.negf %70 : vector<8x32xf32>
      %72 = math.exp %71 : vector<8x32xf32>
      %cst_68 = arith.constant 1.000000e+00 : f32
      %73 = vector.broadcast %cst_68 : f32 to vector<8x32xf32>
      %74 = arith.addf %73, %72 : vector<8x32xf32>
      %75 = arith.divf %73, %74 : vector<8x32xf32>
      %76 = arith.addf %60, %66 : vector<8x32xf32>
      %77 = arith.negf %76 : vector<8x32xf32>
      %78 = math.exp %77 : vector<8x32xf32>
      %cst_69 = arith.constant 1.000000e+00 : f32
      %79 = vector.broadcast %cst_69 : f32 to vector<8x32xf32>
      %80 = arith.addf %79, %78 : vector<8x32xf32>
      %81 = arith.divf %79, %80 : vector<8x32xf32>
      %82 = arith.mulf %75, %69 : vector<8x32xf32>
      %83 = arith.addf %63, %82 : vector<8x32xf32>
      %84 = math.tanh %83 : vector<8x32xf32>
      %cst_70 = arith.constant 1.000000e+00 : f32
      %85 = vector.broadcast %cst_70 : f32 to vector<8x32xf32>
      %86 = arith.subf %85, %81 : vector<8x32xf32>
      %87 = arith.mulf %86, %84 : vector<8x32xf32>
      %88 = arith.mulf %81, %64 : vector<8x32xf32>
      %89 = arith.addf %87, %88 : vector<8x32xf32>
      %c0_71 = arith.constant 0 : index
      %c0_72 = arith.constant 0 : index
      %90 = vector.load %arg23[%c0_71, %c0_72] : memref<8x32xf32, #tpu.memory_space<vmem>>, vector<8x32xf32>
      tpu.vector_store %arg23[%c0_71, %c0_72], %89 {strides = array<i32>} : memref<8x32xf32, #tpu.memory_space<vmem>>, vector<8x32xf32>,
      %91 = arith.index_cast %54 : i32 to index
      %c0_73 = arith.constant 0 : index
      %92 = vector.load %arg22[%91, %c0_73] : memref<64x32xf32, #tpu.memory_space<vmem>>, vector<8x32xf32>
      tpu.vector_store %arg22[%91, %c0_73], %89 {strides = array<i32>} : memref<64x32xf32, #tpu.memory_space<vmem>>, vector<8x32xf32>,
    }
    %c8_i32_45 = arith.constant 8 : i32
    %c0_46 = arith.constant 0 : index
    %c0_47 = arith.constant 0 : index
    %35 = vector.load %arg22[%c0_46, %c0_47] : memref<64x32xf32, #tpu.memory_space<vmem>>, vector<64x32xf32>
    %c0_48 = arith.constant 0 : index
    %c0_49 = arith.constant 0 : index
    %36 = vector.load %arg16[%c0_48, %c0_49] : memref<32x24xf32, #tpu.memory_space<vmem>>, vector<32x24xf32>
    %cst_50 = arith.constant dense<0.000000e+00> : vector<64x24xf32>
    %37 = tpu.matmul %35, %36, %cst_50 {dimension_numbers = #tpu.dot_dimension_numbers<[1], [0], [0], [1], [0, 0, 1, 1], [], []>} : vector<64x32xf32>, vector<32x24xf32>, vector<64x24xf32> -> vector<64x24xf32>
    %c0_51 = arith.constant 0 : index
    %c0_52 = arith.constant 0 : index
    %38 = vector.load %arg17[%c0_51, %c0_52] : memref<1x24xf32, #tpu.memory_space<vmem>>, vector<1x24xf32>
    %39 = vector.broadcast %38 : vector<1x24xf32> to vector<64x24xf32>
    %40 = arith.addf %37, %39 : vector<64x24xf32>
    %cst_53 = arith.constant dense<0xFF800000> : vector<64xf32>
    %41 = vector.multi_reduction <maximumf>, %40, %cst_53 [1] : vector<64x24xf32> to vector<64xf32>
    %42 = vector.shape_cast %41 : vector<64xf32> to vector<64x1xf32>
    %43 = vector.broadcast %42 : vector<64x1xf32> to vector<64x24xf32>
    %44 = arith.subf %40, %43 : vector<64x24xf32>
    %45 = math.exp %44 : vector<64x24xf32>
    %cst_54 = arith.constant dense<0.000000e+00> : vector<64xf32>
    %46 = vector.multi_reduction <add>, %45, %cst_54 [1] : vector<64x24xf32> to vector<64xf32>
    %47 = vector.shape_cast %46 : vector<64xf32> to vector<64x1xf32>
    %48 = vector.broadcast %47 : vector<64x1xf32> to vector<64x24xf32>
    %49 = arith.divf %45, %48 : vector<64x24xf32>
    %c0_55 = arith.constant 0 : index
    %c0_56 = arith.constant 0 : index
    %50 = vector.load %arg18[%c0_55, %c0_56] : memref<64x24xf32, #tpu.memory_space<vmem>>, vector<64x24xf32>
    tpu.vector_store %arg18[%c0_55, %c0_56], %49 {strides = array<i32>} : memref<64x24xf32, #tpu.memory_space<vmem>>, vector<64x24xf32>,
    return
  }
}

</mosaic_0001>

<llo_original>
// kernel: vnmt_model_forward.3
$region0: #{vnmt_model_forward.3}
  #allocation0 [shape = 'u32[]', space=smem, size = 0x4, offset = 0x4, fixed_abs, tag = 'smem constant byte address 0x4 - core index']
  #allocation1 [shape = 'u32[144,128]{1,0:T(1,128)}', space=vmem, size = 0x12000, scoped, tag = 'internal scratch']
  #allocation2 [shape = 'f32[64,32]{1,0:T(8,128)}', space=vmem, size = 0x8000, scoped, tag = 'scratch operand']
  #allocation3 [shape = 'f32[64,32]{1,0:T(8,128)}', space=vmem, size = 0x8000, scoped, tag = 'scratch operand']
  #allocation4 [shape = 'f32[64,32]{1,0:T(8,128)}', space=vmem, size = 0x8000, scoped, tag = 'scratch operand']
  #allocation5 [shape = 'f32[64,32]{1,0:T(8,128)}', space=vmem, size = 0x8000, scoped, tag = 'scratch operand']
  #allocation6 [shape = 'f32[8,32]{1,0:T(8,128)}', space=vmem, size = 0x1000, scoped, tag = 'scratch operand']
  %s0 = inlined_call_operand.vmem [shape: f32[64,32], index: 0, kind: input, shape index: {}]
  %s1 = inlined_call_operand.vmem [shape: f32[8,32], index: 1, kind: input, shape index: {}]
  %s2 = inlined_call_operand.vmem [shape: f32[8,32], index: 2, kind: input, shape index: {}]
  %s3 = inlined_call_operand.vmem [shape: f32[32,32], index: 3, kind: input, shape index: {}]
  %s4 = inlined_call_operand.vmem [shape: f32[32,32], index: 4, kind: input, shape index: {}]
  %s5 = inlined_call_operand.vmem [shape: f32[32,32], index: 5, kind: input, shape index: {}]
  %s6 = inlined_call_operand.vmem [shape: f32[32,32], index: 6, kind: input, shape index: {}]
  %s7 = inlined_call_operand.vmem [shape: f32[32,32], index: 7, kind: input, shape index: {}]
  %s8 = inlined_call_operand.vmem [shape: f32[32,32], index: 8, kind: input, shape index: {}]
  %s9 = inlined_call_operand.vmem [shape: f32[32,32], index: 9, kind: input, shape index: {}]
  %s10 = inlined_call_operand.vmem [shape: f32[32,32], index: 10, kind: input, shape index: {}]
  %s11 = inlined_call_operand.vmem [shape: f32[32,32], index: 11, kind: input, shape index: {}]
  %s12 = inlined_call_operand.vmem [shape: f32[1,32], index: 12, kind: input, shape index: {}]
  %s13 = inlined_call_operand.vmem [shape: f32[1,32], index: 13, kind: input, shape index: {}]
  %s14 = inlined_call_operand.vmem [shape: f32[1,32], index: 14, kind: input, shape index: {}]
  %s15 = inlined_call_operand.vmem [shape: f32[1,32], index: 15, kind: input, shape index: {}]
  %s16 = inlined_call_operand.vmem [shape: f32[32,24], index: 16, kind: input, shape index: {}]
  %s17 = inlined_call_operand.vmem [shape: f32[1,24], index: 17, kind: input, shape index: {}]
  %s18 = inlined_call_operand.vmem [shape: f32[64,24], index: 18, kind: output, shape index: {}]
  %s19 = sld [smem:[#allocation0]]
  $region89: #{vnmt_model_forward.3} parent=0
    _
  %s21 = ssub.s32 1, %s19
  %s22 = scalar_select 0, %s21, %s19
  // Predicated region
  $region2: #{vnmt_model_forward.3} parent=0 // pred_check
    _
  $region3: #{vnmt_model_forward.3} parent=0 // pred_check_branch
    %24 = sbr.rel (0) target = $region5
  $region4: #{vnmt_model_forward.3} parent=0 // pred_region
    _
  $region5: #{vnmt_model_forward.3} parent=0 // pred_fallthru
    _
  // Predicated region
  $region6: #{vnmt_model_forward.3} parent=0 // pred_check
    _
  $region7: #{vnmt_model_forward.3} parent=0 // pred_check_branch
    %26 = sbr.rel (0) target = $region9
  $region8: #{vnmt_model_forward.3} parent=0 // pred_region
    _
  $region9: #{vnmt_model_forward.3} parent=0 // pred_fallthru
    _
  // Predicated region
  $region10: #{vnmt_model_forward.3} parent=0 // pred_check
    _
  $region11: #{vnmt_model_forward.3} parent=0 // pred_check_branch
    %28 = sbr.rel (0) target = $region13
  $region12: #{vnmt_model_forward.3} parent=0 // pred_region
    _
  $region13: #{vnmt_model_forward.3} parent=0 // pred_fallthru
    _
  // Predicated region
  $region14: #{vnmt_model_forward.3} parent=0 // pred_check
    _
  $region15: #{vnmt_model_forward.3} parent=0 // pred_check_branch
    %30 = sbr.rel (0) target = $region17
  $region16: #{vnmt_model_forward.3} parent=0 // pred_region
    _
  $region17: #{vnmt_model_forward.3} parent=0 // pred_fallthru
    _
  // Predicated region
  $region18: #{vnmt_model_forward.3} parent=0 // pred_check
    _
  $region19: #{vnmt_model_forward.3} parent=0 // pred_check_branch
    %32 = sbr.rel (0) target = $region21
  $region20: #{vnmt_model_forward.3} parent=0 // pred_region
    _
  $region21: #{vnmt_model_forward.3} parent=0 // pred_fallthru
    _
  // Predicated region
  $region22: #{vnmt_model_forward.3} parent=0 // pred_check
    _
  $region23: #{vnmt_model_forward.3} parent=0 // pred_check_branch
    %34 = sbr.rel (0) target = $region25
  $region24: #{vnmt_model_forward.3} parent=0 // pred_region
    _
  $region25: #{vnmt_model_forward.3} parent=0 // pred_fallthru
    _
  // Predicated region
  $region26: #{vnmt_model_forward.3} parent=0 // pred_check
    _
  $region27: #{vnmt_model_forward.3} parent=0 // pred_check_branch
    %36 = sbr.rel (0) target = $region29
  $region28: #{vnmt_model_forward.3} parent=0 // pred_region
    _
  $region29: #{vnmt_model_forward.3} parent=0 // pred_fallthru
    _
  // Predicated region
  $region30: #{vnmt_model_forward.3} parent=0 // pred_check
    _
  $region31: #{vnmt_model_forward.3} parent=0 // pred_check_branch
    %38 = sbr.rel (0) target = $region33
  $region32: #{vnmt_model_forward.3} parent=0 // pred_region
    _
  $region33: #{vnmt_model_forward.3} parent=0 // pred_fallthru
    _
  // Predicated region
  $region34: #{vnmt_model_forward.3} parent=0 // pred_check
    _
  $region35: #{vnmt_model_forward.3} parent=0 // pred_check_branch
    %40 = sbr.rel (0) target = $region37
  $region36: #{vnmt_model_forward.3} parent=0 // pred_region
    _
  $region37: #{vnmt_model_forward.3} parent=0 // pred_fallthru
    _
  // Predicated region
  $region38: #{vnmt_model_forward.3} parent=0 // pred_check
    _
  $region39: #{vnmt_model_forward.3} parent=0 // pred_check_branch
    %42 = sbr.rel (0) target = $region41
  $region40: #{vnmt_model_forward.3} parent=0 // pred_region
    _
  $region41: #{vnmt_model_forward.3} parent=0 // pred_fallthru
    _
  // Predicated region
  $region42: #{vnmt_model_forward.3} parent=0 // pred_check
    _
  $region43: #{vnmt_model_forward.3} parent=0 // pred_check_branch
    %44 = sbr.rel (0) target = $region45
  $region44: #{vnmt_model_forward.3} parent=0 // pred_region
    _
  $region45: #{vnmt_model_forward.3} parent=0 // pred_fallthru
    _
  // Predicated region
  $region46: #{vnmt_model_forward.3} parent=0 // pred_check
    _
  $region47: #{vnmt_model_forward.3} parent=0 // pred_check_branch
    %46 = sbr.rel (0) target = $region49
  $region48: #{vnmt_model_forward.3} parent=0 // pred_region
    _
  $region49: #{vnmt_model_forward.3} parent=0 // pred_fallthru
    _
  // Predicated region
  $region50: #{vnmt_model_forward.3} parent=0 // pred_check
    _
  $region51: #{vnmt_model_forward.3} parent=0 // pred_check_branch
    %48 = sbr.rel (0) target = $region53
  $region52: #{vnmt_model_forward.3} parent=0 // pred_region
    _
  $region53: #{vnmt_model_forward.3} parent=0 // pred_fallthru
    _
  // Predicated region
  $region54: #{vnmt_model_forward.3} parent=0 // pred_check
    _
  $region55: #{vnmt_model_forward.3} parent=0 // pred_check_branch
    %50 = sbr.rel (0) target = $region57
  $region56: #{vnmt_model_forward.3} parent=0 // pred_region
    _
  $region57: #{vnmt_model_forward.3} parent=0 // pred_fallthru
    _
  // Predicated region
  $region58: #{vnmt_model_forward.3} parent=0 // pred_check
    _
  $region59: #{vnmt_model_forward.3} parent=0 // pred_check_branch
    %52 = sbr.rel (0) target = $region61
  $region60: #{vnmt_model_forward.3} parent=0 // pred_region
    _
  $region61: #{vnmt_model_forward.3} parent=0 // pred_fallthru
    _
  // Predicated region
  $region62: #{vnmt_model_forward.3} parent=0 // pred_check
    _
  $region63: #{vnmt_model_forward.3} parent=0 // pred_check_branch
    %54 = sbr.rel (0) target = $region65
  $region64: #{vnmt_model_forward.3} parent=0 // pred_region
    _
  $region65: #{vnmt_model_forward.3} parent=0 // pred_fallthru
    _
  // Predicated region
  $region66: #{vnmt_model_forward.3} parent=0 // pred_check
    _
  $region67: #{vnmt_model_forward.3} parent=0 // pred_check_branch
    %56 = sbr.rel (0) target = $region69
  $region68: #{vnmt_model_forward.3} parent=0 // pred_region
    _
  $region69: #{vnmt_model_forward.3} parent=0 // pred_fallthru
    _
  // Predicated region
  $region70: #{vnmt_model_forward.3} parent=0 // pred_check
    _
  $region71: #{vnmt_model_forward.3} parent=0 // pred_check_branch
    %58 = sbr.rel (0) target = $region73
  $region72: #{vnmt_model_forward.3} parent=0 // pred_region
    _
  $region73: #{vnmt_model_forward.3} parent=0 // pred_fallthru
    _
  %v59 = vld [vmem:[%s0] sm:$0xff]
  %v60 = vld [vmem:[%s0 + $0x8] sm:$0xff]
  %v61 = vld [vmem:[%s0 + $0x10] sm:$0xff]
  %v62 = vld [vmem:[%s0 + $0x18] sm:$0xff]
  %v63 = vld [vmem:[%s0 + $0x20] sm:$0xff]
  %v64 = vld [vmem:[%s0 + $0x28] sm:$0xff]
  %v65 = vld [vmem:[%s0 + $0x30] sm:$0xff]
  %v66 = vld [vmem:[%s0 + $0x38] sm:$0xff]
  %v67 = vmax.f32 %v59, 0.0
  %v68 = vmax.f32 %v60, 0.0
  %v69 = vmax.f32 %v61, 0.0
  %v70 = vmax.f32 %v62, 0.0
  %v71 = vmax.f32 %v63, 0.0
  %v72 = vmax.f32 %v64, 0.0
  %v73 = vmax.f32 %v65, 0.0
  %v74 = vmax.f32 %v66, 0.0
  %v75 = vld [vmem:[%s1] sm:$0xff]
  %v76 = vld [vmem:[%s3] sm:$0xff]
  %v77 = vld [vmem:[%s3 + $0x8] sm:$0xff]
  %v78 = vld [vmem:[%s3 + $0x10] sm:$0xff]
  %v79 = vld [vmem:[%s3 + $0x18] sm:$0xff]
  %vm80 = vcmask 261120
  %v82 = vsel %vm80, %v67, 0
  %v85 = vsel %vm80, %v68, 0
  %v88 = vsel %vm80, %v69, 0
  %v91 = vsel %vm80, %v70, 0
  %v94 = vsel %vm80, %v71, 0
  %v97 = vsel %vm80, %v72, 0
  %v100 = vsel %vm80, %v73, 0
  %v103 = vsel %vm80, %v74, 0
  %105 = vmatprep.subr.mxu0 0.0
  %106 = vmatpush1.msra.mxu0 %v76
  %107 = vmatprep.subr.mxu0 0.0
  %108 = vmatpush1.msra.mxu0 %v77
  %109 = vmatprep.subr.mxu0 0.0
  %110 = vmatpush1.msra.mxu0 %v78
  %111 = vmatprep.subr.mxu0 0.0
  %112 = vmatpush1.msra.mxu0 %v79
  %113 = vmatprep.subr.mxu0 0.0
  %114 = vmatpush1.msra.mxu0 0.0
  %115 = vmatprep.subr.mxu0 0.0
  %116 = vmatpush1.msra.mxu0 0.0
  %117 = vmatprep.subr.mxu0 0.0
  %118 = vmatpush1.msra.mxu0 0.0
  %119 = vmatprep.subr.mxu0 0.0
  %120 = vmatpush1.msra.mxu0 0.0
  %121 = vmatprep.subr.mxu0 0.0
  %122 = vmatpush1.msra.mxu0 0.0
  %123 = vmatprep.subr.mxu0 0.0
  %124 = vmatpush1.msra.mxu0 0.0
  %125 = vmatprep.subr.mxu0 0.0
  %126 = vmatpush1.msra.mxu0 0.0
  %127 = vmatprep.subr.mxu0 0.0
  %128 = vmatpush1.msra.mxu0 0.0
  %129 = vmatprep.subr.mxu0 0.0
  %130 = vmatpush1.msra.mxu0 0.0
  %131 = vmatprep.subr.mxu0 0.0
  %132 = vmatpush1.msra.mxu0 0.0
  %133 = vmatprep.subr.mxu0 0.0
  %134 = vmatpush1.msra.mxu0 0.0
  %135 = vmatprep.subr.mxu0 0.0
  %136 = vmatpush1.msra.mxu0 0.0
  %137 = vmatprep.subr.mxu0 0.0
  %138 = vmatpush1.msra.mxu0 0.0
  %139 = vmatprep.subr.mxu0 0.0
  %140 = vmatpush1.msra.mxu0 0.0
  %141 = vmatprep.subr.mxu0 0.0
  %142 = vmatpush1.msra.mxu0 0.0
  %143 = vmatprep.subr.mxu0 0.0
  %144 = vmatpush1.msra.mxu0 0.0
  %145 = vmatprep.subr.mxu0 0.0
  %146 = vmatpush1.msra.mxu0 0.0
  %147 = vmatprep.subr.mxu0 0.0
  %148 = vmatpush1.msra.mxu0 0.0
  %149 = vmatprep.subr.mxu0 0.0
  %150 = vmatpush1.msra.mxu0 0.0
  %151 = vmatprep.subr.mxu0 0.0
  %152 = vmatpush1.msra.mxu0 0.0
  %153 = vmatprep.subr.mxu0 0.0
  %154 = vmatpush1.msra.mxu0 0.0
  %155 = vmatprep.subr.mxu0 0.0
  %156 = vmatpush1.msra.mxu0 0.0
  %157 = vmatprep.subr.mxu0 0.0
  %158 = vmatpush1.msra.mxu0 0.0
  %159 = vmatprep.subr.mxu0 0.0
  %160 = vmatpush1.msra.mxu0 0.0
  %161 = vmatprep.subr.mxu0 0.0
  %162 = vmatpush1.msra.mxu0 0.0
  %163 = vmatprep.subr.mxu0 0.0
  %164 = vmatpush1.msra.mxu0 0.0
  %165 = vmatprep.subr.mxu0 0.0
  %166 = vmatpush1.msra.mxu0 0.0
  %167 = vmatprep.subr.mxu0 0.0
  %168 = vmatpush1.msra.mxu0 0.0
  %169 = vmatprep.mubr.f32.mxu0 0.0
  %170 = vmatmul.mubr.f32.gmra.mrb[0].mxu0 %v82
  %v171 = vpop.f32.mrb[0].mxu0
  %v172 = vadd.f32 0.0, %v171
  %v173 = vpop.f32.mrb[0].mxu0
  %174 = vmatprep.mubr.f32.mxu0 0.0
  %175 = vmatmul.mubr.f32.gmra.mrb[0].mxu0 %v85
  %v176 = vpop.f32.mrb[0].mxu0
  %v177 = vadd.f32 0.0, %v176
  %v178 = vpop.f32.mrb[0].mxu0
  %179 = vmatprep.mubr.f32.mxu0 0.0
  %180 = vmatmul.mubr.f32.gmra.mrb[0].mxu0 %v88
  %v181 = vpop.f32.mrb[0].mxu0
  %v182 = vadd.f32 0.0, %v181
  %v183 = vpop.f32.mrb[0].mxu0
  %184 = vmatprep.mubr.f32.mxu0 0.0
  %185 = vmatmul.mubr.f32.gmra.mrb[0].mxu0 %v91
  %v186 = vpop.f32.mrb[0].mxu0
  %v187 = vadd.f32 0.0, %v186
  %v188 = vpop.f32.mrb[0].mxu0
  %189 = vmatprep.mubr.f32.mxu0 0.0
  %190 = vmatmul.mubr.f32.gmra.mrb[0].mxu0 %v94
  %v191 = vpop.f32.mrb[0].mxu0
  %v192 = vadd.f32 0.0, %v191
  %v193 = vpop.f32.mrb[0].mxu0
  %194 = vmatprep.mubr.f32.mxu0 0.0
  %195 = vmatmul.mubr.f32.gmra.mrb[0].mxu0 %v97
  %v196 = vpop.f32.mrb[0].mxu0
  %v197 = vadd.f32 0.0, %v196
  %v198 = vpop.f32.mrb[0].mxu0
  %199 = vmatprep.mubr.f32.mxu0 0.0
  %200 = vmatmul.mubr.f32.gmra.mrb[0].mxu0 %v100
  %v201 = vpop.f32.mrb[0].mxu0
  %v202 = vadd.f32 0.0, %v201
  %v203 = vpop.f32.mrb[0].mxu0
  %204 = vmatprep.mubr.f32.mxu0 0.0
  %205 = vmatmul.mubr.f32.gmra.mrb[0].mxu0 %v103
  %v206 = vpop.f32.mrb[0].mxu0
  %v207 = vadd.f32 0.0, %v206
  %v208 = vpop.f32.mrb[0].mxu0
  %209 = vdwg.mxu0
  %210 = vst.msk [vmem:[#allocation2] sm:$0xff] %vm80, %v172
  %211 = vst.msk [vmem:[#allocation2 + $0x8] sm:$0xff] %vm80, %v177
  %212 = vst.msk [vmem:[#allocation2 + $0x10] sm:$0xff] %vm80, %v182
  %213 = vst.msk [vmem:[#allocation2 + $0x18] sm:$0xff] %vm80, %v187
  %214 = vst.msk [vmem:[#allocation2 + $0x20] sm:$0xff] %vm80, %v192
  %215 = vst.msk [vmem:[#allocation2 + $0x28] sm:$0xff] %vm80, %v197
  %216 = vst.msk [vmem:[#allocation2 + $0x30] sm:$0xff] %vm80, %v202
  %217 = vst.msk [vmem:[#allocation2 + $0x38] sm:$0xff] %vm80, %v207
  %v218 = vld [vmem:[%s4] sm:$0xff]
  %v219 = vld [vmem:[%s4 + $0x8] sm:$0xff]
  %v220 = vld [vmem:[%s4 + $0x10] sm:$0xff]
  %v221 = vld [vmem:[%s4 + $0x18] sm:$0xff]
  %222 = vmatprep.subr.mxu0 0.0
  %223 = vmatpush1.msra.mxu0 %v218
  %224 = vmatprep.subr.mxu0 0.0
  %225 = vmatpush1.msra.mxu0 %v219
  %226 = vmatprep.subr.mxu0 0.0
  %227 = vmatpush1.msra.mxu0 %v220
  %228 = vmatprep.subr.mxu0 0.0
  %229 = vmatpush1.msra.mxu0 %v221
  %230 = vmatprep.subr.mxu0 0.0
  %231 = vmatpush1.msra.mxu0 0.0
  %232 = vmatprep.subr.mxu0 0.0
  %233 = vmatpush1.msra.mxu0 0.0
  %234 = vmatprep.subr.mxu0 0.0
  %235 = vmatpush1.msra.mxu0 0.0
  %236 = vmatprep.subr.mxu0 0.0
  %237 = vmatpush1.msra.mxu0 0.0
  %238 = vmatprep.subr.mxu0 0.0
  %239 = vmatpush1.msra.mxu0 0.0
  %240 = vmatprep.subr.mxu0 0.0
  %241 = vmatpush1.msra.mxu0 0.0
  %242 = vmatprep.subr.mxu0 0.0
  %243 = vmatpush1.msra.mxu0 0.0
  %244 = vmatprep.subr.mxu0 0.0
  %245 = vmatpush1.msra.mxu0 0.0
  %246 = vmatprep.subr.mxu0 0.0
  %247 = vmatpush1.msra.mxu0 0.0
  %248 = vmatprep.subr.mxu0 0.0
  %249 = vmatpush1.msra.mxu0 0.0
  %250 = vmatprep.subr.mxu0 0.0
  %251 = vmatpush1.msra.mxu0 0.0
  %252 = vmatprep.subr.mxu0 0.0
  %253 = vmatpush1.msra.mxu0 0.0
  %254 = vmatprep.subr.mxu0 0.0
  %255 = vmatpush1.msra.mxu0 0.0
  %256 = vmatprep.subr.mxu0 0.0
  %257 = vmatpush1.msra.mxu0 0.0
  %258 = vmatprep.subr.mxu0 0.0
  %259 = vmatpush1.msra.mxu0 0.0
  %260 = vmatprep.subr.mxu0 0.0
  %261 = vmatpush1.msra.mxu0 0.0
  %262 = vmatprep.subr.mxu0 0.0
  %263 = vmatpush1.msra.mxu0 0.0
  %264 = vmatprep.subr.mxu0 0.0
  %265 = vmatpush1.msra.mxu0 0.0
  %266 = vmatprep.subr.mxu0 0.0
  %267 = vmatpush1.msra.mxu0 0.0
  %268 = vmatprep.subr.mxu0 0.0
  %269 = vmatpush1.msra.mxu0 0.0
  %270 = vmatprep.subr.mxu0 0.0
  %271 = vmatpush1.msra.mxu0 0.0
  %272 = vmatprep.subr.mxu0 0.0
  %273 = vmatpush1.msra.mxu0 0.0
  %274 = vmatprep.subr.mxu0 0.0
  %275 = vmatpush1.msra.mxu0 0.0
  %276 = vmatprep.subr.mxu0 0.0
  %277 = vmatpush1.msra.mxu0 0.0
  %278 = vmatprep.subr.mxu0 0.0
  %279 = vmatpush1.msra.mxu0 0.0
  %280 = vmatprep.subr.mxu0 0.0
  %281 = vmatpush1.msra.mxu0 0.0
  %282 = vmatprep.subr.mxu0 0.0
  %283 = vmatpush1.msra.mxu0 0.0
  %284 = vmatprep.subr.mxu0 0.0
  %285 = vmatpush1.msra.mxu0 0.0
  %286 = vmatprep.mubr.f32.mxu0 0.0
  %287 = vmatmul.mubr.f32.gmra.mrb[0].mxu0 %v82
  %v288 = vpop.f32.mrb[0].mxu0
  %v289 = vadd.f32 0.0, %v288
  %v290 = vpop.f32.mrb[0].mxu0
  %291 = vmatprep.mubr.f32.mxu0 0.0
  %292 = vmatmul.mubr.f32.gmra.mrb[0].mxu0 %v85
  %v293 = vpop.f32.mrb[0].mxu0
  %v294 = vadd.f32 0.0, %v293
  %v295 = vpop.f32.mrb[0].mxu0
  %296 = vmatprep.mubr.f32.mxu0 0.0
  %297 = vmatmul.mubr.f32.gmra.mrb[0].mxu0 %v88
  %v298 = vpop.f32.mrb[0].mxu0
  %v299 = vadd.f32 0.0, %v298
  %v300 = vpop.f32.mrb[0].mxu0
  %301 = vmatprep.mubr.f32.mxu0 0.0
  %302 = vmatmul.mubr.f32.gmra.mrb[0].mxu0 %v91
  %v303 = vpop.f32.mrb[0].mxu0
  %v304 = vadd.f32 0.0, %v303
  %v305 = vpop.f32.mrb[0].mxu0
  %306 = vmatprep.mubr.f32.mxu0 0.0
  %307 = vmatmul.mubr.f32.gmra.mrb[0].mxu0 %v94
  %v308 = vpop.f32.mrb[0].mxu0
  %v309 = vadd.f32 0.0, %v308
  %v310 = vpop.f32.mrb[0].mxu0
  %311 = vmatprep.mubr.f32.mxu0 0.0
  %312 = vmatmul.mubr.f32.gmra.mrb[0].mxu0 %v97
  %v313 = vpop.f32.mrb[0].mxu0
  %v314 = vadd.f32 0.0, %v313
  %v315 = vpop.f32.mrb[0].mxu0
  %316 = vmatprep.mubr.f32.mxu0 0.0
  %317 = vmatmul.mubr.f32.gmra.mrb[0].mxu0 %v100
  %v318 = vpop.f32.mrb[0].mxu0
  %v319 = vadd.f32 0.0, %v318
  %v320 = vpop.f32.mrb[0].mxu0
  %321 = vmatprep.mubr.f32.mxu0 0.0
  %322 = vmatmul.mubr.f32.gmra.mrb[0].mxu0 %v103
  %v323 = vpop.f32.mrb[0].mxu0
  %v324 = vadd.f32 0.0, %v323
  %v325 = vpop.f32.mrb[0].mxu0
  %326 = vdwg.mxu0
  %327 = vst.msk [vmem:[#allocation3] sm:$0xff] %vm80, %v289
  %328 = vst.msk [vmem:[#allocation3 + $0x8] sm:$0xff] %vm80, %v294
  %329 = vst.msk [vmem:[#allocation3 + $0x10] sm:$0xff] %vm80, %v299
  %330 = vst.msk [vmem:[#allocation3 + $0x18] sm:$0xff] %vm80, %v304
  %331 = vst.msk [vmem:[#allocation3 + $0x20] sm:$0xff] %vm80, %v309
  %332 = vst.msk [vmem:[#allocation3 + $0x28] sm:$0xff] %vm80, %v314
  %333 = vst.msk [vmem:[#allocation3 + $0x30] sm:$0xff] %vm80, %v319
  %334 = vst.msk [vmem:[#allocation3 + $0x38] sm:$0xff] %vm80, %v324
  %v335 = vld [vmem:[%s5] sm:$0xff]
  %v336 = vld [vmem:[%s5 + $0x8] sm:$0xff]
  %v337 = vld [vmem:[%s5 + $0x10] sm:$0xff]
  %v338 = vld [vmem:[%s5 + $0x18] sm:$0xff]
  %339 = vmatprep.subr.mxu0 0.0
  %340 = vmatpush1.msra.mxu0 %v335
  %341 = vmatprep.subr.mxu0 0.0
  %342 = vmatpush1.msra.mxu0 %v336
  %343 = vmatprep.subr.mxu0 0.0
  %344 = vmatpush1.msra.mxu0 %v337
  %345 = vmatprep.subr.mxu0 0.0
  %346 = vmatpush1.msra.mxu0 %v338
  %347 = vmatprep.subr.mxu0 0.0
  %348 = vmatpush1.msra.mxu0 0.0
  %349 = vmatprep.subr.mxu0 0.0
  %350 = vmatpush1.msra.mxu0 0.0
  %351 = vmatprep.subr.mxu0 0.0
  %352 = vmatpush1.msra.mxu0 0.0
  %353 = vmatprep.subr.mxu0 0.0
  %354 = vmatpush1.msra.mxu0 0.0
  %355 = vmatprep.subr.mxu0 0.0
  %356 = vmatpush1.msra.mxu0 0.0
  %357 = vmatprep.subr.mxu0 0.0
  %358 = vmatpush1.msra.mxu0 0.0
  %359 = vmatprep.subr.mxu0 0.0
  %360 = vmatpush1.msra.mxu0 0.0
  %361 = vmatprep.subr.mxu0 0.0
  %362 = vmatpush1.msra.mxu0 0.0
  %363 = vmatprep.subr.mxu0 0.0
  %364 = vmatpush1.msra.mxu0 0.0
  %365 = vmatprep.subr.mxu0 0.0
  %366 = vmatpush1.msra.mxu0 0.0
  %367 = vmatprep.subr.mxu0 0.0
  %368 = vmatpush1.msra.mxu0 0.0
  %369 = vmatprep.subr.mxu0 0.0
  %370 = vmatpush1.msra.mxu0 0.0
  %371 = vmatprep.subr.mxu0 0.0
  %372 = vmatpush1.msra.mxu0 0.0
  %373 = vmatprep.subr.mxu0 0.0
  %374 = vmatpush1.msra.mxu0 0.0
  %375 = vmatprep.subr.mxu0 0.0
  %376 = vmatpush1.msra.mxu0 0.0
  %377 = vmatprep.subr.mxu0 0.0
  %378 = vmatpush1.msra.mxu0 0.0
  %379 = vmatprep.subr.mxu0 0.0
  %380 = vmatpush1.msra.mxu0 0.0
  %381 = vmatprep.subr.mxu0 0.0
  %382 = vmatpush1.msra.mxu0 0.0
  %383 = vmatprep.subr.mxu0 0.0
  %384 = vmatpush1.msra.mxu0 0.0
  %385 = vmatprep.subr.mxu0 0.0
  %386 = vmatpush1.msra.mxu0 0.0
  %387 = vmatprep.subr.mxu0 0.0
  %388 = vmatpush1.msra.mxu0 0.0
  %389 = vmatprep.subr.mxu0 0.0
  %390 = vmatpush1.msra.mxu0 0.0
  %391 = vmatprep.subr.mxu0 0.0
  %392 = vmatpush1.msra.mxu0 0.0
  %393 = vmatprep.subr.mxu0 0.0
  %394 = vmatpush1.msra.mxu0 0.0
  %395 = vmatprep.subr.mxu0 0.0
  %396 = vmatpush1.msra.mxu0 0.0
  %397 = vmatprep.subr.mxu0 0.0
  %398 = vmatpush1.msra.mxu0 0.0
  %399 = vmatprep.subr.mxu0 0.0
  %400 = vmatpush1.msra.mxu0 0.0
  %401 = vmatprep.subr.mxu0 0.0
  %402 = vmatpush1.msra.mxu0 0.0
  %403 = vmatprep.mubr.f32.mxu0 0.0
  %404 = vmatmul.mubr.f32.gmra.mrb[0].mxu0 %v82
  %v405 = vpop.f32.mrb[0].mxu0
  %v406 = vadd.f32 0.0, %v405
  %v407 = vpop.f32.mrb[0].mxu0
  %408 = vmatprep.mubr.f32.mxu0 0.0
  %409 = vmatmul.mubr.f32.gmra.mrb[0].mxu0 %v85
  %v410 = vpop.f32.mrb[0].mxu0
  %v411 = vadd.f32 0.0, %v410
  %v412 = vpop.f32.mrb[0].mxu0
  %413 = vmatprep.mubr.f32.mxu0 0.0
  %414 = vmatmul.mubr.f32.gmra.mrb[0].mxu0 %v88
  %v415 = vpop.f32.mrb[0].mxu0
  %v416 = vadd.f32 0.0, %v415
  %v417 = vpop.f32.mrb[0].mxu0
  %418 = vmatprep.mubr.f32.mxu0 0.0
  %419 = vmatmul.mubr.f32.gmra.mrb[0].mxu0 %v91
  %v420 = vpop.f32.mrb[0].mxu0
  %v421 = vadd.f32 0.0, %v420
  %v422 = vpop.f32.mrb[0].mxu0
  %423 = vmatprep.mubr.f32.mxu0 0.0
  %424 = vmatmul.mubr.f32.gmra.mrb[0].mxu0 %v94
  %v425 = vpop.f32.mrb[0].mxu0
  %v426 = vadd.f32 0.0, %v425
  %v427 = vpop.f32.mrb[0].mxu0
  %428 = vmatprep.mubr.f32.mxu0 0.0
  %429 = vmatmul.mubr.f32.gmra.mrb[0].mxu0 %v97
  %v430 = vpop.f32.mrb[0].mxu0
  %v431 = vadd.f32 0.0, %v430
  %v432 = vpop.f32.mrb[0].mxu0
  %433 = vmatprep.mubr.f32.mxu0 0.0
  %434 = vmatmul.mubr.f32.gmra.mrb[0].mxu0 %v100
  %v435 = vpop.f32.mrb[0].mxu0
  %v436 = vadd.f32 0.0, %v435
  %v437 = vpop.f32.mrb[0].mxu0
  %438 = vmatprep.mubr.f32.mxu0 0.0
  %439 = vmatmul.mubr.f32.gmra.mrb[0].mxu0 %v103
  %v440 = vpop.f32.mrb[0].mxu0
  %v441 = vadd.f32 0.0, %v440
  %v442 = vpop.f32.mrb[0].mxu0
  %443 = vdwg.mxu0
  %444 = vst.msk [vmem:[#allocation4] sm:$0xff] %vm80, %v406
  %445 = vst.msk [vmem:[#allocation4 + $0x8] sm:$0xff] %vm80, %v411
  %446 = vst.msk [vmem:[#allocation4 + $0x10] sm:$0xff] %vm80, %v416
  %447 = vst.msk [vmem:[#allocation4 + $0x18] sm:$0xff] %vm80, %v421
  %448 = vst.msk [vmem:[#allocation4 + $0x20] sm:$0xff] %vm80, %v426
  %449 = vst.msk [vmem:[#allocation4 + $0x28] sm:$0xff] %vm80, %v431
  %450 = vst.msk [vmem:[#allocation4 + $0x30] sm:$0xff] %vm80, %v436
  %451 = vst.msk [vmem:[#allocation4 + $0x38] sm:$0xff] %vm80, %v441
  %v452 = vld [vmem:[%s6] sm:$0xff]
  %v453 = vld [vmem:[%s6 + $0x8] sm:$0xff]
  %v454 = vld [vmem:[%s6 + $0x10] sm:$0xff]
  %v455 = vld [vmem:[%s6 + $0x18] sm:$0xff]
  %v456 = vld [vmem:[%s12] sm:$0x1]
  %v458 = vlaneseq
  %v459 = vshrl.u32 %v458, 7
  %v460 = vsub.s32 0, %v459
  %v461 = vrot.slane %v456, %v460
  %v464 = vsel %vm80, %v75, 0
  %466 = vmatprep.subr.mxu0 0.0
  %467 = vmatpush1.msra.mxu0 %v452
  %468 = vmatprep.subr.mxu0 0.0
  %469 = vmatpush1.msra.mxu0 %v453
  %470 = vmatprep.subr.mxu0 0.0
  %471 = vmatpush1.msra.mxu0 %v454
  %472 = vmatprep.subr.mxu0 0.0
  %473 = vmatpush1.msra.mxu0 %v455
  %474 = vmatprep.subr.mxu0 0.0
  %475 = vmatpush1.msra.mxu0 0.0
  %476 = vmatprep.subr.mxu0 0.0
  %477 = vmatpush1.msra.mxu0 0.0
  %478 = vmatprep.subr.mxu0 0.0
  %479 = vmatpush1.msra.mxu0 0.0
  %480 = vmatprep.subr.mxu0 0.0
  %481 = vmatpush1.msra.mxu0 0.0
  %482 = vmatprep.subr.mxu0 0.0
  %483 = vmatpush1.msra.mxu0 0.0
  %484 = vmatprep.subr.mxu0 0.0
  %485 = vmatpush1.msra.mxu0 0.0
  %486 = vmatprep.subr.mxu0 0.0
  %487 = vmatpush1.msra.mxu0 0.0
  %488 = vmatprep.subr.mxu0 0.0
  %489 = vmatpush1.msra.mxu0 0.0
  %490 = vmatprep.subr.mxu0 0.0
  %491 = vmatpush1.msra.mxu0 0.0
  %492 = vmatprep.subr.mxu0 0.0
  %493 = vmatpush1.msra.mxu0 0.0
  %494 = vmatprep.subr.mxu0 0.0
  %495 = vmatpush1.msra.mxu0 0.0
  %496 = vmatprep.subr.mxu0 0.0
  %497 = vmatpush1.msra.mxu0 0.0
  %498 = vmatprep.subr.mxu0 0.0
  %499 = vmatpush1.msra.mxu0 0.0
  %500 = vmatprep.subr.mxu0 0.0
  %501 = vmatpush1.msra.mxu0 0.0
  %502 = vmatprep.subr.mxu0 0.0
  %503 = vmatpush1.msra.mxu0 0.0
  %504 = vmatprep.subr.mxu0 0.0
  %505 = vmatpush1.msra.mxu0 0.0
  %506 = vmatprep.subr.mxu0 0.0
  %507 = vmatpush1.msra.mxu0 0.0
  %508 = vmatprep.subr.mxu0 0.0
  %509 = vmatpush1.msra.mxu0 0.0
  %510 = vmatprep.subr.mxu0 0.0
  %511 = vmatpush1.msra.mxu0 0.0
  %512 = vmatprep.subr.mxu0 0.0
  %513 = vmatpush1.msra.mxu0 0.0
  %514 = vmatprep.subr.mxu0 0.0
  %515 = vmatpush1.msra.mxu0 0.0
  %516 = vmatprep.subr.mxu0 0.0
  %517 = vmatpush1.msra.mxu0 0.0
  %518 = vmatprep.subr.mxu0 0.0
  %519 = vmatpush1.msra.mxu0 0.0
  %520 = vmatprep.subr.mxu0 0.0
  %521 = vmatpush1.msra.mxu0 0.0
  %522 = vmatprep.subr.mxu0 0.0
  %523 = vmatpush1.msra.mxu0 0.0
  %524 = vmatprep.subr.mxu0 0.0
  %525 = vmatpush1.msra.mxu0 0.0
  %526 = vmatprep.subr.mxu0 0.0
  %527 = vmatpush1.msra.mxu0 0.0
  %528 = vmatprep.subr.mxu0 0.0
  %529 = vmatpush1.msra.mxu0 0.0
  %530 = vmatprep.mubr.f32.mxu0 0.0
  %531 = vmatmul.mubr.f32.gmra.mrb[0].mxu0 %v464
  %v532 = vpop.f32.mrb[0].mxu0
  %v533 = vadd.f32 %v461, %v532
  %v534 = vpop.f32.mrb[0].mxu0
  %535 = vdwg.mxu0
  %v536 = vld [vmem:[%s7] sm:$0xff]
  %v537 = vld [vmem:[%s7 + $0x8] sm:$0xff]
  %v538 = vld [vmem:[%s7 + $0x10] sm:$0xff]
  %v539 = vld [vmem:[%s7 + $0x18] sm:$0xff]
  %v540 = vld [vmem:[%s13] sm:$0x1]
  %v542 = vlaneseq
  %v543 = vshrl.u32 %v542, 7
  %v544 = vsub.s32 0, %v543
  %v545 = vrot.slane %v540, %v544
  %547 = vmatprep.subr.mxu0 0.0
  %548 = vmatpush1.msra.mxu0 %v536
  %549 = vmatprep.subr.mxu0 0.0
  %550 = vmatpush1.msra.mxu0 %v537
  %551 = vmatprep.subr.mxu0 0.0
  %552 = vmatpush1.msra.mxu0 %v538
  %553 = vmatprep.subr.mxu0 0.0
  %554 = vmatpush1.msra.mxu0 %v539
  %555 = vmatprep.subr.mxu0 0.0
  %556 = vmatpush1.msra.mxu0 0.0
  %557 = vmatprep.subr.mxu0 0.0
  %558 = vmatpush1.msra.mxu0 0.0
  %559 = vmatprep.subr.mxu0 0.0
  %560 = vmatpush1.msra.mxu0 0.0
  %561 = vmatprep.subr.mxu0 0.0
  %562 = vmatpush1.msra.mxu0 0.0
  %563 = vmatprep.subr.mxu0 0.0
  %564 = vmatpush1.msra.mxu0 0.0
  %565 = vmatprep.subr.mxu0 0.0
  %566 = vmatpush1.msra.mxu0 0.0
  %567 = vmatprep.subr.mxu0 0.0
  %568 = vmatpush1.msra.mxu0 0.0
  %569 = vmatprep.subr.mxu0 0.0
  %570 = vmatpush1.msra.mxu0 0.0
  %571 = vmatprep.subr.mxu0 0.0
  %572 = vmatpush1.msra.mxu0 0.0
  %573 = vmatprep.subr.mxu0 0.0
  %574 = vmatpush1.msra.mxu0 0.0
  %575 = vmatprep.subr.mxu0 0.0
  %576 = vmatpush1.msra.mxu0 0.0
  %577 = vmatprep.subr.mxu0 0.0
  %578 = vmatpush1.msra.mxu0 0.0
  %579 = vmatprep.subr.mxu0 0.0
  %580 = vmatpush1.msra.mxu0 0.0
  %581 = vmatprep.subr.mxu0 0.0
  %582 = vmatpush1.msra.mxu0 0.0
  %583 = vmatprep.subr.mxu0 0.0
  %584 = vmatpush1.msra.mxu0 0.0
  %585 = vmatprep.subr.mxu0 0.0
  %586 = vmatpush1.msra.mxu0 0.0
  %587 = vmatprep.subr.mxu0 0.0
  %588 = vmatpush1.msra.mxu0 0.0
  %589 = vmatprep.subr.mxu0 0.0
  %590 = vmatpush1.msra.mxu0 0.0
  %591 = vmatprep.subr.mxu0 0.0
  %592 = vmatpush1.msra.mxu0 0.0
  %593 = vmatprep.subr.mxu0 0.0
  %594 = vmatpush1.msra.mxu0 0.0
  %595 = vmatprep.subr.mxu0 0.0
  %596 = vmatpush1.msra.mxu0 0.0
  %597 = vmatprep.subr.mxu0 0.0
  %598 = vmatpush1.msra.mxu0 0.0
  %599 = vmatprep.subr.mxu0 0.0
  %600 = vmatpush1.msra.mxu0 0.0
  %601 = vmatprep.subr.mxu0 0.0
  %602 = vmatpush1.msra.mxu0 0.0
  %603 = vmatprep.subr.mxu0 0.0
  %604 = vmatpush1.msra.mxu0 0.0
  %605 = vmatprep.subr.mxu0 0.0
  %606 = vmatpush1.msra.mxu0 0.0
  %607 = vmatprep.subr.mxu0 0.0
  %608 = vmatpush1.msra.mxu0 0.0
  %609 = vmatprep.subr.mxu0 0.0
  %610 = vmatpush1.msra.mxu0 0.0
  %611 = vmatprep.mubr.f32.mxu0 0.0
  %612 = vmatmul.mubr.f32.gmra.mrb[0].mxu0 %v464
  %v613 = vpop.f32.mrb[0].mxu0
  %v614 = vadd.f32 %v545, %v613
  %v615 = vpop.f32.mrb[0].mxu0
  %616 = vdwg.mxu0
  %v617 = vld [vmem:[%s8] sm:$0xff]
  %v618 = vld [vmem:[%s8 + $0x8] sm:$0xff]
  %v619 = vld [vmem:[%s8 + $0x10] sm:$0xff]
  %v620 = vld [vmem:[%s8 + $0x18] sm:$0xff]
  %v621 = vld [vmem:[%s14] sm:$0x1]
  %v623 = vlaneseq
  %v624 = vshrl.u32 %v623, 7
  %v625 = vsub.s32 0, %v624
  %v626 = vrot.slane %v621, %v625
  %628 = vmatprep.subr.mxu0 0.0
  %629 = vmatpush1.msra.mxu0 %v617
  %630 = vmatprep.subr.mxu0 0.0
  %631 = vmatpush1.msra.mxu0 %v618
  %632 = vmatprep.subr.mxu0 0.0
  %633 = vmatpush1.msra.mxu0 %v619
  %634 = vmatprep.subr.mxu0 0.0
  %635 = vmatpush1.msra.mxu0 %v620
  %636 = vmatprep.subr.mxu0 0.0
  %637 = vmatpush1.msra.mxu0 0.0
  %638 = vmatprep.subr.mxu0 0.0
  %639 = vmatpush1.msra.mxu0 0.0
  %640 = vmatprep.subr.mxu0 0.0
  %641 = vmatpush1.msra.mxu0 0.0
  %642 = vmatprep.subr.mxu0 0.0
  %643 = vmatpush1.msra.mxu0 0.0
  %644 = vmatprep.subr.mxu0 0.0
  %645 = vmatpush1.msra.mxu0 0.0
  %646 = vmatprep.subr.mxu0 0.0
  %647 = vmatpush1.msra.mxu0 0.0
  %648 = vmatprep.subr.mxu0 0.0
  %649 = vmatpush1.msra.mxu0 0.0
  %650 = vmatprep.subr.mxu0 0.0
  %651 = vmatpush1.msra.mxu0 0.0
  %652 = vmatprep.subr.mxu0 0.0
  %653 = vmatpush1.msra.mxu0 0.0
  %654 = vmatprep.subr.mxu0 0.0
  %655 = vmatpush1.msra.mxu0 0.0
  %656 = vmatprep.subr.mxu0 0.0
  %657 = vmatpush1.msra.mxu0 0.0
  %658 = vmatprep.subr.mxu0 0.0
  %659 = vmatpush1.msra.mxu0 0.0
  %660 = vmatprep.subr.mxu0 0.0
  %661 = vmatpush1.msra.mxu0 0.0
  %662 = vmatprep.subr.mxu0 0.0
  %663 = vmatpush1.msra.mxu0 0.0
  %664 = vmatprep.subr.mxu0 0.0
  %665 = vmatpush1.msra.mxu0 0.0
  %666 = vmatprep.subr.mxu0 0.0
  %667 = vmatpush1.msra.mxu0 0.0
  %668 = vmatprep.subr.mxu0 0.0
  %669 = vmatpush1.msra.mxu0 0.0
  %670 = vmatprep.subr.mxu0 0.0
  %671 = vmatpush1.msra.mxu0 0.0
  %672 = vmatprep.subr.mxu0 0.0
  %673 = vmatpush1.msra.mxu0 0.0
  %674 = vmatprep.subr.mxu0 0.0
  %675 = vmatpush1.msra.mxu0 0.0
  %676 = vmatprep.subr.mxu0 0.0
  %677 = vmatpush1.msra.mxu0 0.0
  %678 = vmatprep.subr.mxu0 0.0
  %679 = vmatpush1.msra.mxu0 0.0
  %680 = vmatprep.subr.mxu0 0.0
  %681 = vmatpush1.msra.mxu0 0.0
  %682 = vmatprep.subr.mxu0 0.0
  %683 = vmatpush1.msra.mxu0 0.0
  %684 = vmatprep.subr.mxu0 0.0
  %685 = vmatpush1.msra.mxu0 0.0
  %686 = vmatprep.subr.mxu0 0.0
  %687 = vmatpush1.msra.mxu0 0.0
  %688 = vmatprep.subr.mxu0 0.0
  %689 = vmatpush1.msra.mxu0 0.0
  %690 = vmatprep.subr.mxu0 0.0
  %691 = vmatpush1.msra.mxu0 0.0
  %692 = vmatprep.mubr.f32.mxu0 0.0
  %693 = vmatmul.mubr.f32.gmra.mrb[0].mxu0 %v464
  %v694 = vpop.f32.mrb[0].mxu0
  %v695 = vadd.f32 %v626, %v694
  %v696 = vpop.f32.mrb[0].mxu0
  %697 = vdwg.mxu0
  %v698 = vld [vmem:[%s9] sm:$0xff]
  %v699 = vld [vmem:[%s9 + $0x8] sm:$0xff]
  %v700 = vld [vmem:[%s9 + $0x10] sm:$0xff]
  %v701 = vld [vmem:[%s9 + $0x18] sm:$0xff]
  %v702 = vld [vmem:[%s10] sm:$0xff]
  %v703 = vld [vmem:[%s10 + $0x8] sm:$0xff]
  %v704 = vld [vmem:[%s10 + $0x10] sm:$0xff]
  %v705 = vld [vmem:[%s10 + $0x18] sm:$0xff]
  %v706 = vld [vmem:[%s11] sm:$0xff]
  %v707 = vld [vmem:[%s11 + $0x8] sm:$0xff]
  %v708 = vld [vmem:[%s11 + $0x10] sm:$0xff]
  %v709 = vld [vmem:[%s11 + $0x18] sm:$0xff]
  %v710 = vld [vmem:[%s15] sm:$0x1]
  %v711 = vld [vmem:[%s2] sm:$0xff]
  %712 = vst.msk [vmem:[#allocation6] sm:$0xff] %vm80, %v711
  loop: start=0, step=1, limit=8
  $region74: #{vnmt_model_forward.3} parent=0 // loop_pre_header
    _
  $region75: #{vnmt_model_forward.3} parent=0 // loop_header
    %s714 = sphi 0, %s718
    %p715 = scmp.ge.s32.totalorder %s714, 8
  $region76: #{vnmt_model_forward.3} parent=0 // loop_header_branch
    %717 = sbr.rel (%p715) target = $region80
  $region77: #{vnmt_model_forward.3} parent=0 // loop_body
    %s719 = smul.u32 %s714, 8
    %s720 = scalar_lea.vmem [#allocation2], %s719
    %v721 = vld [vmem:[%s720] sm:$0xff]
    %v722 = vadd.f32 %v721, %v533
    %s723 = scalar_lea.vmem [#allocation3], %s719
    %v724 = vld [vmem:[%s723] sm:$0xff]
    %v725 = vadd.f32 %v724, %v614
    %s726 = scalar_lea.vmem [#allocation4], %s719
    %v727 = vld [vmem:[%s726] sm:$0xff]
    %v728 = vadd.f32 %v727, %v695
    %v729 = vld [vmem:[#allocation6] sm:$0xff]
    %v731 = vsel %vm80, %v729, 0
    %733 = vmatprep.subr.mxu0 0.0
    %734 = vmatpush1.msra.mxu0 %v698
    %735 = vmatprep.subr.mxu0 0.0
    %736 = vmatpush1.msra.mxu0 %v699
    %737 = vmatprep.subr.mxu0 0.0
    %738 = vmatpush1.msra.mxu0 %v700
    %739 = vmatprep.subr.mxu0 0.0
    %740 = vmatpush1.msra.mxu0 %v701
    %741 = vmatprep.subr.mxu0 0.0
    %742 = vmatpush1.msra.mxu0 0.0
    %743 = vmatprep.subr.mxu0 0.0
    %744 = vmatpush1.msra.mxu0 0.0
    %745 = vmatprep.subr.mxu0 0.0
    %746 = vmatpush1.msra.mxu0 0.0
    %747 = vmatprep.subr.mxu0 0.0
    %748 = vmatpush1.msra.mxu0 0.0
    %749 = vmatprep.subr.mxu0 0.0
    %750 = vmatpush1.msra.mxu0 0.0
    %751 = vmatprep.subr.mxu0 0.0
    %752 = vmatpush1.msra.mxu0 0.0
    %753 = vmatprep.subr.mxu0 0.0
    %754 = vmatpush1.msra.mxu0 0.0
    %755 = vmatprep.subr.mxu0 0.0
    %756 = vmatpush1.msra.mxu0 0.0
    %757 = vmatprep.subr.mxu0 0.0
    %758 = vmatpush1.msra.mxu0 0.0
    %759 = vmatprep.subr.mxu0 0.0
    %760 = vmatpush1.msra.mxu0 0.0
    %761 = vmatprep.subr.mxu0 0.0
    %762 = vmatpush1.msra.mxu0 0.0
    %763 = vmatprep.subr.mxu0 0.0
    %764 = vmatpush1.msra.mxu0 0.0
    %765 = vmatprep.subr.mxu0 0.0
    %766 = vmatpush1.msra.mxu0 0.0
    %767 = vmatprep.subr.mxu0 0.0
    %768 = vmatpush1.msra.mxu0 0.0
    %769 = vmatprep.subr.mxu0 0.0
    %770 = vmatpush1.msra.mxu0 0.0
    %771 = vmatprep.subr.mxu0 0.0
    %772 = vmatpush1.msra.mxu0 0.0
    %773 = vmatprep.subr.mxu0 0.0
    %774 = vmatpush1.msra.mxu0 0.0
    %775 = vmatprep.subr.mxu0 0.0
    %776 = vmatpush1.msra.mxu0 0.0
    %777 = vmatprep.subr.mxu0 0.0
    %778 = vmatpush1.msra.mxu0 0.0
    %779 = vmatprep.subr.mxu0 0.0
    %780 = vmatpush1.msra.mxu0 0.0
    %781 = vmatprep.subr.mxu0 0.0
    %782 = vmatpush1.msra.mxu0 0.0
    %783 = vmatprep.subr.mxu0 0.0
    %784 = vmatpush1.msra.mxu0 0.0
    %785 = vmatprep.subr.mxu0 0.0
    %786 = vmatpush1.msra.mxu0 0.0
    %787 = vmatprep.subr.mxu0 0.0
    %788 = vmatpush1.msra.mxu0 0.0
    %789 = vmatprep.subr.mxu0 0.0
    %790 = vmatpush1.msra.mxu0 0.0
    %791 = vmatprep.subr.mxu0 0.0
    %792 = vmatpush1.msra.mxu0 0.0
    %793 = vmatprep.subr.mxu0 0.0
    %794 = vmatpush1.msra.mxu0 0.0
    %795 = vmatprep.subr.mxu0 0.0
    %796 = vmatpush1.msra.mxu0 0.0
    %797 = vmatprep.mubr.f32.mxu0 0.0
    %798 = vmatmul.mubr.f32.gmra.mrb[0].mxu0 %v731
    %v799 = vpop.f32.mrb[0].mxu0
    %v800 = vadd.f32 0.0, %v799
    %v801 = vpop.f32.mrb[0].mxu0
    %802 = vdwg.mxu0
    %803 = vmatprep.subr.mxu0 0.0
    %804 = vmatpush1.msra.mxu0 %v702
    %805 = vmatprep.subr.mxu0 0.0
    %806 = vmatpush1.msra.mxu0 %v703
    %807 = vmatprep.subr.mxu0 0.0
    %808 = vmatpush1.msra.mxu0 %v704
    %809 = vmatprep.subr.mxu0 0.0
    %810 = vmatpush1.msra.mxu0 %v705
    %811 = vmatprep.subr.mxu0 0.0
    %812 = vmatpush1.msra.mxu0 0.0
    %813 = vmatprep.subr.mxu0 0.0
    %814 = vmatpush1.msra.mxu0 0.0
    %815 = vmatprep.subr.mxu0 0.0
    %816 = vmatpush1.msra.mxu0 0.0
    %817 = vmatprep.subr.mxu0 0.0
    %818 = vmatpush1.msra.mxu0 0.0
    %819 = vmatprep.subr.mxu0 0.0
    %820 = vmatpush1.msra.mxu0 0.0
    %821 = vmatprep.subr.mxu0 0.0
    %822 = vmatpush1.msra.mxu0 0.0
    %823 = vmatprep.subr.mxu0 0.0
    %824 = vmatpush1.msra.mxu0 0.0
    %825 = vmatprep.subr.mxu0 0.0
    %826 = vmatpush1.msra.mxu0 0.0
    %827 = vmatprep.subr.mxu0 0.0
    %828 = vmatpush1.msra.mxu0 0.0
    %829 = vmatprep.subr.mxu0 0.0
    %830 = vmatpush1.msra.mxu0 0.0
    %831 = vmatprep.subr.mxu0 0.0
    %832 = vmatpush1.msra.mxu0 0.0
    %833 = vmatprep.subr.mxu0 0.0
    %834 = vmatpush1.msra.mxu0 0.0
    %835 = vmatprep.subr.mxu0 0.0
    %836 = vmatpush1.msra.mxu0 0.0
    %837 = vmatprep.subr.mxu0 0.0
    %838 = vmatpush1.msra.mxu0 0.0
    %839 = vmatprep.subr.mxu0 0.0
    %840 = vmatpush1.msra.mxu0 0.0
    %841 = vmatprep.subr.mxu0 0.0
    %842 = vmatpush1.msra.mxu0 0.0
    %843 = vmatprep.subr.mxu0 0.0
    %844 = vmatpush1.msra.mxu0 0.0
    %845 = vmatprep.subr.mxu0 0.0
    %846 = vmatpush1.msra.mxu0 0.0
    %847 = vmatprep.subr.mxu0 0.0
    %848 = vmatpush1.msra.mxu0 0.0
    %849 = vmatprep.subr.mxu0 0.0
    %850 = vmatpush1.msra.mxu0 0.0
    %851 = vmatprep.subr.mxu0 0.0
    %852 = vmatpush1.msra.mxu0 0.0
    %853 = vmatprep.subr.mxu0 0.0
    %854 = vmatpush1.msra.mxu0 0.0
    %855 = vmatprep.subr.mxu0 0.0
    %856 = vmatpush1.msra.mxu0 0.0
    %857 = vmatprep.subr.mxu0 0.0
    %858 = vmatpush1.msra.mxu0 0.0
    %859 = vmatprep.subr.mxu0 0.0
    %860 = vmatpush1.msra.mxu0 0.0
    %861 = vmatprep.subr.mxu0 0.0
    %862 = vmatpush1.msra.mxu0 0.0
    %863 = vmatprep.subr.mxu0 0.0
    %864 = vmatpush1.msra.mxu0 0.0
    %865 = vmatprep.subr.mxu0 0.0
    %866 = vmatpush1.msra.mxu0 0.0
    %867 = vmatprep.mubr.f32.mxu0 0.0
    %868 = vmatmul.mubr.f32.gmra.mrb[0].mxu0 %v731
    %v869 = vpop.f32.mrb[0].mxu0
    %v870 = vadd.f32 0.0, %v869
    %v871 = vpop.f32.mrb[0].mxu0
    %872 = vdwg.mxu0
    %v874 = vlaneseq
    %v875 = vshrl.u32 %v874, 7
    %v876 = vsub.s32 0, %v875
    %v877 = vrot.slane %v710, %v876
    %879 = vmatprep.subr.mxu0 0.0
    %880 = vmatpush1.msra.mxu0 %v706
    %881 = vmatprep.subr.mxu0 0.0
    %882 = vmatpush1.msra.mxu0 %v707
    %883 = vmatprep.subr.mxu0 0.0
    %884 = vmatpush1.msra.mxu0 %v708
    %885 = vmatprep.subr.mxu0 0.0
    %886 = vmatpush1.msra.mxu0 %v709
    %887 = vmatprep.subr.mxu0 0.0
    %888 = vmatpush1.msra.mxu0 0.0
    %889 = vmatprep.subr.mxu0 0.0
    %890 = vmatpush1.msra.mxu0 0.0
    %891 = vmatprep.subr.mxu0 0.0
    %892 = vmatpush1.msra.mxu0 0.0
    %893 = vmatprep.subr.mxu0 0.0
    %894 = vmatpush1.msra.mxu0 0.0
    %895 = vmatprep.subr.mxu0 0.0
    %896 = vmatpush1.msra.mxu0 0.0
    %897 = vmatprep.subr.mxu0 0.0
    %898 = vmatpush1.msra.mxu0 0.0
    %899 = vmatprep.subr.mxu0 0.0
    %900 = vmatpush1.msra.mxu0 0.0
    %901 = vmatprep.subr.mxu0 0.0
    %902 = vmatpush1.msra.mxu0 0.0
    %903 = vmatprep.subr.mxu0 0.0
    %904 = vmatpush1.msra.mxu0 0.0
    %905 = vmatprep.subr.mxu0 0.0
    %906 = vmatpush1.msra.mxu0 0.0
    %907 = vmatprep.subr.mxu0 0.0
    %908 = vmatpush1.msra.mxu0 0.0
    %909 = vmatprep.subr.mxu0 0.0
    %910 = vmatpush1.msra.mxu0 0.0
    %911 = vmatprep.subr.mxu0 0.0
    %912 = vmatpush1.msra.mxu0 0.0
    %913 = vmatprep.subr.mxu0 0.0
    %914 = vmatpush1.msra.mxu0 0.0
    %915 = vmatprep.subr.mxu0 0.0
    %916 = vmatpush1.msra.mxu0 0.0
    %917 = vmatprep.subr.mxu0 0.0
    %918 = vmatpush1.msra.mxu0 0.0
    %919 = vmatprep.subr.mxu0 0.0
    %920 = vmatpush1.msra.mxu0 0.0
    %921 = vmatprep.subr.mxu0 0.0
    %922 = vmatpush1.msra.mxu0 0.0
    %923 = vmatprep.subr.mxu0 0.0
    %924 = vmatpush1.msra.mxu0 0.0
    %925 = vmatprep.subr.mxu0 0.0
    %926 = vmatpush1.msra.mxu0 0.0
    %927 = vmatprep.subr.mxu0 0.0
    %928 = vmatpush1.msra.mxu0 0.0
    %929 = vmatprep.subr.mxu0 0.0
    %930 = vmatpush1.msra.mxu0 0.0
    %931 = vmatprep.subr.mxu0 0.0
    %932 = vmatpush1.msra.mxu0 0.0
    %933 = vmatprep.subr.mxu0 0.0
    %934 = vmatpush1.msra.mxu0 0.0
    %935 = vmatprep.subr.mxu0 0.0
    %936 = vmatpush1.msra.mxu0 0.0
    %937 = vmatprep.subr.mxu0 0.0
    %938 = vmatpush1.msra.mxu0 0.0
    %939 = vmatprep.subr.mxu0 0.0
    %940 = vmatpush1.msra.mxu0 0.0
    %941 = vmatprep.subr.mxu0 0.0
    %942 = vmatpush1.msra.mxu0 0.0
    %943 = vmatprep.mubr.f32.mxu0 0.0
    %944 = vmatmul.mubr.f32.gmra.mrb[0].mxu0 %v731
    %v945 = vpop.f32.mrb[0].mxu0
    %v946 = vadd.f32 %v877, %v945
    %v947 = vpop.f32.mrb[0].mxu0
    %948 = vdwg.mxu0
    %v949 = vadd.f32 %v722, %v800
    %v950 = vxor.u32 %v949, 2147483648
    %v951 = vmul.f32 %v950, 1.442695
    %v952 = vpow.pop %v951
    %v953 = vadd.f32 %v952, 1.0
    %v954 = vrcp.pop %v953
    %v955 = vmul.f32 1.0, %v954
    %v956 = vadd.f32 %v725, %v870
    %v957 = vxor.u32 %v956, 2147483648
    %v958 = vmul.f32 %v957, 1.442695
    %v959 = vpow.pop %v958
    %v960 = vadd.f32 %v959, 1.0
    %v961 = vrcp.pop %v960
    %v962 = vmul.f32 1.0, %v961
    %v963 = vmul.f32 %v955, %v946
    %v964 = vadd.f32 %v728, %v963
    %v965 = vtanh.pop %v964
    %v966 = vsub.f32 1.0, %v962
    %v967 = vmul.f32 %v966, %v965
    %v968 = vmul.f32 %v962, %v729
    %v969 = vadd.f32 %v967, %v968
    %970 = vst.msk [vmem:[#allocation6] sm:$0xff] %vm80, %v969
    %s971 = scalar_lea.vmem [#allocation5], %s719
    %972 = vst.msk [vmem:[%s971] sm:$0xff] %vm80, %v969
  $region78: #{vnmt_model_forward.3} parent=0 // loop_footer
    %s718 = sadd.s32 1, %s714
  $region79: #{vnmt_model_forward.3} parent=0 // loop_footer_branch
    %713 = sbr.rel target = $region75
  $region80: #{vnmt_model_forward.3} parent=0 // loop_exit
    _
  %v973 = vld [vmem:[#allocation5] sm:$0xff]
  %v974 = vld [vmem:[#allocation5 + $0x8] sm:$0xff]
  %v975 = vld [vmem:[#allocation5 + $0x10] sm:$0xff]
  %v976 = vld [vmem:[#allocation5 + $0x18] sm:$0xff]
  %v977 = vld [vmem:[#allocation5 + $0x20] sm:$0xff]
  %v978 = vld [vmem:[#allocation5 + $0x28] sm:$0xff]
  %v979 = vld [vmem:[#allocation5 + $0x30] sm:$0xff]
  %v980 = vld [vmem:[#allocation5 + $0x38] sm:$0xff]
  %v981 = vld [vmem:[%s16] sm:$0xff]
  %v982 = vld [vmem:[%s16 + $0x8] sm:$0xff]
  %v983 = vld [vmem:[%s16 + $0x10] sm:$0xff]
  %v984 = vld [vmem:[%s16 + $0x18] sm:$0xff]
  %v985 = vld [vmem:[%s17] sm:$0x1]
  %v987 = vlaneseq
  %v988 = vshrl.u32 %v987, 7
  %v989 = vsub.s32 0, %v988
  %v990 = vrot.slane %v985, %v989
  %v993 = vsel %vm80, %v973, 0
  %v996 = vsel %vm80, %v974, 0
  %v999 = vsel %vm80, %v975, 0
  %v1002 = vsel %vm80, %v976, 0
  %v1005 = vsel %vm80, %v977, 0
  %v1008 = vsel %vm80, %v978, 0
  %v1011 = vsel %vm80, %v979, 0
  %v1014 = vsel %vm80, %v980, 0
  %1016 = vmatprep.subr.mxu0 0.0
  %1017 = vmatpush1.msra.mxu0 %v981
  %1018 = vmatprep.subr.mxu0 0.0
  %1019 = vmatpush1.msra.mxu0 %v982
  %1020 = vmatprep.subr.mxu0 0.0
  %1021 = vmatpush1.msra.mxu0 %v983
  %1022 = vmatprep.subr.mxu0 0.0
  %1023 = vmatpush1.msra.mxu0 %v984
  %1024 = vmatprep.subr.mxu0 0.0
  %1025 = vmatpush1.msra.mxu0 0.0
  %1026 = vmatprep.subr.mxu0 0.0
  %1027 = vmatpush1.msra.mxu0 0.0
  %1028 = vmatprep.subr.mxu0 0.0
  %1029 = vmatpush1.msra.mxu0 0.0
  %1030 = vmatprep.subr.mxu0 0.0
  %1031 = vmatpush1.msra.mxu0 0.0
  %1032 = vmatprep.subr.mxu0 0.0
  %1033 = vmatpush1.msra.mxu0 0.0
  %1034 = vmatprep.subr.mxu0 0.0
  %1035 = vmatpush1.msra.mxu0 0.0
  %1036 = vmatprep.subr.mxu0 0.0
  %1037 = vmatpush1.msra.mxu0 0.0
  %1038 = vmatprep.subr.mxu0 0.0
  %1039 = vmatpush1.msra.mxu0 0.0
  %1040 = vmatprep.subr.mxu0 0.0
  %1041 = vmatpush1.msra.mxu0 0.0
  %1042 = vmatprep.subr.mxu0 0.0
  %1043 = vmatpush1.msra.mxu0 0.0
  %1044 = vmatprep.subr.mxu0 0.0
  %1045 = vmatpush1.msra.mxu0 0.0
  %1046 = vmatprep.subr.mxu0 0.0
  %1047 = vmatpush1.msra.mxu0 0.0
  %1048 = vmatprep.subr.mxu0 0.0
  %1049 = vmatpush1.msra.mxu0 0.0
  %1050 = vmatprep.subr.mxu0 0.0
  %1051 = vmatpush1.msra.mxu0 0.0
  %1052 = vmatprep.subr.mxu0 0.0
  %1053 = vmatpush1.msra.mxu0 0.0
  %1054 = vmatprep.subr.mxu0 0.0
  %1055 = vmatpush1.msra.mxu0 0.0
  %1056 = vmatprep.subr.mxu0 0.0
  %1057 = vmatpush1.msra.mxu0 0.0
  %1058 = vmatprep.subr.mxu0 0.0
  %1059 = vmatpush1.msra.mxu0 0.0
  %1060 = vmatprep.subr.mxu0 0.0
  %1061 = vmatpush1.msra.mxu0 0.0
  %1062 = vmatprep.subr.mxu0 0.0
  %1063 = vmatpush1.msra.mxu0 0.0
  %1064 = vmatprep.subr.mxu0 0.0
  %1065 = vmatpush1.msra.mxu0 0.0
  %1066 = vmatprep.subr.mxu0 0.0
  %1067 = vmatpush1.msra.mxu0 0.0
  %1068 = vmatprep.subr.mxu0 0.0
  %1069 = vmatpush1.msra.mxu0 0.0
  %1070 = vmatprep.subr.mxu0 0.0
  %1071 = vmatpush1.msra.mxu0 0.0
  %1072 = vmatprep.subr.mxu0 0.0
  %1073 = vmatpush1.msra.mxu0 0.0
  %1074 = vmatprep.subr.mxu0 0.0
  %1075 = vmatpush1.msra.mxu0 0.0
  %1076 = vmatprep.subr.mxu0 0.0
  %1077 = vmatpush1.msra.mxu0 0.0
  %1078 = vmatprep.subr.mxu0 0.0
  %1079 = vmatpush1.msra.mxu0 0.0
  %1080 = vmatprep.mubr.f32.mxu0 0.0
  %1081 = vmatmul.mubr.f32.gmra.mrb[0].mxu0 %v993
  %v1082 = vpop.f32.mrb[0].mxu0
  %v1083 = vadd.f32 %v990, %v1082
  %v1084 = vpop.f32.mrb[0].mxu0
  %1085 = vmatprep.mubr.f32.mxu0 0.0
  %1086 = vmatmul.mubr.f32.gmra.mrb[0].mxu0 %v996
  %v1087 = vpop.f32.mrb[0].mxu0
  %v1088 = vadd.f32 %v990, %v1087
  %v1089 = vpop.f32.mrb[0].mxu0
  %1090 = vmatprep.mubr.f32.mxu0 0.0
  %1091 = vmatmul.mubr.f32.gmra.mrb[0].mxu0 %v999
  %v1092 = vpop.f32.mrb[0].mxu0
  %v1093 = vadd.f32 %v990, %v1092
  %v1094 = vpop.f32.mrb[0].mxu0
  %1095 = vmatprep.mubr.f32.mxu0 0.0
  %1096 = vmatmul.mubr.f32.gmra.mrb[0].mxu0 %v1002
  %v1097 = vpop.f32.mrb[0].mxu0
  %v1098 = vadd.f32 %v990, %v1097
  %v1099 = vpop.f32.mrb[0].mxu0
  %1100 = vmatprep.mubr.f32.mxu0 0.0
  %1101 = vmatmul.mubr.f32.gmra.mrb[0].mxu0 %v1005
  %v1102 = vpop.f32.mrb[0].mxu0
  %v1103 = vadd.f32 %v990, %v1102
  %v1104 = vpop.f32.mrb[0].mxu0
  %1105 = vmatprep.mubr.f32.mxu0 0.0
  %1106 = vmatmul.mubr.f32.gmra.mrb[0].mxu0 %v1008
  %v1107 = vpop.f32.mrb[0].mxu0
  %v1108 = vadd.f32 %v990, %v1107
  %v1109 = vpop.f32.mrb[0].mxu0
  %1110 = vmatprep.mubr.f32.mxu0 0.0
  %1111 = vmatmul.mubr.f32.gmra.mrb[0].mxu0 %v1011
  %v1112 = vpop.f32.mrb[0].mxu0
  %v1113 = vadd.f32 %v990, %v1112
  %v1114 = vpop.f32.mrb[0].mxu0
  %1115 = vmatprep.mubr.f32.mxu0 0.0
  %1116 = vmatmul.mubr.f32.gmra.mrb[0].mxu0 %v1014
  %v1117 = vpop.f32.mrb[0].mxu0
  %v1118 = vadd.f32 %v990, %v1117
  %v1119 = vpop.f32.mrb[0].mxu0
  %1120 = vdwg.mxu0
  %vm1121 = vcmask 195584
  %v1122 = vsel %vm1121, %v1083, -inf
  %1123 = vmax.xlane.f32.xlu0 %v1122
  %v1124 = vpop.xlane.xlu0 %1123
  %v1125 = vsel %vm1121, %v1088, -inf
  %1126 = vmax.xlane.f32.xlu0 %v1125
  %v1127 = vpop.xlane.xlu0 %1126
  %v1128 = vsel %vm1121, %v1093, -inf
  %1129 = vmax.xlane.f32.xlu0 %v1128
  %v1130 = vpop.xlane.xlu0 %1129
  %v1131 = vsel %vm1121, %v1098, -inf
  %1132 = vmax.xlane.f32.xlu0 %v1131
  %v1133 = vpop.xlane.xlu0 %1132
  %v1134 = vsel %vm1121, %v1103, -inf
  %1135 = vmax.xlane.f32.xlu0 %v1134
  %v1136 = vpop.xlane.xlu0 %1135
  %v1137 = vsel %vm1121, %v1108, -inf
  %1138 = vmax.xlane.f32.xlu0 %v1137
  %v1139 = vpop.xlane.xlu0 %1138
  %v1140 = vsel %vm1121, %v1113, -inf
  %1141 = vmax.xlane.f32.xlu0 %v1140
  %v1142 = vpop.xlane.xlu0 %1141
  %v1143 = vsel %vm1121, %v1118, -inf
  %1144 = vmax.xlane.f32.xlu0 %v1143
  %v1145 = vpop.xlane.xlu0 %1144
  %v1146 = vsub.f32 %v1083, %v1124
  %v1147 = vsub.f32 %v1088, %v1127
  %v1148 = vsub.f32 %v1093, %v1130
  %v1149 = vsub.f32 %v1098, %v1133
  %v1150 = vsub.f32 %v1103, %v1136
  %v1151 = vsub.f32 %v1108, %v1139
  %v1152 = vsub.f32 %v1113, %v1142
  %v1153 = vsub.f32 %v1118, %v1145
  %v1154 = vmul.f32 %v1146, 1.442695
  %v1155 = vpow.pop %v1154
  %v1156 = vmul.f32 %v1147, 1.442695
  %v1157 = vpow.pop %v1156
  %v1158 = vmul.f32 %v1148, 1.442695
  %v1159 = vpow.pop %v1158
  %v1160 = vmul.f32 %v1149, 1.442695
  %v1161 = vpow.pop %v1160
  %v1162 = vmul.f32 %v1150, 1.442695
  %v1163 = vpow.pop %v1162
  %v1164 = vmul.f32 %v1151, 1.442695
  %v1165 = vpow.pop %v1164
  %v1166 = vmul.f32 %v1152, 1.442695
  %v1167 = vpow.pop %v1166
  %v1168 = vmul.f32 %v1153, 1.442695
  %v1169 = vpow.pop %v1168
  %v1170 = vsel %vm1121, %v1155, 0.0
  %1171 = vadd.xlane.f32.xlu0 %v1170
  %v1172 = vpop.xlane.xlu0 %1171
  %v1173 = vsel %vm1121, %v1157, 0.0
  %1174 = vadd.xlane.f32.xlu0 %v1173
  %v1175 = vpop.xlane.xlu0 %1174
  %v1176 = vsel %vm1121, %v1159, 0.0
  %1177 = vadd.xlane.f32.xlu0 %v1176
  %v1178 = vpop.xlane.xlu0 %1177
  %v1179 = vsel %vm1121, %v1161, 0.0
  %1180 = vadd.xlane.f32.xlu0 %v1179
  %v1181 = vpop.xlane.xlu0 %1180
  %v1182 = vsel %vm1121, %v1163, 0.0
  %1183 = vadd.xlane.f32.xlu0 %v1182
  %v1184 = vpop.xlane.xlu0 %1183
  %v1185 = vsel %vm1121, %v1165, 0.0
  %1186 = vadd.xlane.f32.xlu0 %v1185
  %v1187 = vpop.xlane.xlu0 %1186
  %v1188 = vsel %vm1121, %v1167, 0.0
  %1189 = vadd.xlane.f32.xlu0 %v1188
  %v1190 = vpop.xlane.xlu0 %1189
  %v1191 = vsel %vm1121, %v1169, 0.0
  %1192 = vadd.xlane.f32.xlu0 %v1191
  %v1193 = vpop.xlane.xlu0 %1192
  %v1194 = vrcp.pop %v1172
  %v1195 = vmul.f32 %v1155, %v1194
  %v1196 = vrcp.pop %v1175
  %v1197 = vmul.f32 %v1157, %v1196
  %v1198 = vrcp.pop %v1178
  %v1199 = vmul.f32 %v1159, %v1198
  %v1200 = vrcp.pop %v1181
  %v1201 = vmul.f32 %v1161, %v1200
  %v1202 = vrcp.pop %v1184
  %v1203 = vmul.f32 %v1163, %v1202
  %v1204 = vrcp.pop %v1187
  %v1205 = vmul.f32 %v1165, %v1204
  %v1206 = vrcp.pop %v1190
  %v1207 = vmul.f32 %v1167, %v1206
  %v1208 = vrcp.pop %v1193
  %v1209 = vmul.f32 %v1169, %v1208
  %1210 = vst.msk [vmem:[%s18] sm:$0xff] %vm1121, %v1195
  %1211 = vst.msk [vmem:[%s18 + $0x8] sm:$0xff] %vm1121, %v1197
  %1212 = vst.msk [vmem:[%s18 + $0x10] sm:$0xff] %vm1121, %v1199
  %1213 = vst.msk [vmem:[%s18 + $0x18] sm:$0xff] %vm1121, %v1201
  %1214 = vst.msk [vmem:[%s18 + $0x20] sm:$0xff] %vm1121, %v1203
  %1215 = vst.msk [vmem:[%s18 + $0x28] sm:$0xff] %vm1121, %v1205
  %1216 = vst.msk [vmem:[%s18 + $0x30] sm:$0xff] %vm1121, %v1207
  %1217 = vst.msk [vmem:[%s18 + $0x38] sm:$0xff] %vm1121, %v1209
  // Predicated region
  $region81: #{vnmt_model_forward.3} parent=0 // pred_check
    _
  $region82: #{vnmt_model_forward.3} parent=0 // pred_check_branch
    %1219 = sbr.rel (0) target = $region84
  $region83: #{vnmt_model_forward.3} parent=0 // pred_region
    _
  $region84: #{vnmt_model_forward.3} parent=0 // pred_fallthru
    _
  // Predicated region
  $region85: #{vnmt_model_forward.3} parent=0 // pred_check
    _
  $region86: #{vnmt_model_forward.3} parent=0 // pred_check_branch
    %1221 = sbr.rel (0) target = $region88
  $region87: #{vnmt_model_forward.3} parent=0 // pred_region
    _
  $region88: #{vnmt_model_forward.3} parent=0 // pred_fallthru
    _

// kernel: vnmt_model_forward.2
$region0: #{vnmt_model_forward.2}
  #allocation0 [shape = 'u32[]', space=smem, size = 0x4, offset = 0x4, fixed_abs, tag = 'smem constant byte address 0x4 - core index']
  #allocation1 [shape = 'u32[144,128]{1,0:T(1,128)}', space=vmem, size = 0x12000, scoped, tag = 'internal scratch']
  #allocation2 [shape = 'f32[64,32]{1,0:T(8,128)}', space=vmem, size = 0x8000, scoped, tag = 'scratch operand']
  #allocation3 [shape = 'f32[64,32]{1,0:T(8,128)}', space=vmem, size = 0x8000, scoped, tag = 'scratch operand']
  #allocation4 [shape = 'f32[64,32]{1,0:T(8,128)}', space=vmem, size = 0x8000, scoped, tag = 'scratch operand']
  #allocation5 [shape = 'f32[64,32]{1,0:T(8,128)}', space=vmem, size = 0x8000, scoped, tag = 'scratch operand']
  #allocation6 [shape = 'f32[64,32]{1,0:T(8,128)}', space=vmem, size = 0x8000, scoped, tag = 'scratch operand']
  #allocation7 [shape = 'f32[64,32]{1,0:T(8,128)}', space=vmem, size = 0x8000, scoped, tag = 'scratch operand']
  %s0 = inlined_call_operand.smem [shape: u32[34], index: -1, kind: input, shape index: {}]
  %s1 = sld [smem:[%s0]]
  %s2 = scalar_lea.smem %s0, 1
  %s3 = sld [smem:[%s2]]
  %s4 = scalar_lea.smem %s0, 2
  %s5 = sld [smem:[%s4]]
  %s6 = scalar_lea.smem %s0, 3
  %s7 = sld [smem:[%s6]]
  %s8 = scalar_lea.smem %s0, 4
  %s9 = sld [smem:[%s8]]
  %s10 = scalar_lea.smem %s0, 5
  %s11 = sld [smem:[%s10]]
  %s12 = scalar_lea.smem %s0, 6
  %s13 = sld [smem:[%s12]]
  %s14 = scalar_lea.smem %s0, 7
  %s15 = sld [smem:[%s14]]
  %s16 = scalar_lea.smem %s0, 8
  %s17 = sld [smem:[%s16]]
  %s18 = scalar_lea.smem %s0, 9
  %s19 = sld [smem:[%s18]]
  %s20 = scalar_lea.smem %s0, 10
  %s21 = sld [smem:[%s20]]
  %s22 = scalar_lea.smem %s0, 11
  %s23 = sld [smem:[%s22]]
  %s24 = scalar_lea.smem %s0, 12
  %s25 = sld [smem:[%s24]]
  %s26 = scalar_lea.smem %s0, 13
  %s27 = sld [smem:[%s26]]
  %s28 = scalar_lea.smem %s0, 14
  %s29 = sld [smem:[%s28]]
  %s30 = scalar_lea.smem %s0, 15
  %s31 = sld [smem:[%s30]]
  %s32 = scalar_lea.smem %s0, 16
  %s33 = sld [smem:[%s32]]
  %s34 = scalar_lea.smem %s0, 17
  %s35 = sld [smem:[%s34]]
  %s36 = scalar_lea.smem %s0, 18
  %s37 = sld [smem:[%s36]]
  %s38 = scalar_lea.smem %s0, 19
  %s39 = sld [smem:[%s38]]
  %s40 = scalar_lea.smem %s0, 20
  %s41 = sld [smem:[%s40]]
  %s42 = scalar_lea.smem %s0, 21
  %s43 = sld [smem:[%s42]]
  %s44 = scalar_lea.smem %s0, 22
  %s45 = sld [smem:[%s44]]
  %s46 = scalar_lea.smem %s0, 23
  %s47 = sld [smem:[%s46]]
  %s48 = scalar_lea.smem %s0, 24
  %s49 = sld [smem:[%s48]]
  %s50 = scalar_lea.smem %s0, 25
  %s51 = sld [smem:[%s50]]
  %s52 = scalar_lea.smem %s0, 26
  %s53 = sld [smem:[%s52]]
  %s54 = scalar_lea.smem %s0, 27
  %s55 = sld [smem:[%s54]]
  %s56 = scalar_lea.smem %s0, 28
  %s57 = sld [smem:[%s56]]
  %s58 = scalar_lea.smem %s0, 29
  %s59 = sld [smem:[%s58]]
  %s60 = scalar_lea.smem %s0, 30
  %s61 = sld [smem:[%s60]]
  %s62 = scalar_lea.smem %s0, 31
  %s63 = sld [smem:[%s62]]
  %s64 = scalar_lea.smem %s0, 32
  %s65 = sld [smem:[%s64]]
  %s66 = scalar_lea.smem %s0, 33
  %s67 = sld [smem:[%s66]]
  %68 = xla_tuple %s61, %s63, %s65, %s67
  %s69 = sld [smem:[#allocation0]]
  $region161: #{vnmt_model_forward.2} parent=0
    _
  %s71 = ssub.s32 1, %s69
  %s72 = scalar_select 0, %s71, %s69
  // Predicated region
  $region2: #{vnmt_model_forward.2} parent=0 // pred_check
    _
  $region3: #{vnmt_model_forward.2} parent=0 // pred_check_branch
    %74 = sbr.rel (0) target = $region5
  $region4: #{vnmt_model_forward.2} parent=0 // pred_region
    _
  $region5: #{vnmt_model_forward.2} parent=0 // pred_fallthru
    _
  // Predicated region
  $region6: #{vnmt_model_forward.2} parent=0 // pred_check
    _
  $region7: #{vnmt_model_forward.2} parent=0 // pred_check_branch
    %76 = sbr.rel (0) target = $region9
  $region8: #{vnmt_model_forward.2} parent=0 // pred_region
    _
  $region9: #{vnmt_model_forward.2} parent=0 // pred_fallthru
    _
  // Predicated region
  $region10: #{vnmt_model_forward.2} parent=0 // pred_check
    _
  $region11: #{vnmt_model_forward.2} parent=0 // pred_check_branch
    %78 = sbr.rel (0) target = $region13
  $region12: #{vnmt_model_forward.2} parent=0 // pred_region
    _
  $region13: #{vnmt_model_forward.2} parent=0 // pred_fallthru
    _
  // Predicated region
  $region14: #{vnmt_model_forward.2} parent=0 // pred_check
    _
  $region15: #{vnmt_model_forward.2} parent=0 // pred_check_branch
    %80 = sbr.rel (0) target = $region17
  $region16: #{vnmt_model_forward.2} parent=0 // pred_region
    _
  $region17: #{vnmt_model_forward.2} parent=0 // pred_fallthru
    _
  // Predicated region
  $region18: #{vnmt_model_forward.2} parent=0 // pred_check
    _
  $region19: #{vnmt_model_forward.2} parent=0 // pred_check_branch
    %82 = sbr.rel (0) target = $region21
  $region20: #{vnmt_model_forward.2} parent=0 // pred_region
    _
  $region21: #{vnmt_model_forward.2} parent=0 // pred_fallthru
    _
  // Predicated region
  $region22: #{vnmt_model_forward.2} parent=0 // pred_check
    _
  $region23: #{vnmt_model_forward.2} parent=0 // pred_check_branch
    %84 = sbr.rel (0) target = $region25
  $region24: #{vnmt_model_forward.2} parent=0 // pred_region
    _
  $region25: #{vnmt_model_forward.2} parent=0 // pred_fallthru
    _
  // Predicated region
  $region26: #{vnmt_model_forward.2} parent=0 // pred_check
    _
  $region27: #{vnmt_model_forward.2} parent=0 // pred_check_branch
    %86 = sbr.rel (0) target = $region29
  $region28: #{vnmt_model_forward.2} parent=0 // pred_region
    _
  $region29: #{vnmt_model_forward.2} parent=0 // pred_fallthru
    _
  // Predicated region
  $region30: #{vnmt_model_forward.2} parent=0 // pred_check
    _
  $region31: #{vnmt_model_forward.2} parent=0 // pred_check_branch
    %88 = sbr.rel (0) target = $region33
  $region32: #{vnmt_model_forward.2} parent=0 // pred_region
    _
  $region33: #{vnmt_model_forward.2} parent=0 // pred_fallthru
    _
  // Predicated region
  $region34: #{vnmt_model_forward.2} parent=0 // pred_check
    _
  $region35: #{vnmt_model_forward.2} parent=0 // pred_check_branch
    %90 = sbr.rel (0) target = $region37
  $region36: #{vnmt_model_forward.2} parent=0 // pred_region
    _
  $region37: #{vnmt_model_forward.2} parent=0 // pred_fallthru
    _
  // Predicated region
  $region38: #{vnmt_model_forward.2} parent=0 // pred_check
    _
  $region39: #{vnmt_model_forward.2} parent=0 // pred_check_branch
    %92 = sbr.rel (0) target = $region41
  $region40: #{vnmt_model_forward.2} parent=0 // pred_region
    _
  $region41: #{vnmt_model_forward.2} parent=0 // pred_fallthru
    _
  // Predicated region
  $region42: #{vnmt_model_forward.2} parent=0 // pred_check
    _
  $region43: #{vnmt_model_forward.2} parent=0 // pred_check_branch
    %94 = sbr.rel (0) target = $region45
  $region44: #{vnmt_model_forward.2} parent=0 // pred_region
    _
  $region45: #{vnmt_model_forward.2} parent=0 // pred_fallthru
    _
  // Predicated region
  $region46: #{vnmt_model_forward.2} parent=0 // pred_check
    _
  $region47: #{vnmt_model_forward.2} parent=0 // pred_check_branch
    %96 = sbr.rel (0) target = $region49
  $region48: #{vnmt_model_forward.2} parent=0 // pred_region
    _
  $region49: #{vnmt_model_forward.2} parent=0 // pred_fallthru
    _
  // Predicated region
  $region50: #{vnmt_model_forward.2} parent=0 // pred_check
    _
  $region51: #{vnmt_model_forward.2} parent=0 // pred_check_branch
    %98 = sbr.rel (0) target = $region53
  $region52: #{vnmt_model_forward.2} parent=0 // pred_region
    _
  $region53: #{vnmt_model_forward.2} parent=0 // pred_fallthru
    _
  // Predicated region
  $region54: #{vnmt_model_forward.2} parent=0 // pred_check
    _
  $region55: #{vnmt_model_forward.2} parent=0 // pred_check_branch
    %100 = sbr.rel (0) target = $region57
  $region56: #{vnmt_model_forward.2} parent=0 // pred_region
    _
  $region57: #{vnmt_model_forward.2} parent=0 // pred_fallthru
    _
  // Predicated region
  $region58: #{vnmt_model_forward.2} parent=0 // pred_check
    _
  $region59: #{vnmt_model_forward.2} parent=0 // pred_check_branch
    %102 = sbr.rel (0) target = $region61
  $region60: #{vnmt_model_forward.2} parent=0 // pred_region
    _
  $region61: #{vnmt_model_forward.2} parent=0 // pred_fallthru
    _
  // Predicated region
  $region62: #{vnmt_model_forward.2} parent=0 // pred_check
    _
  $region63: #{vnmt_model_forward.2} parent=0 // pred_check_branch
    %104 = sbr.rel (0) target = $region65
  $region64: #{vnmt_model_forward.2} parent=0 // pred_region
    _
  $region65: #{vnmt_model_forward.2} parent=0 // pred_fallthru
    _
  // Predicated region
  $region66: #{vnmt_model_forward.2} parent=0 // pred_check
    _
  $region67: #{vnmt_model_forward.2} parent=0 // pred_check_branch
    %106 = sbr.rel (0) target = $region69
  $region68: #{vnmt_model_forward.2} parent=0 // pred_region
    _
  $region69: #{vnmt_model_forward.2} parent=0 // pred_fallthru
    _
  // Predicated region
  $region70: #{vnmt_model_forward.2} parent=0 // pred_check
    _
  $region71: #{vnmt_model_forward.2} parent=0 // pred_check_branch
    %108 = sbr.rel (0) target = $region73
  $region72: #{vnmt_model_forward.2} parent=0 // pred_region
    _
  $region73: #{vnmt_model_forward.2} parent=0 // pred_fallthru
    _
  // Predicated region
  $region74: #{vnmt_model_forward.2} parent=0 // pred_check
    _
  $region75: #{vnmt_model_forward.2} parent=0 // pred_check_branch
    %110 = sbr.rel (0) target = $region77
  $region76: #{vnmt_model_forward.2} parent=0 // pred_region
    _
  $region77: #{vnmt_model_forward.2} parent=0 // pred_fallthru
    _
  // Predicated region
  $region78: #{vnmt_model_forward.2} parent=0 // pred_check
    _
  $region79: #{vnmt_model_forward.2} parent=0 // pred_check_branch
    %112 = sbr.rel (0) target = $region81
  $region80: #{vnmt_model_forward.2} parent=0 // pred_region
    _
  $region81: #{vnmt_model_forward.2} parent=0 // pred_fallthru
    _
  // Predicated region
  $region82: #{vnmt_model_forward.2} parent=0 // pred_check
    _
  $region83: #{vnmt_model_forward.2} parent=0 // pred_check_branch
    %114 = sbr.rel (0) target = $region85
  $region84: #{vnmt_model_forward.2} parent=0 // pred_region
    _
  $region85: #{vnmt_model_forward.2} parent=0 // pred_fallthru
    _
  // Predicated region
  $region86: #{vnmt_model_forward.2} parent=0 // pred_check
    _
  $region87: #{vnmt_model_forward.2} parent=0 // pred_check_branch
    %116 = sbr.rel (0) target = $region89
  $region88: #{vnmt_model_forward.2} parent=0 // pred_region
    _
  $region89: #{vnmt_model_forward.2} parent=0 // pred_fallthru
    _
  // Predicated region
  $region90: #{vnmt_model_forward.2} parent=0 // pred_check
    _
  $region91: #{vnmt_model_forward.2} parent=0 // pred_check_branch
    %118 = sbr.rel (0) target = $region93
  $region92: #{vnmt_model_forward.2} parent=0 // pred_region
    _
  $region93: #{vnmt_model_forward.2} parent=0 // pred_fallthru
    _
  // Predicated region
  $region94: #{vnmt_model_forward.2} parent=0 // pred_check
    _
  $region95: #{vnmt_model_forward.2} parent=0 // pred_check_branch
    %120 = sbr.rel (0) target = $region97
  $region96: #{vnmt_model_forward.2} parent=0 // pred_region
    _
  $region97: #{vnmt_model_forward.2} parent=0 // pred_fallthru
    _
  // Predicated region
  $region98: #{vnmt_model_forward.2} parent=0 // pred_check
    _
  $region99: #{vnmt_model_forward.2} parent=0 // pred_check_branch
    %122 = sbr.rel (0) target = $region101
  $region100: #{vnmt_model_forward.2} parent=0 // pred_region
    _
  $region101: #{vnmt_model_forward.2} parent=0 // pred_fallthru
    _
  // Predicated region
  $region102: #{vnmt_model_forward.2} parent=0 // pred_check
    _
  $region103: #{vnmt_model_forward.2} parent=0 // pred_check_branch
    %124 = sbr.rel (0) target = $region105
  $region104: #{vnmt_model_forward.2} parent=0 // pred_region
    _
  $region105: #{vnmt_model_forward.2} parent=0 // pred_fallthru
    _
  // Predicated region
  $region106: #{vnmt_model_forward.2} parent=0 // pred_check
    _
  $region107: #{vnmt_model_forward.2} parent=0 // pred_check_branch
    %126 = sbr.rel (0) target = $region109
  $region108: #{vnmt_model_forward.2} parent=0 // pred_region
    _
  $region109: #{vnmt_model_forward.2} parent=0 // pred_fallthru
    _
  // Predicated region
  $region110: #{vnmt_model_forward.2} parent=0 // pred_check
    _
  $region111: #{vnmt_model_forward.2} parent=0 // pred_check_branch
    %128 = sbr.rel (0) target = $region113
  $region112: #{vnmt_model_forward.2} parent=0 // pred_region
    _
  $region113: #{vnmt_model_forward.2} parent=0 // pred_fallthru
    _
  // Predicated region
  $region114: #{vnmt_model_forward.2} parent=0 // pred_check
    _
  $region115: #{vnmt_model_forward.2} parent=0 // pred_check_branch
    %130 = sbr.rel (0) target = $region117
  $region116: #{vnmt_model_forward.2} parent=0 // pred_region
    _
  $region117: #{vnmt_model_forward.2} parent=0 // pred_fallthru
    _
  // Predicated region
  $region118: #{vnmt_model_forward.2} parent=0 // pred_check
    _
  $region119: #{vnmt_model_forward.2} parent=0 // pred_check_branch
    %132 = sbr.rel (0) target = $region121
  $region120: #{vnmt_model_forward.2} parent=0 // pred_region
    _
  $region121: #{vnmt_model_forward.2} parent=0 // pred_fallthru
    _
  %v133 = vld [vmem:[%s1] sm:$0xff]
  %v134 = vld [vmem:[%s1 + $0x8] sm:$0xff]
  %v135 = vld [vmem:[%s1 + $0x10] sm:$0xff]
  %v136 = vld [vmem:[%s1 + $0x18] sm:$0xff]
  %v137 = vld [vmem:[%s1 + $0x20] sm:$0xff]
  %v138 = vld [vmem:[%s1 + $0x28] sm:$0xff]
  %v139 = vld [vmem:[%s1 + $0x30] sm:$0xff]
  %v140 = vld [vmem:[%s1 + $0x38] sm:$0xff]
  %v141 = vld [vmem:[%s3] sm:$0xff]
  %v142 = vld [vmem:[%s3 + $0x8] sm:$0xff]
  %v143 = vld [vmem:[%s3 + $0x10] sm:$0xff]
  %v144 = vld [vmem:[%s3 + $0x18] sm:$0xff]
  %v145 = vld [vmem:[%s15] sm:$0x1]
  %v147 = vlaneseq
  %v148 = vshrl.u32 %v147, 7
  %v149 = vsub.s32 0, %v148
  %v150 = vrot.slane %v145, %v149
  %vm152 = vcmask 261120
  %v154 = vsel %vm152, %v133, 0
  %v157 = vsel %vm152, %v134, 0
  %v160 = vsel %vm152, %v135, 0
  %v163 = vsel %vm152, %v136, 0
  %v166 = vsel %vm152, %v137, 0
  %v169 = vsel %vm152, %v138, 0
  %v172 = vsel %vm152, %v139, 0
  %v175 = vsel %vm152, %v140, 0
  %177 = vmatprep.subr.mxu0 0.0
  %178 = vmatpush1.msra.mxu0 %v141
  %179 = vmatprep.subr.mxu0 0.0
  %180 = vmatpush1.msra.mxu0 %v142
  %181 = vmatprep.subr.mxu0 0.0
  %182 = vmatpush1.msra.mxu0 %v143
  %183 = vmatprep.subr.mxu0 0.0
  %184 = vmatpush1.msra.mxu0 %v144
  %185 = vmatprep.subr.mxu0 0.0
  %186 = vmatpush1.msra.mxu0 0.0
  %187 = vmatprep.subr.mxu0 0.0
  %188 = vmatpush1.msra.mxu0 0.0
  %189 = vmatprep.subr.mxu0 0.0
  %190 = vmatpush1.msra.mxu0 0.0
  %191 = vmatprep.subr.mxu0 0.0
  %192 = vmatpush1.msra.mxu0 0.0
  %193 = vmatprep.subr.mxu0 0.0
  %194 = vmatpush1.msra.mxu0 0.0
  %195 = vmatprep.subr.mxu0 0.0
  %196 = vmatpush1.msra.mxu0 0.0
  %197 = vmatprep.subr.mxu0 0.0
  %198 = vmatpush1.msra.mxu0 0.0
  %199 = vmatprep.subr.mxu0 0.0
  %200 = vmatpush1.msra.mxu0 0.0
  %201 = vmatprep.subr.mxu0 0.0
  %202 = vmatpush1.msra.mxu0 0.0
  %203 = vmatprep.subr.mxu0 0.0
  %204 = vmatpush1.msra.mxu0 0.0
  %205 = vmatprep.subr.mxu0 0.0
  %206 = vmatpush1.msra.mxu0 0.0
  %207 = vmatprep.subr.mxu0 0.0
  %208 = vmatpush1.msra.mxu0 0.0
  %209 = vmatprep.subr.mxu0 0.0
  %210 = vmatpush1.msra.mxu0 0.0
  %211 = vmatprep.subr.mxu0 0.0
  %212 = vmatpush1.msra.mxu0 0.0
  %213 = vmatprep.subr.mxu0 0.0
  %214 = vmatpush1.msra.mxu0 0.0
  %215 = vmatprep.subr.mxu0 0.0
  %216 = vmatpush1.msra.mxu0 0.0
  %217 = vmatprep.subr.mxu0 0.0
  %218 = vmatpush1.msra.mxu0 0.0
  %219 = vmatprep.subr.mxu0 0.0
  %220 = vmatpush1.msra.mxu0 0.0
  %221 = vmatprep.subr.mxu0 0.0
  %222 = vmatpush1.msra.mxu0 0.0
  %223 = vmatprep.subr.mxu0 0.0
  %224 = vmatpush1.msra.mxu0 0.0
  %225 = vmatprep.subr.mxu0 0.0
  %226 = vmatpush1.msra.mxu0 0.0
  %227 = vmatprep.subr.mxu0 0.0
  %228 = vmatpush1.msra.mxu0 0.0
  %229 = vmatprep.subr.mxu0 0.0
  %230 = vmatpush1.msra.mxu0 0.0
  %231 = vmatprep.subr.mxu0 0.0
  %232 = vmatpush1.msra.mxu0 0.0
  %233 = vmatprep.subr.mxu0 0.0
  %234 = vmatpush1.msra.mxu0 0.0
  %235 = vmatprep.subr.mxu0 0.0
  %236 = vmatpush1.msra.mxu0 0.0
  %237 = vmatprep.subr.mxu0 0.0
  %238 = vmatpush1.msra.mxu0 0.0
  %239 = vmatprep.subr.mxu0 0.0
  %240 = vmatpush1.msra.mxu0 0.0
  %241 = vmatprep.mubr.f32.mxu0 0.0
  %242 = vmatmul.mubr.f32.gmra.mrb[0].mxu0 %v154
  %v243 = vpop.f32.mrb[0].mxu0
  %v244 = vadd.f32 %v150, %v243
  %v245 = vpop.f32.mrb[0].mxu0
  %246 = vmatprep.mubr.f32.mxu0 0.0
  %247 = vmatmul.mubr.f32.gmra.mrb[0].mxu0 %v157
  %v248 = vpop.f32.mrb[0].mxu0
  %v249 = vadd.f32 %v150, %v248
  %v250 = vpop.f32.mrb[0].mxu0
  %251 = vmatprep.mubr.f32.mxu0 0.0
  %252 = vmatmul.mubr.f32.gmra.mrb[0].mxu0 %v160
  %v253 = vpop.f32.mrb[0].mxu0
  %v254 = vadd.f32 %v150, %v253
  %v255 = vpop.f32.mrb[0].mxu0
  %256 = vmatprep.mubr.f32.mxu0 0.0
  %257 = vmatmul.mubr.f32.gmra.mrb[0].mxu0 %v163
  %v258 = vpop.f32.mrb[0].mxu0
  %v259 = vadd.f32 %v150, %v258
  %v260 = vpop.f32.mrb[0].mxu0
  %261 = vmatprep.mubr.f32.mxu0 0.0
  %262 = vmatmul.mubr.f32.gmra.mrb[0].mxu0 %v166
  %v263 = vpop.f32.mrb[0].mxu0
  %v264 = vadd.f32 %v150, %v263
  %v265 = vpop.f32.mrb[0].mxu0
  %266 = vmatprep.mubr.f32.mxu0 0.0
  %267 = vmatmul.mubr.f32.gmra.mrb[0].mxu0 %v169
  %v268 = vpop.f32.mrb[0].mxu0
  %v269 = vadd.f32 %v150, %v268
  %v270 = vpop.f32.mrb[0].mxu0
  %271 = vmatprep.mubr.f32.mxu0 0.0
  %272 = vmatmul.mubr.f32.gmra.mrb[0].mxu0 %v172
  %v273 = vpop.f32.mrb[0].mxu0
  %v274 = vadd.f32 %v150, %v273
  %v275 = vpop.f32.mrb[0].mxu0
  %276 = vmatprep.mubr.f32.mxu0 0.0
  %277 = vmatmul.mubr.f32.gmra.mrb[0].mxu0 %v175
  %v278 = vpop.f32.mrb[0].mxu0
  %v279 = vadd.f32 %v150, %v278
  %v280 = vpop.f32.mrb[0].mxu0
  %281 = vdwg.mxu0
  %282 = vst.msk [vmem:[#allocation2] sm:$0xff] %vm152, %v244
  %283 = vst.msk [vmem:[#allocation2 + $0x8] sm:$0xff] %vm152, %v249
  %284 = vst.msk [vmem:[#allocation2 + $0x10] sm:$0xff] %vm152, %v254
  %285 = vst.msk [vmem:[#allocation2 + $0x18] sm:$0xff] %vm152, %v259
  %286 = vst.msk [vmem:[#allocation2 + $0x20] sm:$0xff] %vm152, %v264
  %287 = vst.msk [vmem:[#allocation2 + $0x28] sm:$0xff] %vm152, %v269
  %288 = vst.msk [vmem:[#allocation2 + $0x30] sm:$0xff] %vm152, %v274
  %289 = vst.msk [vmem:[#allocation2 + $0x38] sm:$0xff] %vm152, %v279
  %v290 = vld [vmem:[%s5] sm:$0xff]
  %v291 = vld [vmem:[%s5 + $0x8] sm:$0xff]
  %v292 = vld [vmem:[%s5 + $0x10] sm:$0xff]
  %v293 = vld [vmem:[%s5 + $0x18] sm:$0xff]
  %v294 = vld [vmem:[%s17] sm:$0x1]
  %v296 = vlaneseq
  %v297 = vshrl.u32 %v296, 7
  %v298 = vsub.s32 0, %v297
  %v299 = vrot.slane %v294, %v298
  %301 = vmatprep.subr.mxu0 0.0
  %302 = vmatpush1.msra.mxu0 %v290
  %303 = vmatprep.subr.mxu0 0.0
  %304 = vmatpush1.msra.mxu0 %v291
  %305 = vmatprep.subr.mxu0 0.0
  %306 = vmatpush1.msra.mxu0 %v292
  %307 = vmatprep.subr.mxu0 0.0
  %308 = vmatpush1.msra.mxu0 %v293
  %309 = vmatprep.subr.mxu0 0.0
  %310 = vmatpush1.msra.mxu0 0.0
  %311 = vmatprep.subr.mxu0 0.0
  %312 = vmatpush1.msra.mxu0 0.0
  %313 = vmatprep.subr.mxu0 0.0
  %314 = vmatpush1.msra.mxu0 0.0
  %315 = vmatprep.subr.mxu0 0.0
  %316 = vmatpush1.msra.mxu0 0.0
  %317 = vmatprep.subr.mxu0 0.0
  %318 = vmatpush1.msra.mxu0 0.0
  %319 = vmatprep.subr.mxu0 0.0
  %320 = vmatpush1.msra.mxu0 0.0
  %321 = vmatprep.subr.mxu0 0.0
  %322 = vmatpush1.msra.mxu0 0.0
  %323 = vmatprep.subr.mxu0 0.0
  %324 = vmatpush1.msra.mxu0 0.0
  %325 = vmatprep.subr.mxu0 0.0
  %326 = vmatpush1.msra.mxu0 0.0
  %327 = vmatprep.subr.mxu0 0.0
  %328 = vmatpush1.msra.mxu0 0.0
  %329 = vmatprep.subr.mxu0 0.0
  %330 = vmatpush1.msra.mxu0 0.0
  %331 = vmatprep.subr.mxu0 0.0
  %332 = vmatpush1.msra.mxu0 0.0
  %333 = vmatprep.subr.mxu0 0.0
  %334 = vmatpush1.msra.mxu0 0.0
  %335 = vmatprep.subr.mxu0 0.0
  %336 = vmatpush1.msra.mxu0 0.0
  %337 = vmatprep.subr.mxu0 0.0
  %338 = vmatpush1.msra.mxu0 0.0
  %339 = vmatprep.subr.mxu0 0.0
  %340 = vmatpush1.msra.mxu0 0.0
  %341 = vmatprep.subr.mxu0 0.0
  %342 = vmatpush1.msra.mxu0 0.0
  %343 = vmatprep.subr.mxu0 0.0
  %344 = vmatpush1.msra.mxu0 0.0
  %345 = vmatprep.subr.mxu0 0.0
  %346 = vmatpush1.msra.mxu0 0.0
  %347 = vmatprep.subr.mxu0 0.0
  %348 = vmatpush1.msra.mxu0 0.0
  %349 = vmatprep.subr.mxu0 0.0
  %350 = vmatpush1.msra.mxu0 0.0
  %351 = vmatprep.subr.mxu0 0.0
  %352 = vmatpush1.msra.mxu0 0.0
  %353 = vmatprep.subr.mxu0 0.0
  %354 = vmatpush1.msra.mxu0 0.0
  %355 = vmatprep.subr.mxu0 0.0
  %356 = vmatpush1.msra.mxu0 0.0
  %357 = vmatprep.subr.mxu0 0.0
  %358 = vmatpush1.msra.mxu0 0.0
  %359 = vmatprep.subr.mxu0 0.0
  %360 = vmatpush1.msra.mxu0 0.0
  %361 = vmatprep.subr.mxu0 0.0
  %362 = vmatpush1.msra.mxu0 0.0
  %363 = vmatprep.subr.mxu0 0.0
  %364 = vmatpush1.msra.mxu0 0.0
  %365 = vmatprep.mubr.f32.mxu0 0.0
  %366 = vmatmul.mubr.f32.gmra.mrb[0].mxu0 %v154
  %v367 = vpop.f32.mrb[0].mxu0
  %v368 = vadd.f32 %v299, %v367
  %v369 = vpop.f32.mrb[0].mxu0
  %370 = vmatprep.mubr.f32.mxu0 0.0
  %371 = vmatmul.mubr.f32.gmra.mrb[0].mxu0 %v157
  %v372 = vpop.f32.mrb[0].mxu0
  %v373 = vadd.f32 %v299, %v372
  %v374 = vpop.f32.mrb[0].mxu0
  %375 = vmatprep.mubr.f32.mxu0 0.0
  %376 = vmatmul.mubr.f32.gmra.mrb[0].mxu0 %v160
  %v377 = vpop.f32.mrb[0].mxu0
  %v378 = vadd.f32 %v299, %v377
  %v379 = vpop.f32.mrb[0].mxu0
  %380 = vmatprep.mubr.f32.mxu0 0.0
  %381 = vmatmul.mubr.f32.gmra.mrb[0].mxu0 %v163
  %v382 = vpop.f32.mrb[0].mxu0
  %v383 = vadd.f32 %v299, %v382
  %v384 = vpop.f32.mrb[0].mxu0
  %385 = vmatprep.mubr.f32.mxu0 0.0
  %386 = vmatmul.mubr.f32.gmra.mrb[0].mxu0 %v166
  %v387 = vpop.f32.mrb[0].mxu0
  %v388 = vadd.f32 %v299, %v387
  %v389 = vpop.f32.mrb[0].mxu0
  %390 = vmatprep.mubr.f32.mxu0 0.0
  %391 = vmatmul.mubr.f32.gmra.mrb[0].mxu0 %v169
  %v392 = vpop.f32.mrb[0].mxu0
  %v393 = vadd.f32 %v299, %v392
  %v394 = vpop.f32.mrb[0].mxu0
  %395 = vmatprep.mubr.f32.mxu0 0.0
  %396 = vmatmul.mubr.f32.gmra.mrb[0].mxu0 %v172
  %v397 = vpop.f32.mrb[0].mxu0
  %v398 = vadd.f32 %v299, %v397
  %v399 = vpop.f32.mrb[0].mxu0
  %400 = vmatprep.mubr.f32.mxu0 0.0
  %401 = vmatmul.mubr.f32.gmra.mrb[0].mxu0 %v175
  %v402 = vpop.f32.mrb[0].mxu0
  %v403 = vadd.f32 %v299, %v402
  %v404 = vpop.f32.mrb[0].mxu0
  %405 = vdwg.mxu0
  %406 = vst.msk [vmem:[#allocation3] sm:$0xff] %vm152, %v368
  %407 = vst.msk [vmem:[#allocation3 + $0x8] sm:$0xff] %vm152, %v373
  %408 = vst.msk [vmem:[#allocation3 + $0x10] sm:$0xff] %vm152, %v378
  %409 = vst.msk [vmem:[#allocation3 + $0x18] sm:$0xff] %vm152, %v383
  %410 = vst.msk [vmem:[#allocation3 + $0x20] sm:$0xff] %vm152, %v388
  %411 = vst.msk [vmem:[#allocation3 + $0x28] sm:$0xff] %vm152, %v393
  %412 = vst.msk [vmem:[#allocation3 + $0x30] sm:$0xff] %vm152, %v398
  %413 = vst.msk [vmem:[#allocation3 + $0x38] sm:$0xff] %vm152, %v403
  %v414 = vld [vmem:[%s7] sm:$0xff]
  %v415 = vld [vmem:[%s7 + $0x8] sm:$0xff]
  %v416 = vld [vmem:[%s7 + $0x10] sm:$0xff]
  %v417 = vld [vmem:[%s7 + $0x18] sm:$0xff]
  %v418 = vld [vmem:[%s19] sm:$0x1]
  %v420 = vlaneseq
  %v421 = vshrl.u32 %v420, 7
  %v422 = vsub.s32 0, %v421
  %v423 = vrot.slane %v418, %v422
  %425 = vmatprep.subr.mxu0 0.0
  %426 = vmatpush1.msra.mxu0 %v414
  %427 = vmatprep.subr.mxu0 0.0
  %428 = vmatpush1.msra.mxu0 %v415
  %429 = vmatprep.subr.mxu0 0.0
  %430 = vmatpush1.msra.mxu0 %v416
  %431 = vmatprep.subr.mxu0 0.0
  %432 = vmatpush1.msra.mxu0 %v417
  %433 = vmatprep.subr.mxu0 0.0
  %434 = vmatpush1.msra.mxu0 0.0
  %435 = vmatprep.subr.mxu0 0.0
  %436 = vmatpush1.msra.mxu0 0.0
  %437 = vmatprep.subr.mxu0 0.0
  %438 = vmatpush1.msra.mxu0 0.0
  %439 = vmatprep.subr.mxu0 0.0
  %440 = vmatpush1.msra.mxu0 0.0
  %441 = vmatprep.subr.mxu0 0.0
  %442 = vmatpush1.msra.mxu0 0.0
  %443 = vmatprep.subr.mxu0 0.0
  %444 = vmatpush1.msra.mxu0 0.0
  %445 = vmatprep.subr.mxu0 0.0
  %446 = vmatpush1.msra.mxu0 0.0
  %447 = vmatprep.subr.mxu0 0.0
  %448 = vmatpush1.msra.mxu0 0.0
  %449 = vmatprep.subr.mxu0 0.0
  %450 = vmatpush1.msra.mxu0 0.0
  %451 = vmatprep.subr.mxu0 0.0
  %452 = vmatpush1.msra.mxu0 0.0
  %453 = vmatprep.subr.mxu0 0.0
  %454 = vmatpush1.msra.mxu0 0.0
  %455 = vmatprep.subr.mxu0 0.0
  %456 = vmatpush1.msra.mxu0 0.0
  %457 = vmatprep.subr.mxu0 0.0
  %458 = vmatpush1.msra.mxu0 0.0
  %459 = vmatprep.subr.mxu0 0.0
  %460 = vmatpush1.msra.mxu0 0.0
  %461 = vmatprep.subr.mxu0 0.0
  %462 = vmatpush1.msra.mxu0 0.0
  %463 = vmatprep.subr.mxu0 0.0
  %464 = vmatpush1.msra.mxu0 0.0
  %465 = vmatprep.subr.mxu0 0.0
  %466 = vmatpush1.msra.mxu0 0.0
  %467 = vmatprep.subr.mxu0 0.0
  %468 = vmatpush1.msra.mxu0 0.0
  %469 = vmatprep.subr.mxu0 0.0
  %470 = vmatpush1.msra.mxu0 0.0
  %471 = vmatprep.subr.mxu0 0.0
  %472 = vmatpush1.msra.mxu0 0.0
  %473 = vmatprep.subr.mxu0 0.0
  %474 = vmatpush1.msra.mxu0 0.0
  %475 = vmatprep.subr.mxu0 0.0
  %476 = vmatpush1.msra.mxu0 0.0
  %477 = vmatprep.subr.mxu0 0.0
  %478 = vmatpush1.msra.mxu0 0.0
  %479 = vmatprep.subr.mxu0 0.0
  %480 = vmatpush1.msra.mxu0 0.0
  %481 = vmatprep.subr.mxu0 0.0
  %482 = vmatpush1.msra.mxu0 0.0
  %483 = vmatprep.subr.mxu0 0.0
  %484 = vmatpush1.msra.mxu0 0.0
  %485 = vmatprep.subr.mxu0 0.0
  %486 = vmatpush1.msra.mxu0 0.0
  %487 = vmatprep.subr.mxu0 0.0
  %488 = vmatpush1.msra.mxu0 0.0
  %489 = vmatprep.mubr.f32.mxu0 0.0
  %490 = vmatmul.mubr.f32.gmra.mrb[0].mxu0 %v154
  %v491 = vpop.f32.mrb[0].mxu0
  %v492 = vadd.f32 %v423, %v491
  %v493 = vpop.f32.mrb[0].mxu0
  %494 = vmatprep.mubr.f32.mxu0 0.0
  %495 = vmatmul.mubr.f32.gmra.mrb[0].mxu0 %v157
  %v496 = vpop.f32.mrb[0].mxu0
  %v497 = vadd.f32 %v423, %v496
  %v498 = vpop.f32.mrb[0].mxu0
  %499 = vmatprep.mubr.f32.mxu0 0.0
  %500 = vmatmul.mubr.f32.gmra.mrb[0].mxu0 %v160
  %v501 = vpop.f32.mrb[0].mxu0
  %v502 = vadd.f32 %v423, %v501
  %v503 = vpop.f32.mrb[0].mxu0
  %504 = vmatprep.mubr.f32.mxu0 0.0
  %505 = vmatmul.mubr.f32.gmra.mrb[0].mxu0 %v163
  %v506 = vpop.f32.mrb[0].mxu0
  %v507 = vadd.f32 %v423, %v506
  %v508 = vpop.f32.mrb[0].mxu0
  %509 = vmatprep.mubr.f32.mxu0 0.0
  %510 = vmatmul.mubr.f32.gmra.mrb[0].mxu0 %v166
  %v511 = vpop.f32.mrb[0].mxu0
  %v512 = vadd.f32 %v423, %v511
  %v513 = vpop.f32.mrb[0].mxu0
  %514 = vmatprep.mubr.f32.mxu0 0.0
  %515 = vmatmul.mubr.f32.gmra.mrb[0].mxu0 %v169
  %v516 = vpop.f32.mrb[0].mxu0
  %v517 = vadd.f32 %v423, %v516
  %v518 = vpop.f32.mrb[0].mxu0
  %519 = vmatprep.mubr.f32.mxu0 0.0
  %520 = vmatmul.mubr.f32.gmra.mrb[0].mxu0 %v172
  %v521 = vpop.f32.mrb[0].mxu0
  %v522 = vadd.f32 %v423, %v521
  %v523 = vpop.f32.mrb[0].mxu0
  %524 = vmatprep.mubr.f32.mxu0 0.0
  %525 = vmatmul.mubr.f32.gmra.mrb[0].mxu0 %v175
  %v526 = vpop.f32.mrb[0].mxu0
  %v527 = vadd.f32 %v423, %v526
  %v528 = vpop.f32.mrb[0].mxu0
  %529 = vdwg.mxu0
  %530 = vst.msk [vmem:[#allocation4] sm:$0xff] %vm152, %v492
  %531 = vst.msk [vmem:[#allocation4 + $0x8] sm:$0xff] %vm152, %v497
  %532 = vst.msk [vmem:[#allocation4 + $0x10] sm:$0xff] %vm152, %v502
  %533 = vst.msk [vmem:[#allocation4 + $0x18] sm:$0xff] %vm152, %v507
  %534 = vst.msk [vmem:[#allocation4 + $0x20] sm:$0xff] %vm152, %v512
  %535 = vst.msk [vmem:[#allocation4 + $0x28] sm:$0xff] %vm152, %v517
  %536 = vst.msk [vmem:[#allocation4 + $0x30] sm:$0xff] %vm152, %v522
  %537 = vst.msk [vmem:[#allocation4 + $0x38] sm:$0xff] %vm152, %v527
  %v538 = vld [vmem:[%s23] sm:$0xff]
  %v539 = vld [vmem:[%s23 + $0x8] sm:$0xff]
  %v540 = vld [vmem:[%s23 + $0x10] sm:$0xff]
  %v541 = vld [vmem:[%s23 + $0x18] sm:$0xff]
  %v542 = vld [vmem:[%s35] sm:$0x1]
  %v544 = vlaneseq
  %v545 = vshrl.u32 %v544, 7
  %v546 = vsub.s32 0, %v545
  %v547 = vrot.slane %v542, %v546
  %549 = vmatprep.subr.mxu0 0.0
  %550 = vmatpush1.msra.mxu0 %v538
  %551 = vmatprep.subr.mxu0 0.0
  %552 = vmatpush1.msra.mxu0 %v539
  %553 = vmatprep.subr.mxu0 0.0
  %554 = vmatpush1.msra.mxu0 %v540
  %555 = vmatprep.subr.mxu0 0.0
  %556 = vmatpush1.msra.mxu0 %v541
  %557 = vmatprep.subr.mxu0 0.0
  %558 = vmatpush1.msra.mxu0 0.0
  %559 = vmatprep.subr.mxu0 0.0
  %560 = vmatpush1.msra.mxu0 0.0
  %561 = vmatprep.subr.mxu0 0.0
  %562 = vmatpush1.msra.mxu0 0.0
  %563 = vmatprep.subr.mxu0 0.0
  %564 = vmatpush1.msra.mxu0 0.0
  %565 = vmatprep.subr.mxu0 0.0
  %566 = vmatpush1.msra.mxu0 0.0
  %567 = vmatprep.subr.mxu0 0.0
  %568 = vmatpush1.msra.mxu0 0.0
  %569 = vmatprep.subr.mxu0 0.0
  %570 = vmatpush1.msra.mxu0 0.0
  %571 = vmatprep.subr.mxu0 0.0
  %572 = vmatpush1.msra.mxu0 0.0
  %573 = vmatprep.subr.mxu0 0.0
  %574 = vmatpush1.msra.mxu0 0.0
  %575 = vmatprep.subr.mxu0 0.0
  %576 = vmatpush1.msra.mxu0 0.0
  %577 = vmatprep.subr.mxu0 0.0
  %578 = vmatpush1.msra.mxu0 0.0
  %579 = vmatprep.subr.mxu0 0.0
  %580 = vmatpush1.msra.mxu0 0.0
  %581 = vmatprep.subr.mxu0 0.0
  %582 = vmatpush1.msra.mxu0 0.0
  %583 = vmatprep.subr.mxu0 0.0
  %584 = vmatpush1.msra.mxu0 0.0
  %585 = vmatprep.subr.mxu0 0.0
  %586 = vmatpush1.msra.mxu0 0.0
  %587 = vmatprep.subr.mxu0 0.0
  %588 = vmatpush1.msra.mxu0 0.0
  %589 = vmatprep.subr.mxu0 0.0
  %590 = vmatpush1.msra.mxu0 0.0
  %591 = vmatprep.subr.mxu0 0.0
  %592 = vmatpush1.msra.mxu0 0.0
  %593 = vmatprep.subr.mxu0 0.0
  %594 = vmatpush1.msra.mxu0 0.0
  %595 = vmatprep.subr.mxu0 0.0
  %596 = vmatpush1.msra.mxu0 0.0
  %597 = vmatprep.subr.mxu0 0.0
  %598 = vmatpush1.msra.mxu0 0.0
  %599 = vmatprep.subr.mxu0 0.0
  %600 = vmatpush1.msra.mxu0 0.0
  %601 = vmatprep.subr.mxu0 0.0
  %602 = vmatpush1.msra.mxu0 0.0
  %603 = vmatprep.subr.mxu0 0.0
  %604 = vmatpush1.msra.mxu0 0.0
  %605 = vmatprep.subr.mxu0 0.0
  %606 = vmatpush1.msra.mxu0 0.0
  %607 = vmatprep.subr.mxu0 0.0
  %608 = vmatpush1.msra.mxu0 0.0
  %609 = vmatprep.subr.mxu0 0.0
  %610 = vmatpush1.msra.mxu0 0.0
  %611 = vmatprep.subr.mxu0 0.0
  %612 = vmatpush1.msra.mxu0 0.0
  %613 = vmatprep.mubr.f32.mxu0 0.0
  %614 = vmatmul.mubr.f32.gmra.mrb[0].mxu0 %v154
  %v615 = vpop.f32.mrb[0].mxu0
  %v616 = vadd.f32 %v547, %v615
  %v617 = vpop.f32.mrb[0].mxu0
  %618 = vmatprep.mubr.f32.mxu0 0.0
  %619 = vmatmul.mubr.f32.gmra.mrb[0].mxu0 %v157
  %v620 = vpop.f32.mrb[0].mxu0
  %v621 = vadd.f32 %v547, %v620
  %v622 = vpop.f32.mrb[0].mxu0
  %623 = vmatprep.mubr.f32.mxu0 0.0
  %624 = vmatmul.mubr.f32.gmra.mrb[0].mxu0 %v160
  %v625 = vpop.f32.mrb[0].mxu0
  %v626 = vadd.f32 %v547, %v625
  %v627 = vpop.f32.mrb[0].mxu0
  %628 = vmatprep.mubr.f32.mxu0 0.0
  %629 = vmatmul.mubr.f32.gmra.mrb[0].mxu0 %v163
  %v630 = vpop.f32.mrb[0].mxu0
  %v631 = vadd.f32 %v547, %v630
  %v632 = vpop.f32.mrb[0].mxu0
  %633 = vmatprep.mubr.f32.mxu0 0.0
  %634 = vmatmul.mubr.f32.gmra.mrb[0].mxu0 %v166
  %v635 = vpop.f32.mrb[0].mxu0
  %v636 = vadd.f32 %v547, %v635
  %v637 = vpop.f32.mrb[0].mxu0
  %638 = vmatprep.mubr.f32.mxu0 0.0
  %639 = vmatmul.mubr.f32.gmra.mrb[0].mxu0 %v169
  %v640 = vpop.f32.mrb[0].mxu0
  %v641 = vadd.f32 %v547, %v640
  %v642 = vpop.f32.mrb[0].mxu0
  %643 = vmatprep.mubr.f32.mxu0 0.0
  %644 = vmatmul.mubr.f32.gmra.mrb[0].mxu0 %v172
  %v645 = vpop.f32.mrb[0].mxu0
  %v646 = vadd.f32 %v547, %v645
  %v647 = vpop.f32.mrb[0].mxu0
  %648 = vmatprep.mubr.f32.mxu0 0.0
  %649 = vmatmul.mubr.f32.gmra.mrb[0].mxu0 %v175
  %v650 = vpop.f32.mrb[0].mxu0
  %v651 = vadd.f32 %v547, %v650
  %v652 = vpop.f32.mrb[0].mxu0
  %653 = vdwg.mxu0
  %654 = vst.msk [vmem:[#allocation5] sm:$0xff] %vm152, %v616
  %655 = vst.msk [vmem:[#allocation5 + $0x8] sm:$0xff] %vm152, %v621
  %656 = vst.msk [vmem:[#allocation5 + $0x10] sm:$0xff] %vm152, %v626
  %657 = vst.msk [vmem:[#allocation5 + $0x18] sm:$0xff] %vm152, %v631
  %658 = vst.msk [vmem:[#allocation5 + $0x20] sm:$0xff] %vm152, %v636
  %659 = vst.msk [vmem:[#allocation5 + $0x28] sm:$0xff] %vm152, %v641
  %660 = vst.msk [vmem:[#allocation5 + $0x30] sm:$0xff] %vm152, %v646
  %661 = vst.msk [vmem:[#allocation5 + $0x38] sm:$0xff] %vm152, %v651
  %v662 = vld [vmem:[%s25] sm:$0xff]
  %v663 = vld [vmem:[%s25 + $0x8] sm:$0xff]
  %v664 = vld [vmem:[%s25 + $0x10] sm:$0xff]
  %v665 = vld [vmem:[%s25 + $0x18] sm:$0xff]
  %v666 = vld [vmem:[%s37] sm:$0x1]
  %v668 = vlaneseq
  %v669 = vshrl.u32 %v668, 7
  %v670 = vsub.s32 0, %v669
  %v671 = vrot.slane %v666, %v670
  %673 = vmatprep.subr.mxu0 0.0
  %674 = vmatpush1.msra.mxu0 %v662
  %675 = vmatprep.subr.mxu0 0.0
  %676 = vmatpush1.msra.mxu0 %v663
  %677 = vmatprep.subr.mxu0 0.0
  %678 = vmatpush1.msra.mxu0 %v664
  %679 = vmatprep.subr.mxu0 0.0
  %680 = vmatpush1.msra.mxu0 %v665
  %681 = vmatprep.subr.mxu0 0.0
  %682 = vmatpush1.msra.mxu0 0.0
  %683 = vmatprep.subr.mxu0 0.0
  %684 = vmatpush1.msra.mxu0 0.0
  %685 = vmatprep.subr.mxu0 0.0
  %686 = vmatpush1.msra.mxu0 0.0
  %687 = vmatprep.subr.mxu0 0.0
  %688 = vmatpush1.msra.mxu0 0.0
  %689 = vmatprep.subr.mxu0 0.0
  %690 = vmatpush1.msra.mxu0 0.0
  %691 = vmatprep.subr.mxu0 0.0
  %692 = vmatpush1.msra.mxu0 0.0
  %693 = vmatprep.subr.mxu0 0.0
  %694 = vmatpush1.msra.mxu0 0.0
  %695 = vmatprep.subr.mxu0 0.0
  %696 = vmatpush1.msra.mxu0 0.0
  %697 = vmatprep.subr.mxu0 0.0
  %698 = vmatpush1.msra.mxu0 0.0
  %699 = vmatprep.subr.mxu0 0.0
  %700 = vmatpush1.msra.mxu0 0.0
  %701 = vmatprep.subr.mxu0 0.0
  %702 = vmatpush1.msra.mxu0 0.0
  %703 = vmatprep.subr.mxu0 0.0
  %704 = vmatpush1.msra.mxu0 0.0
  %705 = vmatprep.subr.mxu0 0.0
  %706 = vmatpush1.msra.mxu0 0.0
  %707 = vmatprep.subr.mxu0 0.0
  %708 = vmatpush1.msra.mxu0 0.0
  %709 = vmatprep.subr.mxu0 0.0
  %710 = vmatpush1.msra.mxu0 0.0
  %711 = vmatprep.subr.mxu0 0.0
  %712 = vmatpush1.msra.mxu0 0.0
  %713 = vmatprep.subr.mxu0 0.0
  %714 = vmatpush1.msra.mxu0 0.0
  %715 = vmatprep.subr.mxu0 0.0
  %716 = vmatpush1.msra.mxu0 0.0
  %717 = vmatprep.subr.mxu0 0.0
  %718 = vmatpush1.msra.mxu0 0.0
  %719 = vmatprep.subr.mxu0 0.0
  %720 = vmatpush1.msra.mxu0 0.0
  %721 = vmatprep.subr.mxu0 0.0
  %722 = vmatpush1.msra.mxu0 0.0
  %723 = vmatprep.subr.mxu0 0.0
  %724 = vmatpush1.msra.mxu0 0.0
  %725 = vmatprep.subr.mxu0 0.0
  %726 = vmatpush1.msra.mxu0 0.0
  %727 = vmatprep.subr.mxu0 0.0
  %728 = vmatpush1.msra.mxu0 0.0
  %729 = vmatprep.subr.mxu0 0.0
  %730 = vmatpush1.msra.mxu0 0.0
  %731 = vmatprep.subr.mxu0 0.0
  %732 = vmatpush1.msra.mxu0 0.0
  %733 = vmatprep.subr.mxu0 0.0
  %734 = vmatpush1.msra.mxu0 0.0
  %735 = vmatprep.subr.mxu0 0.0
  %736 = vmatpush1.msra.mxu0 0.0
  %737 = vmatprep.mubr.f32.mxu0 0.0
  %738 = vmatmul.mubr.f32.gmra.mrb[0].mxu0 %v154
  %v739 = vpop.f32.mrb[0].mxu0
  %v740 = vadd.f32 %v671, %v739
  %v741 = vpop.f32.mrb[0].mxu0
  %742 = vmatprep.mubr.f32.mxu0 0.0
  %743 = vmatmul.mubr.f32.gmra.mrb[0].mxu0 %v157
  %v744 = vpop.f32.mrb[0].mxu0
  %v745 = vadd.f32 %v671, %v744
  %v746 = vpop.f32.mrb[0].mxu0
  %747 = vmatprep.mubr.f32.mxu0 0.0
  %748 = vmatmul.mubr.f32.gmra.mrb[0].mxu0 %v160
  %v749 = vpop.f32.mrb[0].mxu0
  %v750 = vadd.f32 %v671, %v749
  %v751 = vpop.f32.mrb[0].mxu0
  %752 = vmatprep.mubr.f32.mxu0 0.0
  %753 = vmatmul.mubr.f32.gmra.mrb[0].mxu0 %v163
  %v754 = vpop.f32.mrb[0].mxu0
  %v755 = vadd.f32 %v671, %v754
  %v756 = vpop.f32.mrb[0].mxu0
  %757 = vmatprep.mubr.f32.mxu0 0.0
  %758 = vmatmul.mubr.f32.gmra.mrb[0].mxu0 %v166
  %v759 = vpop.f32.mrb[0].mxu0
  %v760 = vadd.f32 %v671, %v759
  %v761 = vpop.f32.mrb[0].mxu0
  %762 = vmatprep.mubr.f32.mxu0 0.0
  %763 = vmatmul.mubr.f32.gmra.mrb[0].mxu0 %v169
  %v764 = vpop.f32.mrb[0].mxu0
  %v765 = vadd.f32 %v671, %v764
  %v766 = vpop.f32.mrb[0].mxu0
  %767 = vmatprep.mubr.f32.mxu0 0.0
  %768 = vmatmul.mubr.f32.gmra.mrb[0].mxu0 %v172
  %v769 = vpop.f32.mrb[0].mxu0
  %v770 = vadd.f32 %v671, %v769
  %v771 = vpop.f32.mrb[0].mxu0
  %772 = vmatprep.mubr.f32.mxu0 0.0
  %773 = vmatmul.mubr.f32.gmra.mrb[0].mxu0 %v175
  %v774 = vpop.f32.mrb[0].mxu0
  %v775 = vadd.f32 %v671, %v774
  %v776 = vpop.f32.mrb[0].mxu0
  %777 = vdwg.mxu0
  %778 = vst.msk [vmem:[#allocation6] sm:$0xff] %vm152, %v740
  %779 = vst.msk [vmem:[#allocation6 + $0x8] sm:$0xff] %vm152, %v745
  %780 = vst.msk [vmem:[#allocation6 + $0x10] sm:$0xff] %vm152, %v750
  %781 = vst.msk [vmem:[#allocation6 + $0x18] sm:$0xff] %vm152, %v755
  %782 = vst.msk [vmem:[#allocation6 + $0x20] sm:$0xff] %vm152, %v760
  %783 = vst.msk [vmem:[#allocation6 + $0x28] sm:$0xff] %vm152, %v765
  %784 = vst.msk [vmem:[#allocation6 + $0x30] sm:$0xff] %vm152, %v770
  %785 = vst.msk [vmem:[#allocation6 + $0x38] sm:$0xff] %vm152, %v775
  %v786 = vld [vmem:[%s27] sm:$0xff]
  %v787 = vld [vmem:[%s27 + $0x8] sm:$0xff]
  %v788 = vld [vmem:[%s27 + $0x10] sm:$0xff]
  %v789 = vld [vmem:[%s27 + $0x18] sm:$0xff]
  %v790 = vld [vmem:[%s39] sm:$0x1]
  %v792 = vlaneseq
  %v793 = vshrl.u32 %v792, 7
  %v794 = vsub.s32 0, %v793
  %v795 = vrot.slane %v790, %v794
  %797 = vmatprep.subr.mxu0 0.0
  %798 = vmatpush1.msra.mxu0 %v786
  %799 = vmatprep.subr.mxu0 0.0
  %800 = vmatpush1.msra.mxu0 %v787
  %801 = vmatprep.subr.mxu0 0.0
  %802 = vmatpush1.msra.mxu0 %v788
  %803 = vmatprep.subr.mxu0 0.0
  %804 = vmatpush1.msra.mxu0 %v789
  %805 = vmatprep.subr.mxu0 0.0
  %806 = vmatpush1.msra.mxu0 0.0
  %807 = vmatprep.subr.mxu0 0.0
  %808 = vmatpush1.msra.mxu0 0.0
  %809 = vmatprep.subr.mxu0 0.0
  %810 = vmatpush1.msra.mxu0 0.0
  %811 = vmatprep.subr.mxu0 0.0
  %812 = vmatpush1.msra.mxu0 0.0
  %813 = vmatprep.subr.mxu0 0.0
  %814 = vmatpush1.msra.mxu0 0.0
  %815 = vmatprep.subr.mxu0 0.0
  %816 = vmatpush1.msra.mxu0 0.0
  %817 = vmatprep.subr.mxu0 0.0
  %818 = vmatpush1.msra.mxu0 0.0
  %819 = vmatprep.subr.mxu0 0.0
  %820 = vmatpush1.msra.mxu0 0.0
  %821 = vmatprep.subr.mxu0 0.0
  %822 = vmatpush1.msra.mxu0 0.0
  %823 = vmatprep.subr.mxu0 0.0
  %824 = vmatpush1.msra.mxu0 0.0
  %825 = vmatprep.subr.mxu0 0.0
  %826 = vmatpush1.msra.mxu0 0.0
  %827 = vmatprep.subr.mxu0 0.0
  %828 = vmatpush1.msra.mxu0 0.0
  %829 = vmatprep.subr.mxu0 0.0
  %830 = vmatpush1.msra.mxu0 0.0
  %831 = vmatprep.subr.mxu0 0.0
  %832 = vmatpush1.msra.mxu0 0.0
  %833 = vmatprep.subr.mxu0 0.0
  %834 = vmatpush1.msra.mxu0 0.0
  %835 = vmatprep.subr.mxu0 0.0
  %836 = vmatpush1.msra.mxu0 0.0
  %837 = vmatprep.subr.mxu0 0.0
  %838 = vmatpush1.msra.mxu0 0.0
  %839 = vmatprep.subr.mxu0 0.0
  %840 = vmatpush1.msra.mxu0 0.0
  %841 = vmatprep.subr.mxu0 0.0
  %842 = vmatpush1.msra.mxu0 0.0
  %843 = vmatprep.subr.mxu0 0.0
  %844 = vmatpush1.msra.mxu0 0.0
  %845 = vmatprep.subr.mxu0 0.0
  %846 = vmatpush1.msra.mxu0 0.0
  %847 = vmatprep.subr.mxu0 0.0
  %848 = vmatpush1.msra.mxu0 0.0
  %849 = vmatprep.subr.mxu0 0.0
  %850 = vmatpush1.msra.mxu0 0.0
  %851 = vmatprep.subr.mxu0 0.0
  %852 = vmatpush1.msra.mxu0 0.0
  %853 = vmatprep.subr.mxu0 0.0
  %854 = vmatpush1.msra.mxu0 0.0
  %855 = vmatprep.subr.mxu0 0.0
  %856 = vmatpush1.msra.mxu0 0.0
  %857 = vmatprep.subr.mxu0 0.0
  %858 = vmatpush1.msra.mxu0 0.0
  %859 = vmatprep.subr.mxu0 0.0
  %860 = vmatpush1.msra.mxu0 0.0
  %861 = vmatprep.mubr.f32.mxu0 0.0
  %862 = vmatmul.mubr.f32.gmra.mrb[0].mxu0 %v154
  %v863 = vpop.f32.mrb[0].mxu0
  %v864 = vadd.f32 %v795, %v863
  %v865 = vpop.f32.mrb[0].mxu0
  %866 = vmatprep.mubr.f32.mxu0 0.0
  %867 = vmatmul.mubr.f32.gmra.mrb[0].mxu0 %v157
  %v868 = vpop.f32.mrb[0].mxu0
  %v869 = vadd.f32 %v795, %v868
  %v870 = vpop.f32.mrb[0].mxu0
  %871 = vmatprep.mubr.f32.mxu0 0.0
  %872 = vmatmul.mubr.f32.gmra.mrb[0].mxu0 %v160
  %v873 = vpop.f32.mrb[0].mxu0
  %v874 = vadd.f32 %v795, %v873
  %v875 = vpop.f32.mrb[0].mxu0
  %876 = vmatprep.mubr.f32.mxu0 0.0
  %877 = vmatmul.mubr.f32.gmra.mrb[0].mxu0 %v163
  %v878 = vpop.f32.mrb[0].mxu0
  %v879 = vadd.f32 %v795, %v878
  %v880 = vpop.f32.mrb[0].mxu0
  %881 = vmatprep.mubr.f32.mxu0 0.0
  %882 = vmatmul.mubr.f32.gmra.mrb[0].mxu0 %v166
  %v883 = vpop.f32.mrb[0].mxu0
  %v884 = vadd.f32 %v795, %v883
  %v885 = vpop.f32.mrb[0].mxu0
  %886 = vmatprep.mubr.f32.mxu0 0.0
  %887 = vmatmul.mubr.f32.gmra.mrb[0].mxu0 %v169
  %v888 = vpop.f32.mrb[0].mxu0
  %v889 = vadd.f32 %v795, %v888
  %v890 = vpop.f32.mrb[0].mxu0
  %891 = vmatprep.mubr.f32.mxu0 0.0
  %892 = vmatmul.mubr.f32.gmra.mrb[0].mxu0 %v172
  %v893 = vpop.f32.mrb[0].mxu0
  %v894 = vadd.f32 %v795, %v893
  %v895 = vpop.f32.mrb[0].mxu0
  %896 = vmatprep.mubr.f32.mxu0 0.0
  %897 = vmatmul.mubr.f32.gmra.mrb[0].mxu0 %v175
  %v898 = vpop.f32.mrb[0].mxu0
  %v899 = vadd.f32 %v795, %v898
  %v900 = vpop.f32.mrb[0].mxu0
  %901 = vdwg.mxu0
  %902 = vst.msk [vmem:[#allocation7] sm:$0xff] %vm152, %v864
  %903 = vst.msk [vmem:[#allocation7 + $0x8] sm:$0xff] %vm152, %v869
  %904 = vst.msk [vmem:[#allocation7 + $0x10] sm:$0xff] %vm152, %v874
  %905 = vst.msk [vmem:[#allocation7 + $0x18] sm:$0xff] %vm152, %v879
  %906 = vst.msk [vmem:[#allocation7 + $0x20] sm:$0xff] %vm152, %v884
  %907 = vst.msk [vmem:[#allocation7 + $0x28] sm:$0xff] %vm152, %v889
  %908 = vst.msk [vmem:[#allocation7 + $0x30] sm:$0xff] %vm152, %v894
  %909 = vst.msk [vmem:[#allocation7 + $0x38] sm:$0xff] %vm152, %v899
  %v910 = vld [vmem:[%s9] sm:$0xff]
  %v911 = vld [vmem:[%s9 + $0x8] sm:$0xff]
  %v912 = vld [vmem:[%s9 + $0x10] sm:$0xff]
  %v913 = vld [vmem:[%s9 + $0x18] sm:$0xff]
  %v914 = vld [vmem:[%s11] sm:$0xff]
  %v915 = vld [vmem:[%s11 + $0x8] sm:$0xff]
  %v916 = vld [vmem:[%s11 + $0x10] sm:$0xff]
  %v917 = vld [vmem:[%s11 + $0x18] sm:$0xff]
  %v918 = vld [vmem:[%s13] sm:$0xff]
  %v919 = vld [vmem:[%s13 + $0x8] sm:$0xff]
  %v920 = vld [vmem:[%s13 + $0x10] sm:$0xff]
  %v921 = vld [vmem:[%s13 + $0x18] sm:$0xff]
  %v922 = vld [vmem:[%s21] sm:$0x1]
  %v923 = vld [vmem:[%s29] sm:$0xff]
  %v924 = vld [vmem:[%s29 + $0x8] sm:$0xff]
  %v925 = vld [vmem:[%s29 + $0x10] sm:$0xff]
  %v926 = vld [vmem:[%s29 + $0x18] sm:$0xff]
  %v927 = vld [vmem:[%s31] sm:$0xff]
  %v928 = vld [vmem:[%s31 + $0x8] sm:$0xff]
  %v929 = vld [vmem:[%s31 + $0x10] sm:$0xff]
  %v930 = vld [vmem:[%s31 + $0x18] sm:$0xff]
  %v931 = vld [vmem:[%s33] sm:$0xff]
  %v932 = vld [vmem:[%s33 + $0x8] sm:$0xff]
  %v933 = vld [vmem:[%s33 + $0x10] sm:$0xff]
  %v934 = vld [vmem:[%s33 + $0x18] sm:$0xff]
  %v935 = vld [vmem:[%s41] sm:$0x1]
  loop: start=0, step=1, limit=8
  $region122: #{vnmt_model_forward.2} parent=0 // loop_pre_header
    _
  $region123: #{vnmt_model_forward.2} parent=0 // loop_header
    %s937 = sphi 0, %s941
    %p938 = scmp.ge.s32.totalorder %s937, 8
    %v942 = vphi 0.0, %v1194
    %v943 = vphi 0.0, %v1440
    %v944 = vphi 0.0, %v1441
    %v945 = vphi 0.0, %v1442
  $region124: #{vnmt_model_forward.2} parent=0 // loop_header_branch
    %940 = sbr.rel (%p938) target = $region128
  $region125: #{vnmt_model_forward.2} parent=0 // loop_body
    %s946 = smul.u32 %s937, 8
    %s947 = ssub.s32 7, %s937
    %s948 = smul.u32 %s947, 8
    %s949 = scalar_lea.vmem [#allocation2], %s946
    %v950 = vld [vmem:[%s949] sm:$0xff]
    %s951 = scalar_lea.vmem [#allocation3], %s946
    %v952 = vld [vmem:[%s951] sm:$0xff]
    %s953 = scalar_lea.vmem [#allocation4], %s946
    %v954 = vld [vmem:[%s953] sm:$0xff]
    %v956 = vsel %vm152, %v942, 0
    %958 = vmatprep.subr.mxu0 0.0
    %959 = vmatpush1.msra.mxu0 %v910
    %960 = vmatprep.subr.mxu0 0.0
    %961 = vmatpush1.msra.mxu0 %v911
    %962 = vmatprep.subr.mxu0 0.0
    %963 = vmatpush1.msra.mxu0 %v912
    %964 = vmatprep.subr.mxu0 0.0
    %965 = vmatpush1.msra.mxu0 %v913
    %966 = vmatprep.subr.mxu0 0.0
    %967 = vmatpush1.msra.mxu0 0.0
    %968 = vmatprep.subr.mxu0 0.0
    %969 = vmatpush1.msra.mxu0 0.0
    %970 = vmatprep.subr.mxu0 0.0
    %971 = vmatpush1.msra.mxu0 0.0
    %972 = vmatprep.subr.mxu0 0.0
    %973 = vmatpush1.msra.mxu0 0.0
    %974 = vmatprep.subr.mxu0 0.0
    %975 = vmatpush1.msra.mxu0 0.0
    %976 = vmatprep.subr.mxu0 0.0
    %977 = vmatpush1.msra.mxu0 0.0
    %978 = vmatprep.subr.mxu0 0.0
    %979 = vmatpush1.msra.mxu0 0.0
    %980 = vmatprep.subr.mxu0 0.0
    %981 = vmatpush1.msra.mxu0 0.0
    %982 = vmatprep.subr.mxu0 0.0
    %983 = vmatpush1.msra.mxu0 0.0
    %984 = vmatprep.subr.mxu0 0.0
    %985 = vmatpush1.msra.mxu0 0.0
    %986 = vmatprep.subr.mxu0 0.0
    %987 = vmatpush1.msra.mxu0 0.0
    %988 = vmatprep.subr.mxu0 0.0
    %989 = vmatpush1.msra.mxu0 0.0
    %990 = vmatprep.subr.mxu0 0.0
    %991 = vmatpush1.msra.mxu0 0.0
    %992 = vmatprep.subr.mxu0 0.0
    %993 = vmatpush1.msra.mxu0 0.0
    %994 = vmatprep.subr.mxu0 0.0
    %995 = vmatpush1.msra.mxu0 0.0
    %996 = vmatprep.subr.mxu0 0.0
    %997 = vmatpush1.msra.mxu0 0.0
    %998 = vmatprep.subr.mxu0 0.0
    %999 = vmatpush1.msra.mxu0 0.0
    %1000 = vmatprep.subr.mxu0 0.0
    %1001 = vmatpush1.msra.mxu0 0.0
    %1002 = vmatprep.subr.mxu0 0.0
    %1003 = vmatpush1.msra.mxu0 0.0
    %1004 = vmatprep.subr.mxu0 0.0
    %1005 = vmatpush1.msra.mxu0 0.0
    %1006 = vmatprep.subr.mxu0 0.0
    %1007 = vmatpush1.msra.mxu0 0.0
    %1008 = vmatprep.subr.mxu0 0.0
    %1009 = vmatpush1.msra.mxu0 0.0
    %1010 = vmatprep.subr.mxu0 0.0
    %1011 = vmatpush1.msra.mxu0 0.0
    %1012 = vmatprep.subr.mxu0 0.0
    %1013 = vmatpush1.msra.mxu0 0.0
    %1014 = vmatprep.subr.mxu0 0.0
    %1015 = vmatpush1.msra.mxu0 0.0
    %1016 = vmatprep.subr.mxu0 0.0
    %1017 = vmatpush1.msra.mxu0 0.0
    %1018 = vmatprep.subr.mxu0 0.0
    %1019 = vmatpush1.msra.mxu0 0.0
    %1020 = vmatprep.subr.mxu0 0.0
    %1021 = vmatpush1.msra.mxu0 0.0
    %1022 = vmatprep.mubr.f32.mxu0 0.0
    %1023 = vmatmul.mubr.f32.gmra.mrb[0].mxu0 %v956
    %v1024 = vpop.f32.mrb[0].mxu0
    %v1025 = vadd.f32 0.0, %v1024
    %v1026 = vpop.f32.mrb[0].mxu0
    %1027 = vdwg.mxu0
    %1028 = vmatprep.subr.mxu0 0.0
    %1029 = vmatpush1.msra.mxu0 %v914
    %1030 = vmatprep.subr.mxu0 0.0
    %1031 = vmatpush1.msra.mxu0 %v915
    %1032 = vmatprep.subr.mxu0 0.0
    %1033 = vmatpush1.msra.mxu0 %v916
    %1034 = vmatprep.subr.mxu0 0.0
    %1035 = vmatpush1.msra.mxu0 %v917
    %1036 = vmatprep.subr.mxu0 0.0
    %1037 = vmatpush1.msra.mxu0 0.0
    %1038 = vmatprep.subr.mxu0 0.0
    %1039 = vmatpush1.msra.mxu0 0.0
    %1040 = vmatprep.subr.mxu0 0.0
    %1041 = vmatpush1.msra.mxu0 0.0
    %1042 = vmatprep.subr.mxu0 0.0
    %1043 = vmatpush1.msra.mxu0 0.0
    %1044 = vmatprep.subr.mxu0 0.0
    %1045 = vmatpush1.msra.mxu0 0.0
    %1046 = vmatprep.subr.mxu0 0.0
    %1047 = vmatpush1.msra.mxu0 0.0
    %1048 = vmatprep.subr.mxu0 0.0
    %1049 = vmatpush1.msra.mxu0 0.0
    %1050 = vmatprep.subr.mxu0 0.0
    %1051 = vmatpush1.msra.mxu0 0.0
    %1052 = vmatprep.subr.mxu0 0.0
    %1053 = vmatpush1.msra.mxu0 0.0
    %1054 = vmatprep.subr.mxu0 0.0
    %1055 = vmatpush1.msra.mxu0 0.0
    %1056 = vmatprep.subr.mxu0 0.0
    %1057 = vmatpush1.msra.mxu0 0.0
    %1058 = vmatprep.subr.mxu0 0.0
    %1059 = vmatpush1.msra.mxu0 0.0
    %1060 = vmatprep.subr.mxu0 0.0
    %1061 = vmatpush1.msra.mxu0 0.0
    %1062 = vmatprep.subr.mxu0 0.0
    %1063 = vmatpush1.msra.mxu0 0.0
    %1064 = vmatprep.subr.mxu0 0.0
    %1065 = vmatpush1.msra.mxu0 0.0
    %1066 = vmatprep.subr.mxu0 0.0
    %1067 = vmatpush1.msra.mxu0 0.0
    %1068 = vmatprep.subr.mxu0 0.0
    %1069 = vmatpush1.msra.mxu0 0.0
    %1070 = vmatprep.subr.mxu0 0.0
    %1071 = vmatpush1.msra.mxu0 0.0
    %1072 = vmatprep.subr.mxu0 0.0
    %1073 = vmatpush1.msra.mxu0 0.0
    %1074 = vmatprep.subr.mxu0 0.0
    %1075 = vmatpush1.msra.mxu0 0.0
    %1076 = vmatprep.subr.mxu0 0.0
    %1077 = vmatpush1.msra.mxu0 0.0
    %1078 = vmatprep.subr.mxu0 0.0
    %1079 = vmatpush1.msra.mxu0 0.0
    %1080 = vmatprep.subr.mxu0 0.0
    %1081 = vmatpush1.msra.mxu0 0.0
    %1082 = vmatprep.subr.mxu0 0.0
    %1083 = vmatpush1.msra.mxu0 0.0
    %1084 = vmatprep.subr.mxu0 0.0
    %1085 = vmatpush1.msra.mxu0 0.0
    %1086 = vmatprep.subr.mxu0 0.0
    %1087 = vmatpush1.msra.mxu0 0.0
    %1088 = vmatprep.subr.mxu0 0.0
    %1089 = vmatpush1.msra.mxu0 0.0
    %1090 = vmatprep.subr.mxu0 0.0
    %1091 = vmatpush1.msra.mxu0 0.0
    %1092 = vmatprep.mubr.f32.mxu0 0.0
    %1093 = vmatmul.mubr.f32.gmra.mrb[0].mxu0 %v956
    %v1094 = vpop.f32.mrb[0].mxu0
    %v1095 = vadd.f32 0.0, %v1094
    %v1096 = vpop.f32.mrb[0].mxu0
    %1097 = vdwg.mxu0
    %v1099 = vlaneseq
    %v1100 = vshrl.u32 %v1099, 7
    %v1101 = vsub.s32 0, %v1100
    %v1102 = vrot.slane %v922, %v1101
    %1104 = vmatprep.subr.mxu0 0.0
    %1105 = vmatpush1.msra.mxu0 %v918
    %1106 = vmatprep.subr.mxu0 0.0
    %1107 = vmatpush1.msra.mxu0 %v919
    %1108 = vmatprep.subr.mxu0 0.0
    %1109 = vmatpush1.msra.mxu0 %v920
    %1110 = vmatprep.subr.mxu0 0.0
    %1111 = vmatpush1.msra.mxu0 %v921
    %1112 = vmatprep.subr.mxu0 0.0
    %1113 = vmatpush1.msra.mxu0 0.0
    %1114 = vmatprep.subr.mxu0 0.0
    %1115 = vmatpush1.msra.mxu0 0.0
    %1116 = vmatprep.subr.mxu0 0.0
    %1117 = vmatpush1.msra.mxu0 0.0
    %1118 = vmatprep.subr.mxu0 0.0
    %1119 = vmatpush1.msra.mxu0 0.0
    %1120 = vmatprep.subr.mxu0 0.0
    %1121 = vmatpush1.msra.mxu0 0.0
    %1122 = vmatprep.subr.mxu0 0.0
    %1123 = vmatpush1.msra.mxu0 0.0
    %1124 = vmatprep.subr.mxu0 0.0
    %1125 = vmatpush1.msra.mxu0 0.0
    %1126 = vmatprep.subr.mxu0 0.0
    %1127 = vmatpush1.msra.mxu0 0.0
    %1128 = vmatprep.subr.mxu0 0.0
    %1129 = vmatpush1.msra.mxu0 0.0
    %1130 = vmatprep.subr.mxu0 0.0
    %1131 = vmatpush1.msra.mxu0 0.0
    %1132 = vmatprep.subr.mxu0 0.0
    %1133 = vmatpush1.msra.mxu0 0.0
    %1134 = vmatprep.subr.mxu0 0.0
    %1135 = vmatpush1.msra.mxu0 0.0
    %1136 = vmatprep.subr.mxu0 0.0
    %1137 = vmatpush1.msra.mxu0 0.0
    %1138 = vmatprep.subr.mxu0 0.0
    %1139 = vmatpush1.msra.mxu0 0.0
    %1140 = vmatprep.subr.mxu0 0.0
    %1141 = vmatpush1.msra.mxu0 0.0
    %1142 = vmatprep.subr.mxu0 0.0
    %1143 = vmatpush1.msra.mxu0 0.0
    %1144 = vmatprep.subr.mxu0 0.0
    %1145 = vmatpush1.msra.mxu0 0.0
    %1146 = vmatprep.subr.mxu0 0.0
    %1147 = vmatpush1.msra.mxu0 0.0
    %1148 = vmatprep.subr.mxu0 0.0
    %1149 = vmatpush1.msra.mxu0 0.0
    %1150 = vmatprep.subr.mxu0 0.0
    %1151 = vmatpush1.msra.mxu0 0.0
    %1152 = vmatprep.subr.mxu0 0.0
    %1153 = vmatpush1.msra.mxu0 0.0
    %1154 = vmatprep.subr.mxu0 0.0
    %1155 = vmatpush1.msra.mxu0 0.0
    %1156 = vmatprep.subr.mxu0 0.0
    %1157 = vmatpush1.msra.mxu0 0.0
    %1158 = vmatprep.subr.mxu0 0.0
    %1159 = vmatpush1.msra.mxu0 0.0
    %1160 = vmatprep.subr.mxu0 0.0
    %1161 = vmatpush1.msra.mxu0 0.0
    %1162 = vmatprep.subr.mxu0 0.0
    %1163 = vmatpush1.msra.mxu0 0.0
    %1164 = vmatprep.subr.mxu0 0.0
    %1165 = vmatpush1.msra.mxu0 0.0
    %1166 = vmatprep.subr.mxu0 0.0
    %1167 = vmatpush1.msra.mxu0 0.0
    %1168 = vmatprep.mubr.f32.mxu0 0.0
    %1169 = vmatmul.mubr.f32.gmra.mrb[0].mxu0 %v956
    %v1170 = vpop.f32.mrb[0].mxu0
    %v1171 = vadd.f32 %v1102, %v1170
    %v1172 = vpop.f32.mrb[0].mxu0
    %1173 = vdwg.mxu0
    %v1174 = vadd.f32 %v950, %v1025
    %v1175 = vxor.u32 %v1174, 2147483648
    %v1176 = vmul.f32 %v1175, 1.442695
    %v1177 = vpow.pop %v1176
    %v1178 = vadd.f32 %v1177, 1.0
    %v1179 = vrcp.pop %v1178
    %v1180 = vmul.f32 1.0, %v1179
    %v1181 = vadd.f32 %v952, %v1095
    %v1182 = vxor.u32 %v1181, 2147483648
    %v1183 = vmul.f32 %v1182, 1.442695
    %v1184 = vpow.pop %v1183
    %v1185 = vadd.f32 %v1184, 1.0
    %v1186 = vrcp.pop %v1185
    %v1187 = vmul.f32 1.0, %v1186
    %v1188 = vmul.f32 %v1180, %v1171
    %v1189 = vadd.f32 %v954, %v1188
    %v1190 = vtanh.pop %v1189
    %v1191 = vsub.f32 1.0, %v1187
    %v1192 = vmul.f32 %v1191, %v1190
    %v1193 = vmul.f32 %v1187, %v942
    %v1194 = vadd.f32 %v1192, %v1193
    %s1195 = scalar_lea.vmem [#allocation5], %s948
    %v1196 = vld [vmem:[%s1195] sm:$0xff]
    %s1197 = scalar_lea.vmem [#allocation6], %s948
    %v1198 = vld [vmem:[%s1197] sm:$0xff]
    %s1199 = scalar_lea.vmem [#allocation7], %s948
    %v1200 = vld [vmem:[%s1199] sm:$0xff]
    %v1202 = vsel %vm152, %v943, 0
    %1204 = vmatprep.subr.mxu0 0.0
    %1205 = vmatpush1.msra.mxu0 %v923
    %1206 = vmatprep.subr.mxu0 0.0
    %1207 = vmatpush1.msra.mxu0 %v924
    %1208 = vmatprep.subr.mxu0 0.0
    %1209 = vmatpush1.msra.mxu0 %v925
    %1210 = vmatprep.subr.mxu0 0.0
    %1211 = vmatpush1.msra.mxu0 %v926
    %1212 = vmatprep.subr.mxu0 0.0
    %1213 = vmatpush1.msra.mxu0 0.0
    %1214 = vmatprep.subr.mxu0 0.0
    %1215 = vmatpush1.msra.mxu0 0.0
    %1216 = vmatprep.subr.mxu0 0.0
    %1217 = vmatpush1.msra.mxu0 0.0
    %1218 = vmatprep.subr.mxu0 0.0
    %1219 = vmatpush1.msra.mxu0 0.0
    %1220 = vmatprep.subr.mxu0 0.0
    %1221 = vmatpush1.msra.mxu0 0.0
    %1222 = vmatprep.subr.mxu0 0.0
    %1223 = vmatpush1.msra.mxu0 0.0
    %1224 = vmatprep.subr.mxu0 0.0
    %1225 = vmatpush1.msra.mxu0 0.0
    %1226 = vmatprep.subr.mxu0 0.0
    %1227 = vmatpush1.msra.mxu0 0.0
    %1228 = vmatprep.subr.mxu0 0.0
    %1229 = vmatpush1.msra.mxu0 0.0
    %1230 = vmatprep.subr.mxu0 0.0
    %1231 = vmatpush1.msra.mxu0 0.0
    %1232 = vmatprep.subr.mxu0 0.0
    %1233 = vmatpush1.msra.mxu0 0.0
    %1234 = vmatprep.subr.mxu0 0.0
    %1235 = vmatpush1.msra.mxu0 0.0
    %1236 = vmatprep.subr.mxu0 0.0
    %1237 = vmatpush1.msra.mxu0 0.0
    %1238 = vmatprep.subr.mxu0 0.0
    %1239 = vmatpush1.msra.mxu0 0.0
    %1240 = vmatprep.subr.mxu0 0.0
    %1241 = vmatpush1.msra.mxu0 0.0
    %1242 = vmatprep.subr.mxu0 0.0
    %1243 = vmatpush1.msra.mxu0 0.0
    %1244 = vmatprep.subr.mxu0 0.0
    %1245 = vmatpush1.msra.mxu0 0.0
    %1246 = vmatprep.subr.mxu0 0.0
    %1247 = vmatpush1.msra.mxu0 0.0
    %1248 = vmatprep.subr.mxu0 0.0
    %1249 = vmatpush1.msra.mxu0 0.0
    %1250 = vmatprep.subr.mxu0 0.0
    %1251 = vmatpush1.msra.mxu0 0.0
    %1252 = vmatprep.subr.mxu0 0.0
    %1253 = vmatpush1.msra.mxu0 0.0
    %1254 = vmatprep.subr.mxu0 0.0
    %1255 = vmatpush1.msra.mxu0 0.0
    %1256 = vmatprep.subr.mxu0 0.0
    %1257 = vmatpush1.msra.mxu0 0.0
    %1258 = vmatprep.subr.mxu0 0.0
    %1259 = vmatpush1.msra.mxu0 0.0
    %1260 = vmatprep.subr.mxu0 0.0
    %1261 = vmatpush1.msra.mxu0 0.0
    %1262 = vmatprep.subr.mxu0 0.0
    %1263 = vmatpush1.msra.mxu0 0.0
    %1264 = vmatprep.subr.mxu0 0.0
    %1265 = vmatpush1.msra.mxu0 0.0
    %1266 = vmatprep.subr.mxu0 0.0
    %1267 = vmatpush1.msra.mxu0 0.0
    %1268 = vmatprep.mubr.f32.mxu0 0.0
    %1269 = vmatmul.mubr.f32.gmra.mrb[0].mxu0 %v1202
    %v1270 = vpop.f32.mrb[0].mxu0
    %v1271 = vadd.f32 0.0, %v1270
    %v1272 = vpop.f32.mrb[0].mxu0
    %1273 = vdwg.mxu0
    %1274 = vmatprep.subr.mxu0 0.0
    %1275 = vmatpush1.msra.mxu0 %v927
    %1276 = vmatprep.subr.mxu0 0.0
    %1277 = vmatpush1.msra.mxu0 %v928
    %1278 = vmatprep.subr.mxu0 0.0
    %1279 = vmatpush1.msra.mxu0 %v929
    %1280 = vmatprep.subr.mxu0 0.0
    %1281 = vmatpush1.msra.mxu0 %v930
    %1282 = vmatprep.subr.mxu0 0.0
    %1283 = vmatpush1.msra.mxu0 0.0
    %1284 = vmatprep.subr.mxu0 0.0
    %1285 = vmatpush1.msra.mxu0 0.0
    %1286 = vmatprep.subr.mxu0 0.0
    %1287 = vmatpush1.msra.mxu0 0.0
    %1288 = vmatprep.subr.mxu0 0.0
    %1289 = vmatpush1.msra.mxu0 0.0
    %1290 = vmatprep.subr.mxu0 0.0
    %1291 = vmatpush1.msra.mxu0 0.0
    %1292 = vmatprep.subr.mxu0 0.0
    %1293 = vmatpush1.msra.mxu0 0.0
    %1294 = vmatprep.subr.mxu0 0.0
    %1295 = vmatpush1.msra.mxu0 0.0
    %1296 = vmatprep.subr.mxu0 0.0
    %1297 = vmatpush1.msra.mxu0 0.0
    %1298 = vmatprep.subr.mxu0 0.0
    %1299 = vmatpush1.msra.mxu0 0.0
    %1300 = vmatprep.subr.mxu0 0.0
    %1301 = vmatpush1.msra.mxu0 0.0
    %1302 = vmatprep.subr.mxu0 0.0
    %1303 = vmatpush1.msra.mxu0 0.0
    %1304 = vmatprep.subr.mxu0 0.0
    %1305 = vmatpush1.msra.mxu0 0.0
    %1306 = vmatprep.subr.mxu0 0.0
    %1307 = vmatpush1.msra.mxu0 0.0
    %1308 = vmatprep.subr.mxu0 0.0
    %1309 = vmatpush1.msra.mxu0 0.0
    %1310 = vmatprep.subr.mxu0 0.0
    %1311 = vmatpush1.msra.mxu0 0.0
    %1312 = vmatprep.subr.mxu0 0.0
    %1313 = vmatpush1.msra.mxu0 0.0
    %1314 = vmatprep.subr.mxu0 0.0
    %1315 = vmatpush1.msra.mxu0 0.0
    %1316 = vmatprep.subr.mxu0 0.0
    %1317 = vmatpush1.msra.mxu0 0.0
    %1318 = vmatprep.subr.mxu0 0.0
    %1319 = vmatpush1.msra.mxu0 0.0
    %1320 = vmatprep.subr.mxu0 0.0
    %1321 = vmatpush1.msra.mxu0 0.0
    %1322 = vmatprep.subr.mxu0 0.0
    %1323 = vmatpush1.msra.mxu0 0.0
    %1324 = vmatprep.subr.mxu0 0.0
    %1325 = vmatpush1.msra.mxu0 0.0
    %1326 = vmatprep.subr.mxu0 0.0
    %1327 = vmatpush1.msra.mxu0 0.0
    %1328 = vmatprep.subr.mxu0 0.0
    %1329 = vmatpush1.msra.mxu0 0.0
    %1330 = vmatprep.subr.mxu0 0.0
    %1331 = vmatpush1.msra.mxu0 0.0
    %1332 = vmatprep.subr.mxu0 0.0
    %1333 = vmatpush1.msra.mxu0 0.0
    %1334 = vmatprep.subr.mxu0 0.0
    %1335 = vmatpush1.msra.mxu0 0.0
    %1336 = vmatprep.subr.mxu0 0.0
    %1337 = vmatpush1.msra.mxu0 0.0
    %1338 = vmatprep.mubr.f32.mxu0 0.0
    %1339 = vmatmul.mubr.f32.gmra.mrb[0].mxu0 %v1202
    %v1340 = vpop.f32.mrb[0].mxu0
    %v1341 = vadd.f32 0.0, %v1340
    %v1342 = vpop.f32.mrb[0].mxu0
    %1343 = vdwg.mxu0
    %v1345 = vlaneseq
    %v1346 = vshrl.u32 %v1345, 7
    %v1347 = vsub.s32 0, %v1346
    %v1348 = vrot.slane %v935, %v1347
    %1350 = vmatprep.subr.mxu0 0.0
    %1351 = vmatpush1.msra.mxu0 %v931
    %1352 = vmatprep.subr.mxu0 0.0
    %1353 = vmatpush1.msra.mxu0 %v932
    %1354 = vmatprep.subr.mxu0 0.0
    %1355 = vmatpush1.msra.mxu0 %v933
    %1356 = vmatprep.subr.mxu0 0.0
    %1357 = vmatpush1.msra.mxu0 %v934
    %1358 = vmatprep.subr.mxu0 0.0
    %1359 = vmatpush1.msra.mxu0 0.0
    %1360 = vmatprep.subr.mxu0 0.0
    %1361 = vmatpush1.msra.mxu0 0.0
    %1362 = vmatprep.subr.mxu0 0.0
    %1363 = vmatpush1.msra.mxu0 0.0
    %1364 = vmatprep.subr.mxu0 0.0
    %1365 = vmatpush1.msra.mxu0 0.0
    %1366 = vmatprep.subr.mxu0 0.0
    %1367 = vmatpush1.msra.mxu0 0.0
    %1368 = vmatprep.subr.mxu0 0.0
    %1369 = vmatpush1.msra.mxu0 0.0
    %1370 = vmatprep.subr.mxu0 0.0
    %1371 = vmatpush1.msra.mxu0 0.0
    %1372 = vmatprep.subr.mxu0 0.0
    %1373 = vmatpush1.msra.mxu0 0.0
    %1374 = vmatprep.subr.mxu0 0.0
    %1375 = vmatpush1.msra.mxu0 0.0
    %1376 = vmatprep.subr.mxu0 0.0
    %1377 = vmatpush1.msra.mxu0 0.0
    %1378 = vmatprep.subr.mxu0 0.0
    %1379 = vmatpush1.msra.mxu0 0.0
    %1380 = vmatprep.subr.mxu0 0.0
    %1381 = vmatpush1.msra.mxu0 0.0
    %1382 = vmatprep.subr.mxu0 0.0
    %1383 = vmatpush1.msra.mxu0 0.0
    %1384 = vmatprep.subr.mxu0 0.0
    %1385 = vmatpush1.msra.mxu0 0.0
    %1386 = vmatprep.subr.mxu0 0.0
    %1387 = vmatpush1.msra.mxu0 0.0
    %1388 = vmatprep.subr.mxu0 0.0
    %1389 = vmatpush1.msra.mxu0 0.0
    %1390 = vmatprep.subr.mxu0 0.0
    %1391 = vmatpush1.msra.mxu0 0.0
    %1392 = vmatprep.subr.mxu0 0.0
    %1393 = vmatpush1.msra.mxu0 0.0
    %1394 = vmatprep.subr.mxu0 0.0
    %1395 = vmatpush1.msra.mxu0 0.0
    %1396 = vmatprep.subr.mxu0 0.0
    %1397 = vmatpush1.msra.mxu0 0.0
    %1398 = vmatprep.subr.mxu0 0.0
    %1399 = vmatpush1.msra.mxu0 0.0
    %1400 = vmatprep.subr.mxu0 0.0
    %1401 = vmatpush1.msra.mxu0 0.0
    %1402 = vmatprep.subr.mxu0 0.0
    %1403 = vmatpush1.msra.mxu0 0.0
    %1404 = vmatprep.subr.mxu0 0.0
    %1405 = vmatpush1.msra.mxu0 0.0
    %1406 = vmatprep.subr.mxu0 0.0
    %1407 = vmatpush1.msra.mxu0 0.0
    %1408 = vmatprep.subr.mxu0 0.0
    %1409 = vmatpush1.msra.mxu0 0.0
    %1410 = vmatprep.subr.mxu0 0.0
    %1411 = vmatpush1.msra.mxu0 0.0
    %1412 = vmatprep.subr.mxu0 0.0
    %1413 = vmatpush1.msra.mxu0 0.0
    %1414 = vmatprep.mubr.f32.mxu0 0.0
    %1415 = vmatmul.mubr.f32.gmra.mrb[0].mxu0 %v1202
    %v1416 = vpop.f32.mrb[0].mxu0
    %v1417 = vadd.f32 %v1348, %v1416
    %v1418 = vpop.f32.mrb[0].mxu0
    %1419 = vdwg.mxu0
    %v1420 = vadd.f32 %v1196, %v1271
    %v1421 = vxor.u32 %v1420, 2147483648
    %v1422 = vmul.f32 %v1421, 1.442695
    %v1423 = vpow.pop %v1422
    %v1424 = vadd.f32 %v1423, 1.0
    %v1425 = vrcp.pop %v1424
    %v1426 = vmul.f32 1.0, %v1425
    %v1427 = vadd.f32 %v1198, %v1341
    %v1428 = vxor.u32 %v1427, 2147483648
    %v1429 = vmul.f32 %v1428, 1.442695
    %v1430 = vpow.pop %v1429
    %v1431 = vadd.f32 %v1430, 1.0
    %v1432 = vrcp.pop %v1431
    %v1433 = vmul.f32 1.0, %v1432
    %v1434 = vmul.f32 %v1426, %v1417
    %v1435 = vadd.f32 %v1200, %v1434
    %v1436 = vtanh.pop %v1435
    %v1437 = vsub.f32 1.0, %v1433
    %v1438 = vmul.f32 %v1437, %v1436
    %v1439 = vmul.f32 %v1433, %v943
    %v1440 = vadd.f32 %v1438, %v1439
    %v1441 = vadd.f32 %v944, %v1194
    %v1442 = vadd.f32 %v945, %v1440
  $region126: #{vnmt_model_forward.2} parent=0 // loop_footer
    %s941 = sadd.s32 1, %s937
  $region127: #{vnmt_model_forward.2} parent=0 // loop_footer_branch
    %936 = sbr.rel target = $region123
  $region128: #{vnmt_model_forward.2} parent=0 // loop_exit
    _
  %v1443 = vmul.f32 %v944, 0.125
  %v1444 = vmul.f32 %v945, 0.125
  %v1445 = vld [vmem:[%s43] sm:$0xff]
  %v1446 = vld [vmem:[%s43 + $0x8] sm:$0xff]
  %v1447 = vld [vmem:[%s43 + $0x10] sm:$0xff]
  %v1448 = vld [vmem:[%s43 + $0x18] sm:$0xff]
  %v1449 = vld [vmem:[%s45] sm:$0xff]
  %v1450 = vld [vmem:[%s45 + $0x8] sm:$0xff]
  %v1451 = vld [vmem:[%s45 + $0x10] sm:$0xff]
  %v1452 = vld [vmem:[%s45 + $0x18] sm:$0xff]
  %v1454 = vsel %vm152, %v1444, 0
  %1456 = vmatprep.subr.mxu0 0.0
  %1457 = vmatpush1.msra.mxu0 %v1449
  %1458 = vmatprep.subr.mxu0 0.0
  %1459 = vmatpush1.msra.mxu0 %v1450
  %1460 = vmatprep.subr.mxu0 0.0
  %1461 = vmatpush1.msra.mxu0 %v1451
  %1462 = vmatprep.subr.mxu0 0.0
  %1463 = vmatpush1.msra.mxu0 %v1452
  %1464 = vmatprep.subr.mxu0 0.0
  %1465 = vmatpush1.msra.mxu0 0.0
  %1466 = vmatprep.subr.mxu0 0.0
  %1467 = vmatpush1.msra.mxu0 0.0
  %1468 = vmatprep.subr.mxu0 0.0
  %1469 = vmatpush1.msra.mxu0 0.0
  %1470 = vmatprep.subr.mxu0 0.0
  %1471 = vmatpush1.msra.mxu0 0.0
  %1472 = vmatprep.subr.mxu0 0.0
  %1473 = vmatpush1.msra.mxu0 0.0
  %1474 = vmatprep.subr.mxu0 0.0
  %1475 = vmatpush1.msra.mxu0 0.0
  %1476 = vmatprep.subr.mxu0 0.0
  %1477 = vmatpush1.msra.mxu0 0.0
  %1478 = vmatprep.subr.mxu0 0.0
  %1479 = vmatpush1.msra.mxu0 0.0
  %1480 = vmatprep.subr.mxu0 0.0
  %1481 = vmatpush1.msra.mxu0 0.0
  %1482 = vmatprep.subr.mxu0 0.0
  %1483 = vmatpush1.msra.mxu0 0.0
  %1484 = vmatprep.subr.mxu0 0.0
  %1485 = vmatpush1.msra.mxu0 0.0
  %1486 = vmatprep.subr.mxu0 0.0
  %1487 = vmatpush1.msra.mxu0 0.0
  %1488 = vmatprep.subr.mxu0 0.0
  %1489 = vmatpush1.msra.mxu0 0.0
  %1490 = vmatprep.subr.mxu0 0.0
  %1491 = vmatpush1.msra.mxu0 0.0
  %1492 = vmatprep.subr.mxu0 0.0
  %1493 = vmatpush1.msra.mxu0 0.0
  %1494 = vmatprep.subr.mxu0 0.0
  %1495 = vmatpush1.msra.mxu0 0.0
  %1496 = vmatprep.subr.mxu0 0.0
  %1497 = vmatpush1.msra.mxu0 0.0
  %1498 = vmatprep.subr.mxu0 0.0
  %1499 = vmatpush1.msra.mxu0 0.0
  %1500 = vmatprep.subr.mxu0 0.0
  %1501 = vmatpush1.msra.mxu0 0.0
  %1502 = vmatprep.subr.mxu0 0.0
  %1503 = vmatpush1.msra.mxu0 0.0
  %1504 = vmatprep.subr.mxu0 0.0
  %1505 = vmatpush1.msra.mxu0 0.0
  %1506 = vmatprep.subr.mxu0 0.0
  %1507 = vmatpush1.msra.mxu0 0.0
  %1508 = vmatprep.subr.mxu0 0.0
  %1509 = vmatpush1.msra.mxu0 0.0
  %1510 = vmatprep.subr.mxu0 0.0
  %1511 = vmatpush1.msra.mxu0 0.0
  %1512 = vmatprep.subr.mxu0 0.0
  %1513 = vmatpush1.msra.mxu0 0.0
  %1514 = vmatprep.subr.mxu0 0.0
  %1515 = vmatpush1.msra.mxu0 0.0
  %1516 = vmatprep.subr.mxu0 0.0
  %1517 = vmatpush1.msra.mxu0 0.0
  %1518 = vmatprep.subr.mxu0 0.0
  %1519 = vmatpush1.msra.mxu0 0.0
  %1520 = vmatprep.mubr.f32.mxu0 0.0
  %1521 = vmatmul.mubr.f32.gmra.mrb[0].mxu0 %v1454
  %v1522 = vpop.f32.mrb[0].mxu0
  %v1523 = vadd.f32 0.0, %v1522
  %v1524 = vpop.f32.mrb[0].mxu0
  %1525 = vdwg.mxu0
  %v1527 = vsel %vm152, %v1443, 0
  %1529 = vmatprep.subr.mxu0 0.0
  %1530 = vmatpush1.msra.mxu0 %v1445
  %1531 = vmatprep.subr.mxu0 0.0
  %1532 = vmatpush1.msra.mxu0 %v1446
  %1533 = vmatprep.subr.mxu0 0.0
  %1534 = vmatpush1.msra.mxu0 %v1447
  %1535 = vmatprep.subr.mxu0 0.0
  %1536 = vmatpush1.msra.mxu0 %v1448
  %1537 = vmatprep.subr.mxu0 0.0
  %1538 = vmatpush1.msra.mxu0 0.0
  %1539 = vmatprep.subr.mxu0 0.0
  %1540 = vmatpush1.msra.mxu0 0.0
  %1541 = vmatprep.subr.mxu0 0.0
  %1542 = vmatpush1.msra.mxu0 0.0
  %1543 = vmatprep.subr.mxu0 0.0
  %1544 = vmatpush1.msra.mxu0 0.0
  %1545 = vmatprep.subr.mxu0 0.0
  %1546 = vmatpush1.msra.mxu0 0.0
  %1547 = vmatprep.subr.mxu0 0.0
  %1548 = vmatpush1.msra.mxu0 0.0
  %1549 = vmatprep.subr.mxu0 0.0
  %1550 = vmatpush1.msra.mxu0 0.0
  %1551 = vmatprep.subr.mxu0 0.0
  %1552 = vmatpush1.msra.mxu0 0.0
  %1553 = vmatprep.subr.mxu0 0.0
  %1554 = vmatpush1.msra.mxu0 0.0
  %1555 = vmatprep.subr.mxu0 0.0
  %1556 = vmatpush1.msra.mxu0 0.0
  %1557 = vmatprep.subr.mxu0 0.0
  %1558 = vmatpush1.msra.mxu0 0.0
  %1559 = vmatprep.subr.mxu0 0.0
  %1560 = vmatpush1.msra.mxu0 0.0
  %1561 = vmatprep.subr.mxu0 0.0
  %1562 = vmatpush1.msra.mxu0 0.0
  %1563 = vmatprep.subr.mxu0 0.0
  %1564 = vmatpush1.msra.mxu0 0.0
  %1565 = vmatprep.subr.mxu0 0.0
  %1566 = vmatpush1.msra.mxu0 0.0
  %1567 = vmatprep.subr.mxu0 0.0
  %1568 = vmatpush1.msra.mxu0 0.0
  %1569 = vmatprep.subr.mxu0 0.0
  %1570 = vmatpush1.msra.mxu0 0.0
  %1571 = vmatprep.subr.mxu0 0.0
  %1572 = vmatpush1.msra.mxu0 0.0
  %1573 = vmatprep.subr.mxu0 0.0
  %1574 = vmatpush1.msra.mxu0 0.0
  %1575 = vmatprep.subr.mxu0 0.0
  %1576 = vmatpush1.msra.mxu0 0.0
  %1577 = vmatprep.subr.mxu0 0.0
  %1578 = vmatpush1.msra.mxu0 0.0
  %1579 = vmatprep.subr.mxu0 0.0
  %1580 = vmatpush1.msra.mxu0 0.0
  %1581 = vmatprep.subr.mxu0 0.0
  %1582 = vmatpush1.msra.mxu0 0.0
  %1583 = vmatprep.subr.mxu0 0.0
  %1584 = vmatpush1.msra.mxu0 0.0
  %1585 = vmatprep.subr.mxu0 0.0
  %1586 = vmatpush1.msra.mxu0 0.0
  %1587 = vmatprep.subr.mxu0 0.0
  %1588 = vmatpush1.msra.mxu0 0.0
  %1589 = vmatprep.subr.mxu0 0.0
  %1590 = vmatpush1.msra.mxu0 0.0
  %1591 = vmatprep.subr.mxu0 0.0
  %1592 = vmatpush1.msra.mxu0 0.0
  %1593 = vmatprep.mubr.f32.mxu0 0.0
  %1594 = vmatmul.mubr.f32.gmra.mrb[0].mxu0 %v1527
  %v1595 = vpop.f32.mrb[0].mxu0
  %v1596 = vadd.f32 %v1523, %v1595
  %v1597 = vpop.f32.mrb[0].mxu0
  %1598 = vdwg.mxu0
  %v1599 = vld [vmem:[%s47] sm:$0x1]
  %v1601 = vlaneseq
  %v1602 = vshrl.u32 %v1601, 7
  %v1603 = vsub.s32 0, %v1602
  %v1604 = vrot.slane %v1599, %v1603
  %v1606 = vadd.f32 %v1596, %v1604
  %v1607 = vtanh.pop %v1606
  %v1608 = vld [vmem:[%s49] sm:$0xff]
  %v1609 = vld [vmem:[%s49 + $0x8] sm:$0xff]
  %v1610 = vld [vmem:[%s49 + $0x10] sm:$0xff]
  %v1611 = vld [vmem:[%s49 + $0x18] sm:$0xff]
  %v1612 = vld [vmem:[%s51] sm:$0x1]
  %v1614 = vlaneseq
  %v1615 = vshrl.u32 %v1614, 7
  %v1616 = vsub.s32 0, %v1615
  %v1617 = vrot.slane %v1612, %v1616
  %v1620 = vsel %vm152, %v1607, 0
  %1622 = vmatprep.subr.mxu0 0.0
  %1623 = vmatpush1.msra.mxu0 %v1608
  %1624 = vmatprep.subr.mxu0 0.0
  %1625 = vmatpush1.msra.mxu0 %v1609
  %1626 = vmatprep.subr.mxu0 0.0
  %1627 = vmatpush1.msra.mxu0 %v1610
  %1628 = vmatprep.subr.mxu0 0.0
  %1629 = vmatpush1.msra.mxu0 %v1611
  %1630 = vmatprep.subr.mxu0 0.0
  %1631 = vmatpush1.msra.mxu0 0.0
  %1632 = vmatprep.subr.mxu0 0.0
  %1633 = vmatpush1.msra.mxu0 0.0
  %1634 = vmatprep.subr.mxu0 0.0
  %1635 = vmatpush1.msra.mxu0 0.0
  %1636 = vmatprep.subr.mxu0 0.0
  %1637 = vmatpush1.msra.mxu0 0.0
  %1638 = vmatprep.subr.mxu0 0.0
  %1639 = vmatpush1.msra.mxu0 0.0
  %1640 = vmatprep.subr.mxu0 0.0
  %1641 = vmatpush1.msra.mxu0 0.0
  %1642 = vmatprep.subr.mxu0 0.0
  %1643 = vmatpush1.msra.mxu0 0.0
  %1644 = vmatprep.subr.mxu0 0.0
  %1645 = vmatpush1.msra.mxu0 0.0
  %1646 = vmatprep.subr.mxu0 0.0
  %1647 = vmatpush1.msra.mxu0 0.0
  %1648 = vmatprep.subr.mxu0 0.0
  %1649 = vmatpush1.msra.mxu0 0.0
  %1650 = vmatprep.subr.mxu0 0.0
  %1651 = vmatpush1.msra.mxu0 0.0
  %1652 = vmatprep.subr.mxu0 0.0
  %1653 = vmatpush1.msra.mxu0 0.0
  %1654 = vmatprep.subr.mxu0 0.0
  %1655 = vmatpush1.msra.mxu0 0.0
  %1656 = vmatprep.subr.mxu0 0.0
  %1657 = vmatpush1.msra.mxu0 0.0
  %1658 = vmatprep.subr.mxu0 0.0
  %1659 = vmatpush1.msra.mxu0 0.0
  %1660 = vmatprep.subr.mxu0 0.0
  %1661 = vmatpush1.msra.mxu0 0.0
  %1662 = vmatprep.subr.mxu0 0.0
  %1663 = vmatpush1.msra.mxu0 0.0
  %1664 = vmatprep.subr.mxu0 0.0
  %1665 = vmatpush1.msra.mxu0 0.0
  %1666 = vmatprep.subr.mxu0 0.0
  %1667 = vmatpush1.msra.mxu0 0.0
  %1668 = vmatprep.subr.mxu0 0.0
  %1669 = vmatpush1.msra.mxu0 0.0
  %1670 = vmatprep.subr.mxu0 0.0
  %1671 = vmatpush1.msra.mxu0 0.0
  %1672 = vmatprep.subr.mxu0 0.0
  %1673 = vmatpush1.msra.mxu0 0.0
  %1674 = vmatprep.subr.mxu0 0.0
  %1675 = vmatpush1.msra.mxu0 0.0
  %1676 = vmatprep.subr.mxu0 0.0
  %1677 = vmatpush1.msra.mxu0 0.0
  %1678 = vmatprep.subr.mxu0 0.0
  %1679 = vmatpush1.msra.mxu0 0.0
  %1680 = vmatprep.subr.mxu0 0.0
  %1681 = vmatpush1.msra.mxu0 0.0
  %1682 = vmatprep.subr.mxu0 0.0
  %1683 = vmatpush1.msra.mxu0 0.0
  %1684 = vmatprep.subr.mxu0 0.0
  %1685 = vmatpush1.msra.mxu0 0.0
  %1686 = vmatprep.mubr.f32.mxu0 0.0
  %1687 = vmatmul.mubr.f32.gmra.mrb[0].mxu0 %v1620
  %v1688 = vpop.f32.mrb[0].mxu0
  %v1689 = vadd.f32 %v1617, %v1688
  %v1690 = vpop.f32.mrb[0].mxu0
  %1691 = vdwg.mxu0
  %v1692 = vld [vmem:[%s53] sm:$0xff]
  %v1693 = vld [vmem:[%s53 + $0x8] sm:$0xff]
  %v1694 = vld [vmem:[%s53 + $0x10] sm:$0xff]
  %v1695 = vld [vmem:[%s53 + $0x18] sm:$0xff]
  %v1696 = vld [vmem:[%s55] sm:$0x1]
  %v1698 = vlaneseq
  %v1699 = vshrl.u32 %v1698, 7
  %v1700 = vsub.s32 0, %v1699
  %v1701 = vrot.slane %v1696, %v1700
  %1703 = vmatprep.subr.mxu0 0.0
  %1704 = vmatpush1.msra.mxu0 %v1692
  %1705 = vmatprep.subr.mxu0 0.0
  %1706 = vmatpush1.msra.mxu0 %v1693
  %1707 = vmatprep.subr.mxu0 0.0
  %1708 = vmatpush1.msra.mxu0 %v1694
  %1709 = vmatprep.subr.mxu0 0.0
  %1710 = vmatpush1.msra.mxu0 %v1695
  %1711 = vmatprep.subr.mxu0 0.0
  %1712 = vmatpush1.msra.mxu0 0.0
  %1713 = vmatprep.subr.mxu0 0.0
  %1714 = vmatpush1.msra.mxu0 0.0
  %1715 = vmatprep.subr.mxu0 0.0
  %1716 = vmatpush1.msra.mxu0 0.0
  %1717 = vmatprep.subr.mxu0 0.0
  %1718 = vmatpush1.msra.mxu0 0.0
  %1719 = vmatprep.subr.mxu0 0.0
  %1720 = vmatpush1.msra.mxu0 0.0
  %1721 = vmatprep.subr.mxu0 0.0
  %1722 = vmatpush1.msra.mxu0 0.0
  %1723 = vmatprep.subr.mxu0 0.0
  %1724 = vmatpush1.msra.mxu0 0.0
  %1725 = vmatprep.subr.mxu0 0.0
  %1726 = vmatpush1.msra.mxu0 0.0
  %1727 = vmatprep.subr.mxu0 0.0
  %1728 = vmatpush1.msra.mxu0 0.0
  %1729 = vmatprep.subr.mxu0 0.0
  %1730 = vmatpush1.msra.mxu0 0.0
  %1731 = vmatprep.subr.mxu0 0.0
  %1732 = vmatpush1.msra.mxu0 0.0
  %1733 = vmatprep.subr.mxu0 0.0
  %1734 = vmatpush1.msra.mxu0 0.0
  %1735 = vmatprep.subr.mxu0 0.0
  %1736 = vmatpush1.msra.mxu0 0.0
  %1737 = vmatprep.subr.mxu0 0.0
  %1738 = vmatpush1.msra.mxu0 0.0
  %1739 = vmatprep.subr.mxu0 0.0
  %1740 = vmatpush1.msra.mxu0 0.0
  %1741 = vmatprep.subr.mxu0 0.0
  %1742 = vmatpush1.msra.mxu0 0.0
  %1743 = vmatprep.subr.mxu0 0.0
  %1744 = vmatpush1.msra.mxu0 0.0
  %1745 = vmatprep.subr.mxu0 0.0
  %1746 = vmatpush1.msra.mxu0 0.0
  %1747 = vmatprep.subr.mxu0 0.0
  %1748 = vmatpush1.msra.mxu0 0.0
  %1749 = vmatprep.subr.mxu0 0.0
  %1750 = vmatpush1.msra.mxu0 0.0
  %1751 = vmatprep.subr.mxu0 0.0
  %1752 = vmatpush1.msra.mxu0 0.0
  %1753 = vmatprep.subr.mxu0 0.0
  %1754 = vmatpush1.msra.mxu0 0.0
  %1755 = vmatprep.subr.mxu0 0.0
  %1756 = vmatpush1.msra.mxu0 0.0
  %1757 = vmatprep.subr.mxu0 0.0
  %1758 = vmatpush1.msra.mxu0 0.0
  %1759 = vmatprep.subr.mxu0 0.0
  %1760 = vmatpush1.msra.mxu0 0.0
  %1761 = vmatprep.subr.mxu0 0.0
  %1762 = vmatpush1.msra.mxu0 0.0
  %1763 = vmatprep.subr.mxu0 0.0
  %1764 = vmatpush1.msra.mxu0 0.0
  %1765 = vmatprep.subr.mxu0 0.0
  %1766 = vmatpush1.msra.mxu0 0.0
  %1767 = vmatprep.mubr.f32.mxu0 0.0
  %1768 = vmatmul.mubr.f32.gmra.mrb[0].mxu0 %v1620
  %v1769 = vpop.f32.mrb[0].mxu0
  %v1770 = vadd.f32 %v1701, %v1769
  %v1771 = vpop.f32.mrb[0].mxu0
  %1772 = vdwg.mxu0
  %v1773 = vmax.f32 %v1770, 0.0
  %vm1774 = vcmp.ne.f32.partialorder %v1770, %v1770
  %v1775 = vadd.f32 %v1770, 0.0
  %v1776 = vand.u32 2147483647, %v1770
  %v1777 = vsub.f32 0.0, %v1776
  %v1778 = vmul.f32 %v1777, 1.442695
  %v1779 = vpow.pop %v1778
  %v1780 = vadd.f32 %v1779, 1.0
  %v1781 = vlog2.pop %v1780
  %v1782 = vmul.f32 %v1781, 0.6931472
  %v1783 = vmul.f32 -0.5, %v1779
  %v1784 = vadd.f32 %v1783, 1.0
  %v1785 = vmul.f32 %v1784, %v1779
  %v1786 = vand.u32 2147483647, %v1779
  %vm1787 = vcmp.lt.f32.partialorder %v1786, 0.0004427343
  %v1788 = vsel %vm1787, %v1785, %v1782
  %v1789 = vadd.f32 %v1773, %v1788
  %v1790 = vsel %vm1774, %v1775, %v1789
  %v1791 = vld [vmem:[%s57] sm:$0xff]
  %v1792 = vld [vmem:[%s57 + $0x8] sm:$0xff]
  %v1793 = vld [vmem:[%s59] sm:$0x1]
  %v1795 = vlaneseq
  %v1796 = vshrl.u32 %v1795, 7
  %v1797 = vsub.s32 0, %v1796
  %v1798 = vrot.slane %v1793, %v1797
  %vm1800 = vcmask 130048
  %v1802 = vsel %vm1800, %v1689, 0
  %1804 = vmatprep.subr.mxu0 0.0
  %1805 = vmatpush1.msra.mxu0 %v1791
  %1806 = vmatprep.subr.mxu0 0.0
  %1807 = vmatpush1.msra.mxu0 %v1792
  %1808 = vmatprep.subr.mxu0 0.0
  %1809 = vmatpush1.msra.mxu0 0.0
  %1810 = vmatprep.subr.mxu0 0.0
  %1811 = vmatpush1.msra.mxu0 0.0
  %1812 = vmatprep.subr.mxu0 0.0
  %1813 = vmatpush1.msra.mxu0 0.0
  %1814 = vmatprep.subr.mxu0 0.0
  %1815 = vmatpush1.msra.mxu0 0.0
  %1816 = vmatprep.subr.mxu0 0.0
  %1817 = vmatpush1.msra.mxu0 0.0
  %1818 = vmatprep.subr.mxu0 0.0
  %1819 = vmatpush1.msra.mxu0 0.0
  %1820 = vmatprep.subr.mxu0 0.0
  %1821 = vmatpush1.msra.mxu0 0.0
  %1822 = vmatprep.subr.mxu0 0.0
  %1823 = vmatpush1.msra.mxu0 0.0
  %1824 = vmatprep.subr.mxu0 0.0
  %1825 = vmatpush1.msra.mxu0 0.0
  %1826 = vmatprep.subr.mxu0 0.0
  %1827 = vmatpush1.msra.mxu0 0.0
  %1828 = vmatprep.subr.mxu0 0.0
  %1829 = vmatpush1.msra.mxu0 0.0
  %1830 = vmatprep.subr.mxu0 0.0
  %1831 = vmatpush1.msra.mxu0 0.0
  %1832 = vmatprep.subr.mxu0 0.0
  %1833 = vmatpush1.msra.mxu0 0.0
  %1834 = vmatprep.subr.mxu0 0.0
  %1835 = vmatpush1.msra.mxu0 0.0
  %1836 = vmatprep.subr.mxu0 0.0
  %1837 = vmatpush1.msra.mxu0 0.0
  %1838 = vmatprep.subr.mxu0 0.0
  %1839 = vmatpush1.msra.mxu0 0.0
  %1840 = vmatprep.subr.mxu0 0.0
  %1841 = vmatpush1.msra.mxu0 0.0
  %1842 = vmatprep.subr.mxu0 0.0
  %1843 = vmatpush1.msra.mxu0 0.0
  %1844 = vmatprep.subr.mxu0 0.0
  %1845 = vmatpush1.msra.mxu0 0.0
  %1846 = vmatprep.subr.mxu0 0.0
  %1847 = vmatpush1.msra.mxu0 0.0
  %1848 = vmatprep.subr.mxu0 0.0
  %1849 = vmatpush1.msra.mxu0 0.0
  %1850 = vmatprep.subr.mxu0 0.0
  %1851 = vmatpush1.msra.mxu0 0.0
  %1852 = vmatprep.subr.mxu0 0.0
  %1853 = vmatpush1.msra.mxu0 0.0
  %1854 = vmatprep.subr.mxu0 0.0
  %1855 = vmatpush1.msra.mxu0 0.0
  %1856 = vmatprep.subr.mxu0 0.0
  %1857 = vmatpush1.msra.mxu0 0.0
  %1858 = vmatprep.subr.mxu0 0.0
  %1859 = vmatpush1.msra.mxu0 0.0
  %1860 = vmatprep.subr.mxu0 0.0
  %1861 = vmatpush1.msra.mxu0 0.0
  %1862 = vmatprep.subr.mxu0 0.0
  %1863 = vmatpush1.msra.mxu0 0.0
  %1864 = vmatprep.subr.mxu0 0.0
  %1865 = vmatpush1.msra.mxu0 0.0
  %1866 = vmatprep.subr.mxu0 0.0
  %1867 = vmatpush1.msra.mxu0 0.0
  %1868 = vmatprep.mubr.f32.mxu0 0.0
  %1869 = vmatmul.mubr.f32.gmra.mrb[0].mxu0 %v1802
  %v1870 = vpop.f32.mrb[0].mxu0
  %v1871 = vadd.f32 %v1798, %v1870
  %v1872 = vpop.f32.mrb[0].mxu0
  %1873 = vdwg.mxu0
  %v1874 = vmax.f32 %v1871, 0.0
  %1875 = vst.msk [vmem:[%s61] sm:$0xff] %vm1800, %v1689
  %1876 = vst.msk [vmem:[%s63] sm:$0xff] %vm1800, %v1790
  %1877 = vst.msk [vmem:[%s65] sm:$0xff] %vm152, %v1874
  %1878 = vst.msk [vmem:[%s67] sm:$0xff] %vm152, %v943
  // Predicated region
  $region129: #{vnmt_model_forward.2} parent=0 // pred_check
    _
  $region130: #{vnmt_model_forward.2} parent=0 // pred_check_branch
    %1880 = sbr.rel (0) target = $region132
  $region131: #{vnmt_model_forward.2} parent=0 // pred_region
    _
  $region132: #{vnmt_model_forward.2} parent=0 // pred_fallthru
    _
  // Predicated region
  $region133: #{vnmt_model_forward.2} parent=0 // pred_check
    _
  $region134: #{vnmt_model_forward.2} parent=0 // pred_check_branch
    %1882 = sbr.rel (0) target = $region136
  $region135: #{vnmt_model_forward.2} parent=0 // pred_region
    _
  $region136: #{vnmt_model_forward.2} parent=0 // pred_fallthru
    _
  // Predicated region
  $region137: #{vnmt_model_forward.2} parent=0 // pred_check
    _
  $region138: #{vnmt_model_forward.2} parent=0 // pred_check_branch
    %1884 = sbr.rel (0) target = $region140
  $region139: #{vnmt_model_forward.2} parent=0 // pred_region
    _
  $region140: #{vnmt_model_forward.2} parent=0 // pred_fallthru
    _
  // Predicated region
  $region141: #{vnmt_model_forward.2} parent=0 // pred_check
    _
  $region142: #{vnmt_model_forward.2} parent=0 // pred_check_branch
    %1886 = sbr.rel (0) target = $region144
  $region143: #{vnmt_model_forward.2} parent=0 // pred_region
    _
  $region144: #{vnmt_model_forward.2} parent=0 // pred_fallthru
    _
  // Predicated region
  $region145: #{vnmt_model_forward.2} parent=0 // pred_check
    _
  $region146: #{vnmt_model_forward.2} parent=0 // pred_check_branch
    %1888 = sbr.rel (0) target = $region148
  $region147: #{vnmt_model_forward.2} parent=0 // pred_region
    _
  $region148: #{vnmt_model_forward.2} parent=0 // pred_fallthru
    _
  // Predicated region
  $region149: #{vnmt_model_forward.2} parent=0 // pred_check
    _
  $region150: #{vnmt_model_forward.2} parent=0 // pred_check_branch
    %1890 = sbr.rel (0) target = $region152
  $region151: #{vnmt_model_forward.2} parent=0 // pred_region
    _
  $region152: #{vnmt_model_forward.2} parent=0 // pred_fallthru
    _
  // Predicated region
  $region153: #{vnmt_model_forward.2} parent=0 // pred_check
    _
  $region154: #{vnmt_model_forward.2} parent=0 // pred_check_branch
    %1892 = sbr.rel (0) target = $region156
  $region155: #{vnmt_model_forward.2} parent=0 // pred_region
    _
  $region156: #{vnmt_model_forward.2} parent=0 // pred_fallthru
    _
  // Predicated region
  $region157: #{vnmt_model_forward.2} parent=0 // pred_check
    _
  $region158: #{vnmt_model_forward.2} parent=0 // pred_check_branch
    %1894 = sbr.rel (0) target = $region160
  $region159: #{vnmt_model_forward.2} parent=0 // pred_region
    _
  $region160: #{vnmt_model_forward.2} parent=0 // pred_fallthru
    _

</llo_original>
